<compile_context>
chip_gen: v7x
topology: tpu7x:2x2x1
jax: 0.10.0
libtpu: 0.0.40
codegen_flags: <defaults>
</compile_context>

<pallas_src>
import functools

import jax
import jax.numpy as jnp
from jax import lax
from jax.experimental import pallas as pl
from jax.experimental.pallas import tpu as pltpu

LN_EPS = 1e-5

C_IN, H_IN, W_IN = 5, 14, 14
K1 = C_IN * H_IN * W_IN          # 980  true conv1 contraction size
K1P = 1024                       # padded to a lane multiple
D1 = 16 * 7 * 7                  # 784  true stage-1 feature count (LN1 n)
D1P = 896                        # padded to a lane multiple
D2 = 32 * 4 * 4                  # 512  stage-2 feature count (already 4*128)

_MIN_TILE = 16                   # bf16 sublane-packing friendly row granularity


# ----------------------------- Pallas kernel ------------------------------- #
def _fused_posemb_kernel(x_ref, w1_ref, g1_ref, b1_ref, w2_ref, g2_ref, b2_ref,
                         o_ref, *, n1, n2, eps):
    # x_ref : [TB, K1P]  bf16  (c,h,w)-flattened input, zero-padded cols
    # w1_ref: [K1P, D1P] bf16  conv1 as dense matmul, (c,h,w)-ordered columns
    # g1/b1 : [1, D1P]   f32   LN1 affine (zero in padded cols)
    # w2_ref: [D1P, D2]  bf16  conv2 as dense matmul, (c,h,w)-ordered columns
    # g2/b2 : [1, D2]    f32   LN2 affine
    # o_ref : [TB, D2]   f32   lane-dense (512 = 4*128) output
    x = x_ref[...]

    # ---- stage 1: conv1 (MXU) + LayerNorm([16,7,7]) + ReLU ----
    y1 = jnp.dot(x, w1_ref[...], preferred_element_type=jnp.float32)   # [TB, D1P]
    s1 = jnp.sum(y1, axis=1, keepdims=True)          # padded cols are exactly 0
    q1 = jnp.sum(y1 * y1, axis=1, keepdims=True)
    m1 = s1 * (1.0 / n1)
    v1 = q1 * (1.0 / n1) - m1 * m1                   # one-pass biased variance
    scale1 = g1_ref[...] * lax.rsqrt(v1 + eps)       # folded LN affine
    shift1 = b1_ref[...] - m1 * scale1
    y1 = jnp.maximum(y1 * scale1 + shift1, 0.0)      # padded cols stay exactly 0

    # ---- stage 2: conv2 (MXU) + LayerNorm([32,4,4]) + ReLU ----
    y2 = jnp.dot(y1.astype(w2_ref.dtype), w2_ref[...],
                 preferred_element_type=jnp.float32)                    # [TB, D2]
    s2 = jnp.sum(y2, axis=1, keepdims=True)
    q2 = jnp.sum(y2 * y2, axis=1, keepdims=True)
    m2 = s2 * (1.0 / n2)
    v2 = q2 * (1.0 / n2) - m2 * m2
    scale2 = g2_ref[...] * lax.rsqrt(v2 + eps)
    shift2 = b2_ref[...] - m2 * scale2
    o_ref[...] = jnp.maximum(y2 * scale2 + shift2, 0.0).astype(o_ref.dtype)


def _const_spec(shape):
    """Constant-index operand: single-buffered (reclaims the second buffer)."""
    try:
        return pl.BlockSpec(shape, lambda i: (0, 0), pipeline_mode=pl.Buffered(1))
    except TypeError:  # older BlockSpec signature without pipeline_mode
        return pl.BlockSpec(shape, lambda i: (0, 0))


def fused_posemb(x_flat, w1m, g1f, b1f, w2m, g2f, b2f, *, tb):
    """x_flat: [B_pad, K1P] bf16 -> [B_pad, D2] f32, fused conv/LN/ReLU x2."""
    b_pad = x_flat.shape[0]
    kernel = functools.partial(_fused_posemb_kernel, n1=D1, n2=D2, eps=LN_EPS)
    return pl.pallas_call(
        kernel,
        out_shape=jax.ShapeDtypeStruct((b_pad, D2), jnp.float32),
        grid=(b_pad // tb,),
        in_specs=[
            pl.BlockSpec((tb, K1P), lambda i: (i, 0)),   # batch tile of inputs
            _const_spec((K1P, D1P)),                     # conv1 weights (bf16)
            _const_spec((1, D1P)),                       # LN1 gamma
            _const_spec((1, D1P)),                       # LN1 beta
            _const_spec((D1P, D2)),                      # conv2 weights (bf16)
            _const_spec((1, D2)),                        # LN2 gamma
            _const_spec((1, D2)),                        # LN2 beta
        ],
        out_specs=pl.BlockSpec((tb, D2), lambda i: (i, 0)),
        compiler_params=pltpu.CompilerParams(dimension_semantics=("parallel",)),
    )(x_flat, w1m, g1f, b1f, w2m, g2f, b2f)


# --------------------- parameter lowering (hoisted) ------------------------- #
def _conv_s2_p1(x_nchw, w_oihw):
    return lax.conv_general_dilated(
        x_nchw, w_oihw, window_strides=(2, 2), padding=((1, 1), (1, 1)),
        dimension_numbers=("NCHW", "OIHW", "NCHW"))


def _conv_as_matmul(w_oihw, cin, h, w):
    """Conv2d(k3,s2,p1) as a dense matrix on the (c,h,w)-flattened input.

    Returns M [cin*h*w, cout*ho*wo] such that x.reshape(B, cin*h*w) @ M equals
    the conv output flattened per-sample in (c, h, w) order.
    """
    basis = jnp.eye(cin * h * w, dtype=jnp.float32).reshape(cin * h * w, cin, h, w)
    out = _conv_s2_p1(basis, w_oihw)              # [cin*h*w, cout, ho, wo]
    return out.reshape(cin * h * w, -1)


def prepare_posemb_params(params):
    """Lower PyTorch-style params ONCE into kernel operands (run outside jit)."""
    w1, g1, b1, w2, g2, b2 = params
    w1m = _conv_as_matmul(w1.astype(jnp.float32), C_IN, H_IN, W_IN)   # [980, 784]
    w2m = _conv_as_matmul(w2.astype(jnp.float32), 16, 7, 7)           # [784, 512]
    # Zero-pad inner dims to lane multiples; cast matmul operands to bf16.
    w1m = jnp.pad(w1m, ((0, K1P - K1), (0, D1P - D1))).astype(jnp.bfloat16)
    w2m = jnp.pad(w2m, ((0, D1P - D1), (0, 0))).astype(jnp.bfloat16)
    g1f = jnp.pad(g1.reshape(1, D1).astype(jnp.float32), ((0, 0), (0, D1P - D1)))
    b1f = jnp.pad(b1.reshape(1, D1).astype(jnp.float32), ((0, 0), (0, D1P - D1)))
    g2f = g2.reshape(1, D2).astype(jnp.float32)
    b2f = b2.reshape(1, D2).astype(jnp.float32)
    return w1m, g1f, b1f, w2m, g2f, b2f


# ------------------------------ JAX glue ----------------------------------- #
def _round_up(x, m):
    return ((x + m - 1) // m) * m


def _choose_tile(b, tb):
    """MXU-filling batch tile; >=2 grid steps when the batch allows (v7x 2 TCs)."""
    tb = max(_MIN_TILE, _round_up(tb, _MIN_TILE))
    if b > tb:
        tb_eff = tb
    elif b >= 2 * _MIN_TILE:
        tb_eff = _round_up(pl.cdiv(b, 2), _MIN_TILE)
    else:
        tb_eff = _MIN_TILE
    return tb_eff, _round_up(b, tb_eff)


def posemb_lw_forward(x_nchw, lowered_params, *, tb=256):
    """x_nchw: [B, 5, 14, 14] -> [B, 32, 4, 4] (matches PyTorch NCHW output)."""
    w1m, g1f, b1f, w2m, g2f, b2f = lowered_params
    b = x_nchw.shape[0]
    tb_eff, b_pad = _choose_tile(b, tb)
    x_flat = x_nchw.reshape(b, K1)                                  # (c,h,w) flatten
    x_flat = jnp.pad(x_flat, ((0, b_pad - b), (0, K1P - K1)))       # batch + lane pad
    x_flat = x_flat.astype(jnp.bfloat16)
    out_flat = fused_posemb(x_flat, w1m, g1f, b1f, w2m, g2f, b2f, tb=tb_eff)
    # Stage-2 columns are already (c,h,w)-ordered -> direct NCHW reshape.
    return out_flat[:b].reshape(b, 32, 4, 4)


# --------------------------- pure-JAX reference ----------------------------- #
def ref_forward(x, params):
    w1, g1, b1, w2, g2, b2 = params

    def stage(x, w, g, b):
        y = _conv_s2_p1(x, w)
        mean = jnp.mean(y, axis=(1, 2, 3), keepdims=True)
        var = jnp.mean(jnp.square(y - mean), axis=(1, 2, 3), keepdims=True)
        y = (y - mean) * lax.rsqrt(var + LN_EPS) * g[None] + b[None]
        return jnp.maximum(y, 0.0)

    return stage(stage(x, w1, g1, b1), w2, g2, b2)


# --------------------------------- main ------------------------------------ #
if __name__ == "__main__":
    key = jax.random.PRNGKey(0)
    k_x, k_w1, k_w2, k_g1, k_b1 = jax.random.split(key, 5)

    B = 2  # docstring: n_scales x 18; kept small for the demo
    x = jax.random.normal(k_x, (B, 5, 14, 14), dtype=jnp.float32)

    # Deterministic parameter init (Conv2d weights ~ small normal; LayerNorm
    # affine near PyTorch defaults with a small perturbation to exercise it).
    w1 = 0.1 * jax.random.normal(k_w1, (16, 5, 3, 3), dtype=jnp.float32)
    g1 = jnp.ones((16, 7, 7), jnp.float32) + 0.05 * jax.random.normal(k_g1, (16, 7, 7))
    b1 = 0.05 * jax.random.normal(k_b1, (16, 7, 7), dtype=jnp.float32)
    w2 = 0.1 * jax.random.normal(k_w2, (32, 16, 3, 3), dtype=jnp.float32)
    g2 = jnp.ones((32, 4, 4), dtype=jnp.float32)
    b2 = jnp.zeros((32, 4, 4), dtype=jnp.float32)
    params = (w1, g1, b1, w2, g2, b2)

    # Hoisted once per parameter set: conv->matmul lowering, padding, bf16 cast.
    lowered = jax.block_until_ready(prepare_posemb_params(params))

    fwd = jax.jit(posemb_lw_forward)
    out = jax.block_until_ready(fwd(x, lowered))
    assert out.shape == (B, 32, 4, 4), out.shape

    ref = jax.block_until_ready(ref_forward(x, params))
    max_err = float(jnp.max(jnp.abs(out - ref)))
    rel_err = float(jnp.linalg.norm(out - ref) / (jnp.linalg.norm(ref) + 1e-12))
    # bf16 matmul operands -> looser tolerance than the earlier f32-only version.
    assert max_err < 2e-1 and rel_err < 2e-2, (max_err, rel_err)

    print("KERNEL_OK")
</pallas_src>

<mosaic_0001>
module attributes {stable_mosaic.version = 11 : i64} {
  func.func @_fused_posemb_kernel(%arg0: i32, %arg1: memref<16x1024xbf16, #tpu.memory_space<vmem>>, %arg2: memref<1024x896xbf16, #tpu.memory_space<vmem>>, %arg3: memref<1x896xf32, #tpu.memory_space<vmem>>, %arg4: memref<1x896xf32, #tpu.memory_space<vmem>>, %arg5: memref<896x512xbf16, #tpu.memory_space<vmem>>, %arg6: memref<1x512xf32, #tpu.memory_space<vmem>>, %arg7: memref<1x512xf32, #tpu.memory_space<vmem>>, %arg8: memref<16x512xf32, #tpu.memory_space<vmem>>) attributes {dimension_semantics = [#tpu.dimension_semantics<parallel>], iteration_bounds = array<i64: 1>, scalar_prefetch = 0 : i64, scratch_operands = 0 : i64, tpu.core_type = #tpu.core_type<tc>, window_params = [{transform_indices = @transform_0, window_bounds = array<i64: 16, 1024>}, {pipeline_mode = #tpu.pipeline_mode<synchronous>, transform_indices = @transform_1, window_bounds = array<i64: 1024, 896>}, {pipeline_mode = #tpu.pipeline_mode<synchronous>, transform_indices = @transform_2, window_bounds = array<i64: 1, 896>}, {pipeline_mode = #tpu.pipeline_mode<synchronous>, transform_indices = @transform_3, window_bounds = array<i64: 1, 896>}, {pipeline_mode = #tpu.pipeline_mode<synchronous>, transform_indices = @transform_4, window_bounds = array<i64: 896, 512>}, {pipeline_mode = #tpu.pipeline_mode<synchronous>, transform_indices = @transform_5, window_bounds = array<i64: 1, 512>}, {pipeline_mode = #tpu.pipeline_mode<synchronous>, transform_indices = @transform_6, window_bounds = array<i64: 1, 512>}, {transform_indices = @transform_7, window_bounds = array<i64: 16, 512>}]} {
    %c0 = arith.constant 0 : index
    %c0_0 = arith.constant 0 : index
    %0 = vector.load %arg1[%c0, %c0_0] : memref<16x1024xbf16, #tpu.memory_space<vmem>>, vector<16x1024xbf16>
    %c0_1 = arith.constant 0 : index
    %c0_2 = arith.constant 0 : index
    %1 = vector.load %arg2[%c0_1, %c0_2] : memref<1024x896xbf16, #tpu.memory_space<vmem>>, vector<1024x896xbf16>
    %cst = arith.constant dense<0.000000e+00> : vector<16x896xf32>
    %2 = tpu.matmul %0, %1, %cst {dimension_numbers = #tpu.dot_dimension_numbers<[1], [0], [0], [1], [0, 0, 1, 1], [], []>} : vector<16x1024xbf16>, vector<1024x896xbf16>, vector<16x896xf32> -> vector<16x896xf32>
    %cst_3 = arith.constant dense<0.000000e+00> : vector<16xf32>
    %3 = vector.multi_reduction <add>, %2, %cst_3 [1] : vector<16x896xf32> to vector<16xf32>
    %4 = vector.shape_cast %3 : vector<16xf32> to vector<16x1xf32>
    %5 = arith.mulf %2, %2 : vector<16x896xf32>
    %cst_4 = arith.constant dense<0.000000e+00> : vector<16xf32>
    %6 = vector.multi_reduction <add>, %5, %cst_4 [1] : vector<16x896xf32> to vector<16xf32>
    %7 = vector.shape_cast %6 : vector<16xf32> to vector<16x1xf32>
    %cst_5 = arith.constant 0.00127551018 : f32
    %8 = vector.broadcast %cst_5 : f32 to vector<16x1xf32>
    %9 = arith.mulf %4, %8 : vector<16x1xf32>
    %cst_6 = arith.constant 0.00127551018 : f32
    %10 = vector.broadcast %cst_6 : f32 to vector<16x1xf32>
    %11 = arith.mulf %7, %10 : vector<16x1xf32>
    %12 = arith.mulf %9, %9 : vector<16x1xf32>
    %13 = arith.subf %11, %12 : vector<16x1xf32>
    %c0_7 = arith.constant 0 : index
    %c0_8 = arith.constant 0 : index
    %14 = vector.load %arg3[%c0_7, %c0_8] : memref<1x896xf32, #tpu.memory_space<vmem>>, vector<1x896xf32>
    %cst_9 = arith.constant 9.99999974E-6 : f32
    %15 = vector.broadcast %cst_9 : f32 to vector<16x1xf32>
    %16 = arith.addf %13, %15 : vector<16x1xf32>
    %17 = math.rsqrt %16 : vector<16x1xf32>
    %18 = vector.broadcast %14 : vector<1x896xf32> to vector<16x896xf32>
    %19 = vector.broadcast %17 : vector<16x1xf32> to vector<16x896xf32>
    %20 = arith.mulf %18, %19 : vector<16x896xf32>
    %c0_10 = arith.constant 0 : index
    %c0_11 = arith.constant 0 : index
    %21 = vector.load %arg4[%c0_10, %c0_11] : memref<1x896xf32, #tpu.memory_space<vmem>>, vector<1x896xf32>
    %22 = vector.broadcast %9 : vector<16x1xf32> to vector<16x896xf32>
    %23 = arith.mulf %22, %20 : vector<16x896xf32>
    %24 = vector.broadcast %21 : vector<1x896xf32> to vector<16x896xf32>
    %25 = arith.subf %24, %23 : vector<16x896xf32>
    %26 = arith.mulf %2, %20 : vector<16x896xf32>
    %27 = arith.addf %26, %25 : vector<16x896xf32>
    %cst_12 = arith.constant 0.000000e+00 : f32
    %28 = vector.broadcast %cst_12 : f32 to vector<16x896xf32>
    %29 = arith.maximumf %27, %28 : vector<16x896xf32>
    %30 = arith.truncf %29 : vector<16x896xf32> to vector<16x896xbf16>
    %c0_13 = arith.constant 0 : index
    %c0_14 = arith.constant 0 : index
    %31 = vector.load %arg5[%c0_13, %c0_14] : memref<896x512xbf16, #tpu.memory_space<vmem>>, vector<896x512xbf16>
    %cst_15 = arith.constant dense<0.000000e+00> : vector<16x512xf32>
    %32 = tpu.matmul %30, %31, %cst_15 {dimension_numbers = #tpu.dot_dimension_numbers<[1], [0], [0], [1], [0, 0, 1, 1], [], []>} : vector<16x896xbf16>, vector<896x512xbf16>, vector<16x512xf32> -> vector<16x512xf32>
    %cst_16 = arith.constant dense<0.000000e+00> : vector<16xf32>
    %33 = vector.multi_reduction <add>, %32, %cst_16 [1] : vector<16x512xf32> to vector<16xf32>
    %34 = vector.shape_cast %33 : vector<16xf32> to vector<16x1xf32>
    %35 = arith.mulf %32, %32 : vector<16x512xf32>
    %cst_17 = arith.constant dense<0.000000e+00> : vector<16xf32>
    %36 = vector.multi_reduction <add>, %35, %cst_17 [1] : vector<16x512xf32> to vector<16xf32>
    %37 = vector.shape_cast %36 : vector<16xf32> to vector<16x1xf32>
    %cst_18 = arith.constant 0.001953125 : f32
    %38 = vector.broadcast %cst_18 : f32 to vector<16x1xf32>
    %39 = arith.mulf %34, %38 : vector<16x1xf32>
    %cst_19 = arith.constant 0.001953125 : f32
    %40 = vector.broadcast %cst_19 : f32 to vector<16x1xf32>
    %41 = arith.mulf %37, %40 : vector<16x1xf32>
    %42 = arith.mulf %39, %39 : vector<16x1xf32>
    %43 = arith.subf %41, %42 : vector<16x1xf32>
    %c0_20 = arith.constant 0 : index
    %c0_21 = arith.constant 0 : index
    %44 = vector.load %arg6[%c0_20, %c0_21] : memref<1x512xf32, #tpu.memory_space<vmem>>, vector<1x512xf32>
    %cst_22 = arith.constant 9.99999974E-6 : f32
    %45 = vector.broadcast %cst_22 : f32 to vector<16x1xf32>
    %46 = arith.addf %43, %45 : vector<16x1xf32>
    %47 = math.rsqrt %46 : vector<16x1xf32>
    %48 = vector.broadcast %44 : vector<1x512xf32> to vector<16x512xf32>
    %49 = vector.broadcast %47 : vector<16x1xf32> to vector<16x512xf32>
    %50 = arith.mulf %48, %49 : vector<16x512xf32>
    %c0_23 = arith.constant 0 : index
    %c0_24 = arith.constant 0 : index
    %51 = vector.load %arg7[%c0_23, %c0_24] : memref<1x512xf32, #tpu.memory_space<vmem>>, vector<1x512xf32>
    %52 = vector.broadcast %39 : vector<16x1xf32> to vector<16x512xf32>
    %53 = arith.mulf %52, %50 : vector<16x512xf32>
    %54 = vector.broadcast %51 : vector<1x512xf32> to vector<16x512xf32>
    %55 = arith.subf %54, %53 : vector<16x512xf32>
    %56 = arith.mulf %32, %50 : vector<16x512xf32>
    %57 = arith.addf %56, %55 : vector<16x512xf32>
    %cst_25 = arith.constant 0.000000e+00 : f32
    %58 = vector.broadcast %cst_25 : f32 to vector<16x512xf32>
    %59 = arith.maximumf %57, %58 : vector<16x512xf32>
    %c0_26 = arith.constant 0 : index
    %c0_27 = arith.constant 0 : index
    %60 = vector.load %arg8[%c0_26, %c0_27] : memref<16x512xf32, #tpu.memory_space<vmem>>, vector<16x512xf32>
    tpu.vector_store %arg8[%c0_26, %c0_27], %59 {strides = array<i32>} : memref<16x512xf32, #tpu.memory_space<vmem>>, vector<16x512xf32>,
    return
  }
  func.func @transform_0(%arg0: i32) -> (i32, i32) {
    %c0_i32 = arith.constant 0 : i32
    %c0_i32_0 = arith.constant 0 : i32
    return %arg0, %c0_i32 : i32, i32
  }
  func.func @transform_1(%arg0: i32) -> (i32, i32) {
    %c0_i32 = arith.constant 0 : i32
    %c0_i32_0 = arith.constant 0 : i32
    %c0_i32_1 = arith.constant 0 : i32
    return %c0_i32, %c0_i32_0 : i32, i32
  }
  func.func @transform_2(%arg0: i32) -> (i32, i32) {
    %c0_i32 = arith.constant 0 : i32
    %c0_i32_0 = arith.constant 0 : i32
    %c0_i32_1 = arith.constant 0 : i32
    return %c0_i32, %c0_i32_0 : i32, i32
  }
  func.func @transform_3(%arg0: i32) -> (i32, i32) {
    %c0_i32 = arith.constant 0 : i32
    %c0_i32_0 = arith.constant 0 : i32
    %c0_i32_1 = arith.constant 0 : i32
    return %c0_i32, %c0_i32_0 : i32, i32
  }
  func.func @transform_4(%arg0: i32) -> (i32, i32) {
    %c0_i32 = arith.constant 0 : i32
    %c0_i32_0 = arith.constant 0 : i32
    %c0_i32_1 = arith.constant 0 : i32
    return %c0_i32, %c0_i32_0 : i32, i32
  }
  func.func @transform_5(%arg0: i32) -> (i32, i32) {
    %c0_i32 = arith.constant 0 : i32
    %c0_i32_0 = arith.constant 0 : i32
    %c0_i32_1 = arith.constant 0 : i32
    return %c0_i32, %c0_i32_0 : i32, i32
  }
  func.func @transform_6(%arg0: i32) -> (i32, i32) {
    %c0_i32 = arith.constant 0 : i32
    %c0_i32_0 = arith.constant 0 : i32
    %c0_i32_1 = arith.constant 0 : i32
    return %c0_i32, %c0_i32_0 : i32, i32
  }
  func.func @transform_7(%arg0: i32) -> (i32, i32) {
    %c0_i32 = arith.constant 0 : i32
    %c0_i32_0 = arith.constant 0 : i32
    return %arg0, %c0_i32 : i32, i32
  }
}

</mosaic_0001>

<llo_original>
// kernel: posemb_lw_forward.1
$region0: #{posemb_lw_forward.1}
  #allocation0 [shape = 'u32[]', space=smem, size = 0x4, offset = 0x4, fixed_abs, tag = 'smem constant byte address 0x4 - core index']
  #allocation1 [shape = 'u32[144,128]{1,0:T(1,128)}', space=vmem, size = 0x12000, scoped, tag = 'internal scratch']
  %s0 = inlined_call_operand.vmem [shape: bf16[16,1024], index: 0, kind: input, shape index: {}]
  %s1 = inlined_call_operand.hbm [shape: bf16[1024,896], index: 1, kind: input, shape index: {}]
  %s2 = inlined_call_operand.hbm [shape: f32[1,896], index: 2, kind: input, shape index: {}]
  %s3 = inlined_call_operand.hbm [shape: f32[1,896], index: 3, kind: input, shape index: {}]
  %s4 = inlined_call_operand.hbm [shape: bf16[896,512], index: 4, kind: input, shape index: {}]
  %s5 = inlined_call_operand.hbm [shape: f32[1,512], index: 5, kind: input, shape index: {}]
  %s6 = inlined_call_operand.hbm [shape: f32[1,512], index: 6, kind: input, shape index: {}]
  %s7 = inlined_call_operand.vmem [shape: f32[16,512], index: 7, kind: output, shape index: {}]
  %s8 = sld [smem:[#allocation0]]
  $region62: #{posemb_lw_forward.1} parent=0
    _
  %s10 = ssub.s32 1, %s8
  %s11 = scalar_select 0, %s10, %s8
  $region1: #{posemb_lw_forward.1} parent=0
    #allocation2 [shape = 'u8[1835008]{0}', space=vmem, size = 0x1c0000, scoped, tag = 'input window, operand 1, single buffered']
    #allocation3 [shape = 's32[1]{0}', space=sflag, size = 0x4, scoped, tag = 'scoped memory for posemb_lw_forward.1']
    #allocation4 [shape = 'u8[3584]{0}', space=vmem, size = 0x1000, scoped, tag = 'input window, operand 2, single buffered']
    #allocation5 [shape = 's32[1]{0}', space=sflag, size = 0x4, scoped, tag = 'scoped memory for posemb_lw_forward.1']
    #allocation6 [shape = 'u8[3584]{0}', space=vmem, size = 0x1000, scoped, tag = 'input window, operand 3, single buffered']
    #allocation7 [shape = 'u8[917504]{0}', space=vmem, size = 0xe0000, scoped, tag = 'input window, operand 4, single buffered']
    #allocation8 [shape = 's32[1]{0}', space=sflag, size = 0x4, scoped, tag = 'scoped memory for posemb_lw_forward.1']
    #allocation9 [shape = 'u8[2048]{0}', space=vmem, size = 0x800, scoped, tag = 'input window, operand 5, single buffered']
    #allocation10 [shape = 'u8[2048]{0}', space=vmem, size = 0x800, scoped, tag = 'input window, operand 6, single buffered']
    #allocation11 [shape = 's32[1]{0}', space=sflag, size = 0x4, scoped, tag = 'scoped memory for posemb_lw_forward.1']
    %12 = vsyncpa [#allocation3], 0
    %13 = vsyncpa [#allocation5], 0
    %14 = vsyncpa [#allocation8], 0
    %15 = vsyncpa [#allocation11], 0
    // Predicated region
    $region2: #{posemb_lw_forward.1} parent=1 // pred_check
      _
    $region3: #{posemb_lw_forward.1} parent=1 // pred_check_branch
      %17 = sbr.rel (0) target = $region5
    $region4: #{posemb_lw_forward.1} parent=1 // pred_region
      _
    $region5: #{posemb_lw_forward.1} parent=1 // pred_fallthru
      _
    // Predicated region
    $region6: #{posemb_lw_forward.1} parent=1 // pred_check
      _
    $region7: #{posemb_lw_forward.1} parent=1 // pred_check_branch
      %19 = sbr.rel (0) target = $region9
    $region8: #{posemb_lw_forward.1} parent=1 // pred_region
      %s21 = ssub.s32 57344, 57344
      %22 = vsyncadd [#allocation3], %s21
      %s23 = sshll.u32 [#allocation2], 4
      %s24 = int_to_ptr.vmem [resolvable:$true] %s23
      %29 = dma.hbm_to_vmem [thread:$0]  %s1, 57344, %s24, [#allocation3], 448, 448, 28
    $region9: #{posemb_lw_forward.1} parent=1 // pred_fallthru
      _
    // Predicated region
    $region10: #{posemb_lw_forward.1} parent=1 // pred_check
      _
    $region11: #{posemb_lw_forward.1} parent=1 // pred_check_branch
      %31 = sbr.rel (0) target = $region13
    $region12: #{posemb_lw_forward.1} parent=1 // pred_region
      %s33 = ssub.s32 112, 112
      %34 = vsyncadd [#allocation5], %s33
      %s36 = sshll.u32 [#allocation4], 4
      %s37 = int_to_ptr.vmem [resolvable:$true] %s36
      %39 = dma.hbm_to_vmem [thread:$0]  %s2, 112, %s37, [#allocation5]
    $region13: #{posemb_lw_forward.1} parent=1 // pred_fallthru
      _
    // Predicated region
    $region14: #{posemb_lw_forward.1} parent=1 // pred_check
      _
    $region15: #{posemb_lw_forward.1} parent=1 // pred_check_branch
      %41 = sbr.rel (0) target = $region17
    $region16: #{posemb_lw_forward.1} parent=1 // pred_region
      %s43 = ssub.s32 112, 112
      %44 = vsyncadd [#allocation5], %s43
      %s46 = sshll.u32 [#allocation6], 4
      %s47 = int_to_ptr.vmem [resolvable:$true] %s46
      %49 = dma.hbm_to_vmem [thread:$0]  %s3, 112, %s47, [#allocation5]
    $region17: #{posemb_lw_forward.1} parent=1 // pred_fallthru
      _
    // Predicated region
    $region18: #{posemb_lw_forward.1} parent=1 // pred_check
      _
    $region19: #{posemb_lw_forward.1} parent=1 // pred_check_branch
      %51 = sbr.rel (0) target = $region21
    $region20: #{posemb_lw_forward.1} parent=1 // pred_region
      %s53 = ssub.s32 28672, 28672
      %54 = vsyncadd [#allocation8], %s53
      %s55 = sshll.u32 [#allocation7], 4
      %s56 = int_to_ptr.vmem [resolvable:$true] %s55
      %61 = dma.hbm_to_vmem [thread:$0]  %s4, 28672, %s56, [#allocation8], 256, 256, 16
    $region21: #{posemb_lw_forward.1} parent=1 // pred_fallthru
      _
    // Predicated region
    $region22: #{posemb_lw_forward.1} parent=1 // pred_check
      _
    $region23: #{posemb_lw_forward.1} parent=1 // pred_check_branch
      %63 = sbr.rel (0) target = $region25
    $region24: #{posemb_lw_forward.1} parent=1 // pred_region
      %s65 = ssub.s32 64, 64
      %66 = vsyncadd [#allocation8], %s65
      %s68 = sshll.u32 [#allocation9], 4
      %s69 = int_to_ptr.vmem [resolvable:$true] %s68
      %71 = dma.hbm_to_vmem [thread:$0]  %s5, 64, %s69, [#allocation8]
    $region25: #{posemb_lw_forward.1} parent=1 // pred_fallthru
      _
    // Predicated region
    $region26: #{posemb_lw_forward.1} parent=1 // pred_check
      _
    $region27: #{posemb_lw_forward.1} parent=1 // pred_check_branch
      %73 = sbr.rel (0) target = $region29
    $region28: #{posemb_lw_forward.1} parent=1 // pred_region
      %s75 = ssub.s32 64, 64
      %76 = vsyncadd [#allocation11], %s75
      %s78 = sshll.u32 [#allocation10], 4
      %s79 = int_to_ptr.vmem [resolvable:$true] %s78
      %81 = dma.hbm_to_vmem [thread:$0]  %s6, 64, %s79, [#allocation11]
    $region29: #{posemb_lw_forward.1} parent=1 // pred_fallthru
      _
    // Predicated region
    $region30: #{posemb_lw_forward.1} parent=1 // pred_check
      _
    $region31: #{posemb_lw_forward.1} parent=1 // pred_check_branch
      %83 = sbr.rel (0) target = $region33
    $region32: #{posemb_lw_forward.1} parent=1 // pred_region
      %84 = dma.done [#allocation3], 57344
    $region33: #{posemb_lw_forward.1} parent=1 // pred_fallthru
      _
    // Predicated region
    $region34: #{posemb_lw_forward.1} parent=1 // pred_check
      _
    $region35: #{posemb_lw_forward.1} parent=1 // pred_check_branch
      %86 = sbr.rel (0) target = $region37
    $region36: #{posemb_lw_forward.1} parent=1 // pred_region
      %87 = dma.done [#allocation5], 112
    $region37: #{posemb_lw_forward.1} parent=1 // pred_fallthru
      _
    // Predicated region
    $region38: #{posemb_lw_forward.1} parent=1 // pred_check
      _
    $region39: #{posemb_lw_forward.1} parent=1 // pred_check_branch
      %89 = sbr.rel (0) target = $region41
    $region40: #{posemb_lw_forward.1} parent=1 // pred_region
      %90 = dma.done [#allocation5], 112
    $region41: #{posemb_lw_forward.1} parent=1 // pred_fallthru
      _
    // Predicated region
    $region42: #{posemb_lw_forward.1} parent=1 // pred_check
      _
    $region43: #{posemb_lw_forward.1} parent=1 // pred_check_branch
      %92 = sbr.rel (0) target = $region45
    $region44: #{posemb_lw_forward.1} parent=1 // pred_region
      %93 = dma.done [#allocation8], 28672
    $region45: #{posemb_lw_forward.1} parent=1 // pred_fallthru
      _
    // Predicated region
    $region46: #{posemb_lw_forward.1} parent=1 // pred_check
      _
    $region47: #{posemb_lw_forward.1} parent=1 // pred_check_branch
      %95 = sbr.rel (0) target = $region49
    $region48: #{posemb_lw_forward.1} parent=1 // pred_region
      %96 = dma.done [#allocation8], 64
    $region49: #{posemb_lw_forward.1} parent=1 // pred_fallthru
      _
    // Predicated region
    $region50: #{posemb_lw_forward.1} parent=1 // pred_check
      _
    $region51: #{posemb_lw_forward.1} parent=1 // pred_check_branch
      %98 = sbr.rel (0) target = $region53
    $region52: #{posemb_lw_forward.1} parent=1 // pred_region
      %99 = dma.done [#allocation11], 64
    $region53: #{posemb_lw_forward.1} parent=1 // pred_fallthru
      _
    %v101 = vld [vmem:[%s0] sm:$0xff]
    %v102 = vld [vmem:[%s0 + $0x8] sm:$0xff]
    %v103 = vld [vmem:[%s0 + $0x10] sm:$0xff]
    %v104 = vld [vmem:[%s0 + $0x18] sm:$0xff]
    %v105 = vld [vmem:[%s0 + $0x20] sm:$0xff]
    %v106 = vld [vmem:[%s0 + $0x28] sm:$0xff]
    %v107 = vld [vmem:[%s0 + $0x30] sm:$0xff]
    %v108 = vld [vmem:[%s0 + $0x38] sm:$0xff]
    %v109 = vld [vmem:[#allocation2] sm:$0xff]
    %v110 = vld [vmem:[#allocation2 + $0x8] sm:$0xff]
    %v111 = vld [vmem:[#allocation2 + $0x10] sm:$0xff]
    %v112 = vld [vmem:[#allocation2 + $0x18] sm:$0xf]
    %v113 = vld [vmem:[#allocation2 + $0x1c] sm:$0xff]
    %v114 = vld [vmem:[#allocation2 + $0x24] sm:$0xff]
    %v115 = vld [vmem:[#allocation2 + $0x2c] sm:$0xff]
    %v116 = vld [vmem:[#allocation2 + $0x34] sm:$0xf]
    %v117 = vld [vmem:[#allocation2 + $0x38] sm:$0xff]
    %v118 = vld [vmem:[#allocation2 + $0x40] sm:$0xff]
    %v119 = vld [vmem:[#allocation2 + $0x48] sm:$0xff]
    %v120 = vld [vmem:[#allocation2 + $0x50] sm:$0xf]
    %v121 = vld [vmem:[#allocation2 + $0x54] sm:$0xff]
    %v122 = vld [vmem:[#allocation2 + $0x5c] sm:$0xff]
    %v123 = vld [vmem:[#allocation2 + $0x64] sm:$0xff]
    %v124 = vld [vmem:[#allocation2 + $0x6c] sm:$0xf]
    %v125 = vld [vmem:[#allocation2 + $0x70] sm:$0xff]
    %v126 = vld [vmem:[#allocation2 + $0x78] sm:$0xff]
    %v127 = vld [vmem:[#allocation2 + $0x80] sm:$0xff]
    %v128 = vld [vmem:[#allocation2 + $0x88] sm:$0xf]
    %v129 = vld [vmem:[#allocation2 + $0x8c] sm:$0xff]
    %v130 = vld [vmem:[#allocation2 + $0x94] sm:$0xff]
    %v131 = vld [vmem:[#allocation2 + $0x9c] sm:$0xff]
    %v132 = vld [vmem:[#allocation2 + $0xa4] sm:$0xf]
    %v133 = vld [vmem:[#allocation2 + $0xa8] sm:$0xff]
    %v134 = vld [vmem:[#allocation2 + $0xb0] sm:$0xff]
    %v135 = vld [vmem:[#allocation2 + $0xb8] sm:$0xff]
    %v136 = vld [vmem:[#allocation2 + $0xc0] sm:$0xf]
    %v137 = vld [vmem:[#allocation2 + $0xc4] sm:$0xff]
    %v138 = vld [vmem:[#allocation2 + $0xcc] sm:$0xff]
    %v139 = vld [vmem:[#allocation2 + $0xd4] sm:$0xff]
    %v140 = vld [vmem:[#allocation2 + $0xdc] sm:$0xf]
    %v141 = vld [vmem:[#allocation2 + $0xe0] sm:$0xff]
    %v142 = vld [vmem:[#allocation2 + $0xe8] sm:$0xff]
    %v143 = vld [vmem:[#allocation2 + $0xf0] sm:$0xff]
    %v144 = vld [vmem:[#allocation2 + $0xf8] sm:$0xf]
    %v145 = vld [vmem:[#allocation2 + $0xfc] sm:$0xff]
    %v146 = vld [vmem:[#allocation2 + $0x104] sm:$0xff]
    %v147 = vld [vmem:[#allocation2 + $0x10c] sm:$0xff]
    %v148 = vld [vmem:[#allocation2 + $0x114] sm:$0xf]
    %v149 = vld [vmem:[#allocation2 + $0x118] sm:$0xff]
    %v150 = vld [vmem:[#allocation2 + $0x120] sm:$0xff]
    %v151 = vld [vmem:[#allocation2 + $0x128] sm:$0xff]
    %v152 = vld [vmem:[#allocation2 + $0x130] sm:$0xf]
    %v153 = vld [vmem:[#allocation2 + $0x134] sm:$0xff]
    %v154 = vld [vmem:[#allocation2 + $0x13c] sm:$0xff]
    %v155 = vld [vmem:[#allocation2 + $0x144] sm:$0xff]
    %v156 = vld [vmem:[#allocation2 + $0x14c] sm:$0xf]
    %v157 = vld [vmem:[#allocation2 + $0x150] sm:$0xff]
    %v158 = vld [vmem:[#allocation2 + $0x158] sm:$0xff]
    %v159 = vld [vmem:[#allocation2 + $0x160] sm:$0xff]
    %v160 = vld [vmem:[#allocation2 + $0x168] sm:$0xf]
    %v161 = vld [vmem:[#allocation2 + $0x16c] sm:$0xff]
    %v162 = vld [vmem:[#allocation2 + $0x174] sm:$0xff]
    %v163 = vld [vmem:[#allocation2 + $0x17c] sm:$0xff]
    %v164 = vld [vmem:[#allocation2 + $0x184] sm:$0xf]
    %v165 = vld [vmem:[#allocation2 + $0x188] sm:$0xff]
    %v166 = vld [vmem:[#allocation2 + $0x190] sm:$0xff]
    %v167 = vld [vmem:[#allocation2 + $0x198] sm:$0xff]
    %v168 = vld [vmem:[#allocation2 + $0x1a0] sm:$0xf]
    %v169 = vld [vmem:[#allocation2 + $0x1a4] sm:$0xff]
    %v170 = vld [vmem:[#allocation2 + $0x1ac] sm:$0xff]
    %v171 = vld [vmem:[#allocation2 + $0x1b4] sm:$0xff]
    %v172 = vld [vmem:[#allocation2 + $0x1bc] sm:$0xf]
    %v173 = vld [vmem:[#allocation2 + $0x1c0] sm:$0xff]
    %v174 = vld [vmem:[#allocation2 + $0x1c8] sm:$0xff]
    %v175 = vld [vmem:[#allocation2 + $0x1d0] sm:$0xff]
    %v176 = vld [vmem:[#allocation2 + $0x1d8] sm:$0xf]
    %v177 = vld [vmem:[#allocation2 + $0x1dc] sm:$0xff]
    %v178 = vld [vmem:[#allocation2 + $0x1e4] sm:$0xff]
    %v179 = vld [vmem:[#allocation2 + $0x1ec] sm:$0xff]
    %v180 = vld [vmem:[#allocation2 + $0x1f4] sm:$0xf]
    %v181 = vld [vmem:[#allocation2 + $0x1f8] sm:$0xff]
    %v182 = vld [vmem:[#allocation2 + $0x200] sm:$0xff]
    %v183 = vld [vmem:[#allocation2 + $0x208] sm:$0xff]
    %v184 = vld [vmem:[#allocation2 + $0x210] sm:$0xf]
    %v185 = vld [vmem:[#allocation2 + $0x214] sm:$0xff]
    %v186 = vld [vmem:[#allocation2 + $0x21c] sm:$0xff]
    %v187 = vld [vmem:[#allocation2 + $0x224] sm:$0xff]
    %v188 = vld [vmem:[#allocation2 + $0x22c] sm:$0xf]
    %v189 = vld [vmem:[#allocation2 + $0x230] sm:$0xff]
    %v190 = vld [vmem:[#allocation2 + $0x238] sm:$0xff]
    %v191 = vld [vmem:[#allocation2 + $0x240] sm:$0xff]
    %v192 = vld [vmem:[#allocation2 + $0x248] sm:$0xf]
    %v193 = vld [vmem:[#allocation2 + $0x24c] sm:$0xff]
    %v194 = vld [vmem:[#allocation2 + $0x254] sm:$0xff]
    %v195 = vld [vmem:[#allocation2 + $0x25c] sm:$0xff]
    %v196 = vld [vmem:[#allocation2 + $0x264] sm:$0xf]
    %v197 = vld [vmem:[#allocation2 + $0x268] sm:$0xff]
    %v198 = vld [vmem:[#allocation2 + $0x270] sm:$0xff]
    %v199 = vld [vmem:[#allocation2 + $0x278] sm:$0xff]
    %v200 = vld [vmem:[#allocation2 + $0x280] sm:$0xf]
    %v201 = vld [vmem:[#allocation2 + $0x284] sm:$0xff]
    %v202 = vld [vmem:[#allocation2 + $0x28c] sm:$0xff]
    %v203 = vld [vmem:[#allocation2 + $0x294] sm:$0xff]
    %v204 = vld [vmem:[#allocation2 + $0x29c] sm:$0xf]
    %v205 = vld [vmem:[#allocation2 + $0x2a0] sm:$0xff]
    %v206 = vld [vmem:[#allocation2 + $0x2a8] sm:$0xff]
    %v207 = vld [vmem:[#allocation2 + $0x2b0] sm:$0xff]
    %v208 = vld [vmem:[#allocation2 + $0x2b8] sm:$0xf]
    %v209 = vld [vmem:[#allocation2 + $0x2bc] sm:$0xff]
    %v210 = vld [vmem:[#allocation2 + $0x2c4] sm:$0xff]
    %v211 = vld [vmem:[#allocation2 + $0x2cc] sm:$0xff]
    %v212 = vld [vmem:[#allocation2 + $0x2d4] sm:$0xf]
    %v213 = vld [vmem:[#allocation2 + $0x2d8] sm:$0xff]
    %v214 = vld [vmem:[#allocation2 + $0x2e0] sm:$0xff]
    %v215 = vld [vmem:[#allocation2 + $0x2e8] sm:$0xff]
    %v216 = vld [vmem:[#allocation2 + $0x2f0] sm:$0xf]
    %v217 = vld [vmem:[#allocation2 + $0x2f4] sm:$0xff]
    %v218 = vld [vmem:[#allocation2 + $0x2fc] sm:$0xff]
    %v219 = vld [vmem:[#allocation2 + $0x304] sm:$0xff]
    %v220 = vld [vmem:[#allocation2 + $0x30c] sm:$0xf]
    %v221 = vld [vmem:[#allocation2 + $0x310] sm:$0xff]
    %v222 = vld [vmem:[#allocation2 + $0x318] sm:$0xff]
    %v223 = vld [vmem:[#allocation2 + $0x320] sm:$0xff]
    %v224 = vld [vmem:[#allocation2 + $0x328] sm:$0xf]
    %v225 = vld [vmem:[#allocation2 + $0x32c] sm:$0xff]
    %v226 = vld [vmem:[#allocation2 + $0x334] sm:$0xff]
    %v227 = vld [vmem:[#allocation2 + $0x33c] sm:$0xff]
    %v228 = vld [vmem:[#allocation2 + $0x344] sm:$0xf]
    %v229 = vld [vmem:[#allocation2 + $0x348] sm:$0xff]
    %v230 = vld [vmem:[#allocation2 + $0x350] sm:$0xff]
    %v231 = vld [vmem:[#allocation2 + $0x358] sm:$0xff]
    %v232 = vld [vmem:[#allocation2 + $0x360] sm:$0xf]
    %v233 = vld [vmem:[#allocation2 + $0x364] sm:$0xff]
    %v234 = vld [vmem:[#allocation2 + $0x36c] sm:$0xff]
    %v235 = vld [vmem:[#allocation2 + $0x374] sm:$0xff]
    %v236 = vld [vmem:[#allocation2 + $0x37c] sm:$0xf]
    %v237 = vld [vmem:[#allocation2 + $0x380] sm:$0xff]
    %v238 = vld [vmem:[#allocation2 + $0x388] sm:$0xff]
    %v239 = vld [vmem:[#allocation2 + $0x390] sm:$0xff]
    %v240 = vld [vmem:[#allocation2 + $0x398] sm:$0xf]
    %v241 = vld [vmem:[#allocation2 + $0x39c] sm:$0xff]
    %v242 = vld [vmem:[#allocation2 + $0x3a4] sm:$0xff]
    %v243 = vld [vmem:[#allocation2 + $0x3ac] sm:$0xff]
    %v244 = vld [vmem:[#allocation2 + $0x3b4] sm:$0xf]
    %v245 = vld [vmem:[#allocation2 + $0x3b8] sm:$0xff]
    %v246 = vld [vmem:[#allocation2 + $0x3c0] sm:$0xff]
    %v247 = vld [vmem:[#allocation2 + $0x3c8] sm:$0xff]
    %v248 = vld [vmem:[#allocation2 + $0x3d0] sm:$0xf]
    %v249 = vld [vmem:[#allocation2 + $0x3d4] sm:$0xff]
    %v250 = vld [vmem:[#allocation2 + $0x3dc] sm:$0xff]
    %v251 = vld [vmem:[#allocation2 + $0x3e4] sm:$0xff]
    %v252 = vld [vmem:[#allocation2 + $0x3ec] sm:$0xf]
    %v253 = vld [vmem:[#allocation2 + $0x3f0] sm:$0xff]
    %v254 = vld [vmem:[#allocation2 + $0x3f8] sm:$0xff]
    %v255 = vld [vmem:[#allocation2 + $0x400] sm:$0xff]
    %v256 = vld [vmem:[#allocation2 + $0x408] sm:$0xf]
    %v257 = vld [vmem:[#allocation2 + $0x40c] sm:$0xff]
    %v258 = vld [vmem:[#allocation2 + $0x414] sm:$0xff]
    %v259 = vld [vmem:[#allocation2 + $0x41c] sm:$0xff]
    %v260 = vld [vmem:[#allocation2 + $0x424] sm:$0xf]
    %v261 = vld [vmem:[#allocation2 + $0x428] sm:$0xff]
    %v262 = vld [vmem:[#allocation2 + $0x430] sm:$0xff]
    %v263 = vld [vmem:[#allocation2 + $0x438] sm:$0xff]
    %v264 = vld [vmem:[#allocation2 + $0x440] sm:$0xf]
    %v265 = vld [vmem:[#allocation2 + $0x444] sm:$0xff]
    %v266 = vld [vmem:[#allocation2 + $0x44c] sm:$0xff]
    %v267 = vld [vmem:[#allocation2 + $0x454] sm:$0xff]
    %v268 = vld [vmem:[#allocation2 + $0x45c] sm:$0xf]
    %v269 = vld [vmem:[#allocation2 + $0x460] sm:$0xff]
    %v270 = vld [vmem:[#allocation2 + $0x468] sm:$0xff]
    %v271 = vld [vmem:[#allocation2 + $0x470] sm:$0xff]
    %v272 = vld [vmem:[#allocation2 + $0x478] sm:$0xf]
    %v273 = vld [vmem:[#allocation2 + $0x47c] sm:$0xff]
    %v274 = vld [vmem:[#allocation2 + $0x484] sm:$0xff]
    %v275 = vld [vmem:[#allocation2 + $0x48c] sm:$0xff]
    %v276 = vld [vmem:[#allocation2 + $0x494] sm:$0xf]
    %v277 = vld [vmem:[#allocation2 + $0x498] sm:$0xff]
    %v278 = vld [vmem:[#allocation2 + $0x4a0] sm:$0xff]
    %v279 = vld [vmem:[#allocation2 + $0x4a8] sm:$0xff]
    %v280 = vld [vmem:[#allocation2 + $0x4b0] sm:$0xf]
    %v281 = vld [vmem:[#allocation2 + $0x4b4] sm:$0xff]
    %v282 = vld [vmem:[#allocation2 + $0x4bc] sm:$0xff]
    %v283 = vld [vmem:[#allocation2 + $0x4c4] sm:$0xff]
    %v284 = vld [vmem:[#allocation2 + $0x4cc] sm:$0xf]
    %v285 = vld [vmem:[#allocation2 + $0x4d0] sm:$0xff]
    %v286 = vld [vmem:[#allocation2 + $0x4d8] sm:$0xff]
    %v287 = vld [vmem:[#allocation2 + $0x4e0] sm:$0xff]
    %v288 = vld [vmem:[#allocation2 + $0x4e8] sm:$0xf]
    %v289 = vld [vmem:[#allocation2 + $0x4ec] sm:$0xff]
    %v290 = vld [vmem:[#allocation2 + $0x4f4] sm:$0xff]
    %v291 = vld [vmem:[#allocation2 + $0x4fc] sm:$0xff]
    %v292 = vld [vmem:[#allocation2 + $0x504] sm:$0xf]
    %v293 = vld [vmem:[#allocation2 + $0x508] sm:$0xff]
    %v294 = vld [vmem:[#allocation2 + $0x510] sm:$0xff]
    %v295 = vld [vmem:[#allocation2 + $0x518] sm:$0xff]
    %v296 = vld [vmem:[#allocation2 + $0x520] sm:$0xf]
    %v297 = vld [vmem:[#allocation2 + $0x524] sm:$0xff]
    %v298 = vld [vmem:[#allocation2 + $0x52c] sm:$0xff]
    %v299 = vld [vmem:[#allocation2 + $0x534] sm:$0xff]
    %v300 = vld [vmem:[#allocation2 + $0x53c] sm:$0xf]
    %v301 = vld [vmem:[#allocation2 + $0x540] sm:$0xff]
    %v302 = vld [vmem:[#allocation2 + $0x548] sm:$0xff]
    %v303 = vld [vmem:[#allocation2 + $0x550] sm:$0xff]
    %v304 = vld [vmem:[#allocation2 + $0x558] sm:$0xf]
    %v305 = vld [vmem:[#allocation2 + $0x55c] sm:$0xff]
    %v306 = vld [vmem:[#allocation2 + $0x564] sm:$0xff]
    %v307 = vld [vmem:[#allocation2 + $0x56c] sm:$0xff]
    %v308 = vld [vmem:[#allocation2 + $0x574] sm:$0xf]
    %v309 = vld [vmem:[#allocation2 + $0x578] sm:$0xff]
    %v310 = vld [vmem:[#allocation2 + $0x580] sm:$0xff]
    %v311 = vld [vmem:[#allocation2 + $0x588] sm:$0xff]
    %v312 = vld [vmem:[#allocation2 + $0x590] sm:$0xf]
    %v313 = vld [vmem:[#allocation2 + $0x594] sm:$0xff]
    %v314 = vld [vmem:[#allocation2 + $0x59c] sm:$0xff]
    %v315 = vld [vmem:[#allocation2 + $0x5a4] sm:$0xff]
    %v316 = vld [vmem:[#allocation2 + $0x5ac] sm:$0xf]
    %v317 = vld [vmem:[#allocation2 + $0x5b0] sm:$0xff]
    %v318 = vld [vmem:[#allocation2 + $0x5b8] sm:$0xff]
    %v319 = vld [vmem:[#allocation2 + $0x5c0] sm:$0xff]
    %v320 = vld [vmem:[#allocation2 + $0x5c8] sm:$0xf]
    %v321 = vld [vmem:[#allocation2 + $0x5cc] sm:$0xff]
    %v322 = vld [vmem:[#allocation2 + $0x5d4] sm:$0xff]
    %v323 = vld [vmem:[#allocation2 + $0x5dc] sm:$0xff]
    %v324 = vld [vmem:[#allocation2 + $0x5e4] sm:$0xf]
    %v325 = vld [vmem:[#allocation2 + $0x5e8] sm:$0xff]
    %v326 = vld [vmem:[#allocation2 + $0x5f0] sm:$0xff]
    %v327 = vld [vmem:[#allocation2 + $0x5f8] sm:$0xff]
    %v328 = vld [vmem:[#allocation2 + $0x600] sm:$0xf]
    %v329 = vld [vmem:[#allocation2 + $0x604] sm:$0xff]
    %v330 = vld [vmem:[#allocation2 + $0x60c] sm:$0xff]
    %v331 = vld [vmem:[#allocation2 + $0x614] sm:$0xff]
    %v332 = vld [vmem:[#allocation2 + $0x61c] sm:$0xf]
    %v333 = vld [vmem:[#allocation2 + $0x620] sm:$0xff]
    %v334 = vld [vmem:[#allocation2 + $0x628] sm:$0xff]
    %v335 = vld [vmem:[#allocation2 + $0x630] sm:$0xff]
    %v336 = vld [vmem:[#allocation2 + $0x638] sm:$0xf]
    %v337 = vld [vmem:[#allocation2 + $0x63c] sm:$0xff]
    %v338 = vld [vmem:[#allocation2 + $0x644] sm:$0xff]
    %v339 = vld [vmem:[#allocation2 + $0x64c] sm:$0xff]
    %v340 = vld [vmem:[#allocation2 + $0x654] sm:$0xf]
    %v341 = vld [vmem:[#allocation2 + $0x658] sm:$0xff]
    %v342 = vld [vmem:[#allocation2 + $0x660] sm:$0xff]
    %v343 = vld [vmem:[#allocation2 + $0x668] sm:$0xff]
    %v344 = vld [vmem:[#allocation2 + $0x670] sm:$0xf]
    %v345 = vld [vmem:[#allocation2 + $0x674] sm:$0xff]
    %v346 = vld [vmem:[#allocation2 + $0x67c] sm:$0xff]
    %v347 = vld [vmem:[#allocation2 + $0x684] sm:$0xff]
    %v348 = vld [vmem:[#allocation2 + $0x68c] sm:$0xf]
    %v349 = vld [vmem:[#allocation2 + $0x690] sm:$0xff]
    %v350 = vld [vmem:[#allocation2 + $0x698] sm:$0xff]
    %v351 = vld [vmem:[#allocation2 + $0x6a0] sm:$0xff]
    %v352 = vld [vmem:[#allocation2 + $0x6a8] sm:$0xf]
    %v353 = vld [vmem:[#allocation2 + $0x6ac] sm:$0xff]
    %v354 = vld [vmem:[#allocation2 + $0x6b4] sm:$0xff]
    %v355 = vld [vmem:[#allocation2 + $0x6bc] sm:$0xff]
    %v356 = vld [vmem:[#allocation2 + $0x6c4] sm:$0xf]
    %v357 = vld [vmem:[#allocation2 + $0x6c8] sm:$0xff]
    %v358 = vld [vmem:[#allocation2 + $0x6d0] sm:$0xff]
    %v359 = vld [vmem:[#allocation2 + $0x6d8] sm:$0xff]
    %v360 = vld [vmem:[#allocation2 + $0x6e0] sm:$0xf]
    %v361 = vld [vmem:[#allocation2 + $0x6e4] sm:$0xff]
    %v362 = vld [vmem:[#allocation2 + $0x6ec] sm:$0xff]
    %v363 = vld [vmem:[#allocation2 + $0x6f4] sm:$0xff]
    %v364 = vld [vmem:[#allocation2 + $0x6fc] sm:$0xf]
    %v365 = vld [vmem:[#allocation2 + $0x700] sm:$0xff]
    %v366 = vld [vmem:[#allocation2 + $0x708] sm:$0xff]
    %v367 = vld [vmem:[#allocation2 + $0x710] sm:$0xff]
    %v368 = vld [vmem:[#allocation2 + $0x718] sm:$0xf]
    %v369 = vld [vmem:[#allocation2 + $0x71c] sm:$0xff]
    %v370 = vld [vmem:[#allocation2 + $0x724] sm:$0xff]
    %v371 = vld [vmem:[#allocation2 + $0x72c] sm:$0xff]
    %v372 = vld [vmem:[#allocation2 + $0x734] sm:$0xf]
    %v373 = vld [vmem:[#allocation2 + $0x738] sm:$0xff]
    %v374 = vld [vmem:[#allocation2 + $0x740] sm:$0xff]
    %v375 = vld [vmem:[#allocation2 + $0x748] sm:$0xff]
    %v376 = vld [vmem:[#allocation2 + $0x750] sm:$0xf]
    %v377 = vld [vmem:[#allocation2 + $0x754] sm:$0xff]
    %v378 = vld [vmem:[#allocation2 + $0x75c] sm:$0xff]
    %v379 = vld [vmem:[#allocation2 + $0x764] sm:$0xff]
    %v380 = vld [vmem:[#allocation2 + $0x76c] sm:$0xf]
    %v381 = vld [vmem:[#allocation2 + $0x770] sm:$0xff]
    %v382 = vld [vmem:[#allocation2 + $0x778] sm:$0xff]
    %v383 = vld [vmem:[#allocation2 + $0x780] sm:$0xff]
    %v384 = vld [vmem:[#allocation2 + $0x788] sm:$0xf]
    %v385 = vld [vmem:[#allocation2 + $0x78c] sm:$0xff]
    %v386 = vld [vmem:[#allocation2 + $0x794] sm:$0xff]
    %v387 = vld [vmem:[#allocation2 + $0x79c] sm:$0xff]
    %v388 = vld [vmem:[#allocation2 + $0x7a4] sm:$0xf]
    %v389 = vld [vmem:[#allocation2 + $0x7a8] sm:$0xff]
    %v390 = vld [vmem:[#allocation2 + $0x7b0] sm:$0xff]
    %v391 = vld [vmem:[#allocation2 + $0x7b8] sm:$0xff]
    %v392 = vld [vmem:[#allocation2 + $0x7c0] sm:$0xf]
    %v393 = vld [vmem:[#allocation2 + $0x7c4] sm:$0xff]
    %v394 = vld [vmem:[#allocation2 + $0x7cc] sm:$0xff]
    %v395 = vld [vmem:[#allocation2 + $0x7d4] sm:$0xff]
    %v396 = vld [vmem:[#allocation2 + $0x7dc] sm:$0xf]
    %v397 = vld [vmem:[#allocation2 + $0x7e0] sm:$0xff]
    %v398 = vld [vmem:[#allocation2 + $0x7e8] sm:$0xff]
    %v399 = vld [vmem:[#allocation2 + $0x7f0] sm:$0xff]
    %v400 = vld [vmem:[#allocation2 + $0x7f8] sm:$0xf]
    %v401 = vld [vmem:[#allocation2 + $0x7fc] sm:$0xff]
    %v402 = vld [vmem:[#allocation2 + $0x804] sm:$0xff]
    %v403 = vld [vmem:[#allocation2 + $0x80c] sm:$0xff]
    %v404 = vld [vmem:[#allocation2 + $0x814] sm:$0xf]
    %v405 = vld [vmem:[#allocation2 + $0x818] sm:$0xff]
    %v406 = vld [vmem:[#allocation2 + $0x820] sm:$0xff]
    %v407 = vld [vmem:[#allocation2 + $0x828] sm:$0xff]
    %v408 = vld [vmem:[#allocation2 + $0x830] sm:$0xf]
    %v409 = vld [vmem:[#allocation2 + $0x834] sm:$0xff]
    %v410 = vld [vmem:[#allocation2 + $0x83c] sm:$0xff]
    %v411 = vld [vmem:[#allocation2 + $0x844] sm:$0xff]
    %v412 = vld [vmem:[#allocation2 + $0x84c] sm:$0xf]
    %v413 = vld [vmem:[#allocation2 + $0x850] sm:$0xff]
    %v414 = vld [vmem:[#allocation2 + $0x858] sm:$0xff]
    %v415 = vld [vmem:[#allocation2 + $0x860] sm:$0xff]
    %v416 = vld [vmem:[#allocation2 + $0x868] sm:$0xf]
    %v417 = vld [vmem:[#allocation2 + $0x86c] sm:$0xff]
    %v418 = vld [vmem:[#allocation2 + $0x874] sm:$0xff]
    %v419 = vld [vmem:[#allocation2 + $0x87c] sm:$0xff]
    %v420 = vld [vmem:[#allocation2 + $0x884] sm:$0xf]
    %v421 = vld [vmem:[#allocation2 + $0x888] sm:$0xff]
    %v422 = vld [vmem:[#allocation2 + $0x890] sm:$0xff]
    %v423 = vld [vmem:[#allocation2 + $0x898] sm:$0xff]
    %v424 = vld [vmem:[#allocation2 + $0x8a0] sm:$0xf]
    %v425 = vld [vmem:[#allocation2 + $0x8a4] sm:$0xff]
    %v426 = vld [vmem:[#allocation2 + $0x8ac] sm:$0xff]
    %v427 = vld [vmem:[#allocation2 + $0x8b4] sm:$0xff]
    %v428 = vld [vmem:[#allocation2 + $0x8bc] sm:$0xf]
    %v429 = vld [vmem:[#allocation2 + $0x8c0] sm:$0xff]
    %v430 = vld [vmem:[#allocation2 + $0x8c8] sm:$0xff]
    %v431 = vld [vmem:[#allocation2 + $0x8d0] sm:$0xff]
    %v432 = vld [vmem:[#allocation2 + $0x8d8] sm:$0xf]
    %v433 = vld [vmem:[#allocation2 + $0x8dc] sm:$0xff]
    %v434 = vld [vmem:[#allocation2 + $0x8e4] sm:$0xff]
    %v435 = vld [vmem:[#allocation2 + $0x8ec] sm:$0xff]
    %v436 = vld [vmem:[#allocation2 + $0x8f4] sm:$0xf]
    %v437 = vld [vmem:[#allocation2 + $0x8f8] sm:$0xff]
    %v438 = vld [vmem:[#allocation2 + $0x900] sm:$0xff]
    %v439 = vld [vmem:[#allocation2 + $0x908] sm:$0xff]
    %v440 = vld [vmem:[#allocation2 + $0x910] sm:$0xf]
    %v441 = vld [vmem:[#allocation2 + $0x914] sm:$0xff]
    %v442 = vld [vmem:[#allocation2 + $0x91c] sm:$0xff]
    %v443 = vld [vmem:[#allocation2 + $0x924] sm:$0xff]
    %v444 = vld [vmem:[#allocation2 + $0x92c] sm:$0xf]
    %v445 = vld [vmem:[#allocation2 + $0x930] sm:$0xff]
    %v446 = vld [vmem:[#allocation2 + $0x938] sm:$0xff]
    %v447 = vld [vmem:[#allocation2 + $0x940] sm:$0xff]
    %v448 = vld [vmem:[#allocation2 + $0x948] sm:$0xf]
    %v449 = vld [vmem:[#allocation2 + $0x94c] sm:$0xff]
    %v450 = vld [vmem:[#allocation2 + $0x954] sm:$0xff]
    %v451 = vld [vmem:[#allocation2 + $0x95c] sm:$0xff]
    %v452 = vld [vmem:[#allocation2 + $0x964] sm:$0xf]
    %v453 = vld [vmem:[#allocation2 + $0x968] sm:$0xff]
    %v454 = vld [vmem:[#allocation2 + $0x970] sm:$0xff]
    %v455 = vld [vmem:[#allocation2 + $0x978] sm:$0xff]
    %v456 = vld [vmem:[#allocation2 + $0x980] sm:$0xf]
    %v457 = vld [vmem:[#allocation2 + $0x984] sm:$0xff]
    %v458 = vld [vmem:[#allocation2 + $0x98c] sm:$0xff]
    %v459 = vld [vmem:[#allocation2 + $0x994] sm:$0xff]
    %v460 = vld [vmem:[#allocation2 + $0x99c] sm:$0xf]
    %v461 = vld [vmem:[#allocation2 + $0x9a0] sm:$0xff]
    %v462 = vld [vmem:[#allocation2 + $0x9a8] sm:$0xff]
    %v463 = vld [vmem:[#allocation2 + $0x9b0] sm:$0xff]
    %v464 = vld [vmem:[#allocation2 + $0x9b8] sm:$0xf]
    %v465 = vld [vmem:[#allocation2 + $0x9bc] sm:$0xff]
    %v466 = vld [vmem:[#allocation2 + $0x9c4] sm:$0xff]
    %v467 = vld [vmem:[#allocation2 + $0x9cc] sm:$0xff]
    %v468 = vld [vmem:[#allocation2 + $0x9d4] sm:$0xf]
    %v469 = vld [vmem:[#allocation2 + $0x9d8] sm:$0xff]
    %v470 = vld [vmem:[#allocation2 + $0x9e0] sm:$0xff]
    %v471 = vld [vmem:[#allocation2 + $0x9e8] sm:$0xff]
    %v472 = vld [vmem:[#allocation2 + $0x9f0] sm:$0xf]
    %v473 = vld [vmem:[#allocation2 + $0x9f4] sm:$0xff]
    %v474 = vld [vmem:[#allocation2 + $0x9fc] sm:$0xff]
    %v475 = vld [vmem:[#allocation2 + $0xa04] sm:$0xff]
    %v476 = vld [vmem:[#allocation2 + $0xa0c] sm:$0xf]
    %v477 = vld [vmem:[#allocation2 + $0xa10] sm:$0xff]
    %v478 = vld [vmem:[#allocation2 + $0xa18] sm:$0xff]
    %v479 = vld [vmem:[#allocation2 + $0xa20] sm:$0xff]
    %v480 = vld [vmem:[#allocation2 + $0xa28] sm:$0xf]
    %v481 = vld [vmem:[#allocation2 + $0xa2c] sm:$0xff]
    %v482 = vld [vmem:[#allocation2 + $0xa34] sm:$0xff]
    %v483 = vld [vmem:[#allocation2 + $0xa3c] sm:$0xff]
    %v484 = vld [vmem:[#allocation2 + $0xa44] sm:$0xf]
    %v485 = vld [vmem:[#allocation2 + $0xa48] sm:$0xff]
    %v486 = vld [vmem:[#allocation2 + $0xa50] sm:$0xff]
    %v487 = vld [vmem:[#allocation2 + $0xa58] sm:$0xff]
    %v488 = vld [vmem:[#allocation2 + $0xa60] sm:$0xf]
    %v489 = vld [vmem:[#allocation2 + $0xa64] sm:$0xff]
    %v490 = vld [vmem:[#allocation2 + $0xa6c] sm:$0xff]
    %v491 = vld [vmem:[#allocation2 + $0xa74] sm:$0xff]
    %v492 = vld [vmem:[#allocation2 + $0xa7c] sm:$0xf]
    %v493 = vld [vmem:[#allocation2 + $0xa80] sm:$0xff]
    %v494 = vld [vmem:[#allocation2 + $0xa88] sm:$0xff]
    %v495 = vld [vmem:[#allocation2 + $0xa90] sm:$0xff]
    %v496 = vld [vmem:[#allocation2 + $0xa98] sm:$0xf]
    %v497 = vld [vmem:[#allocation2 + $0xa9c] sm:$0xff]
    %v498 = vld [vmem:[#allocation2 + $0xaa4] sm:$0xff]
    %v499 = vld [vmem:[#allocation2 + $0xaac] sm:$0xff]
    %v500 = vld [vmem:[#allocation2 + $0xab4] sm:$0xf]
    %v501 = vld [vmem:[#allocation2 + $0xab8] sm:$0xff]
    %v502 = vld [vmem:[#allocation2 + $0xac0] sm:$0xff]
    %v503 = vld [vmem:[#allocation2 + $0xac8] sm:$0xff]
    %v504 = vld [vmem:[#allocation2 + $0xad0] sm:$0xf]
    %v505 = vld [vmem:[#allocation2 + $0xad4] sm:$0xff]
    %v506 = vld [vmem:[#allocation2 + $0xadc] sm:$0xff]
    %v507 = vld [vmem:[#allocation2 + $0xae4] sm:$0xff]
    %v508 = vld [vmem:[#allocation2 + $0xaec] sm:$0xf]
    %v509 = vld [vmem:[#allocation2 + $0xaf0] sm:$0xff]
    %v510 = vld [vmem:[#allocation2 + $0xaf8] sm:$0xff]
    %v511 = vld [vmem:[#allocation2 + $0xb00] sm:$0xff]
    %v512 = vld [vmem:[#allocation2 + $0xb08] sm:$0xf]
    %v513 = vld [vmem:[#allocation2 + $0xb0c] sm:$0xff]
    %v514 = vld [vmem:[#allocation2 + $0xb14] sm:$0xff]
    %v515 = vld [vmem:[#allocation2 + $0xb1c] sm:$0xff]
    %v516 = vld [vmem:[#allocation2 + $0xb24] sm:$0xf]
    %v517 = vld [vmem:[#allocation2 + $0xb28] sm:$0xff]
    %v518 = vld [vmem:[#allocation2 + $0xb30] sm:$0xff]
    %v519 = vld [vmem:[#allocation2 + $0xb38] sm:$0xff]
    %v520 = vld [vmem:[#allocation2 + $0xb40] sm:$0xf]
    %v521 = vld [vmem:[#allocation2 + $0xb44] sm:$0xff]
    %v522 = vld [vmem:[#allocation2 + $0xb4c] sm:$0xff]
    %v523 = vld [vmem:[#allocation2 + $0xb54] sm:$0xff]
    %v524 = vld [vmem:[#allocation2 + $0xb5c] sm:$0xf]
    %v525 = vld [vmem:[#allocation2 + $0xb60] sm:$0xff]
    %v526 = vld [vmem:[#allocation2 + $0xb68] sm:$0xff]
    %v527 = vld [vmem:[#allocation2 + $0xb70] sm:$0xff]
    %v528 = vld [vmem:[#allocation2 + $0xb78] sm:$0xf]
    %v529 = vld [vmem:[#allocation2 + $0xb7c] sm:$0xff]
    %v530 = vld [vmem:[#allocation2 + $0xb84] sm:$0xff]
    %v531 = vld [vmem:[#allocation2 + $0xb8c] sm:$0xff]
    %v532 = vld [vmem:[#allocation2 + $0xb94] sm:$0xf]
    %v533 = vld [vmem:[#allocation2 + $0xb98] sm:$0xff]
    %v534 = vld [vmem:[#allocation2 + $0xba0] sm:$0xff]
    %v535 = vld [vmem:[#allocation2 + $0xba8] sm:$0xff]
    %v536 = vld [vmem:[#allocation2 + $0xbb0] sm:$0xf]
    %v537 = vld [vmem:[#allocation2 + $0xbb4] sm:$0xff]
    %v538 = vld [vmem:[#allocation2 + $0xbbc] sm:$0xff]
    %v539 = vld [vmem:[#allocation2 + $0xbc4] sm:$0xff]
    %v540 = vld [vmem:[#allocation2 + $0xbcc] sm:$0xf]
    %v541 = vld [vmem:[#allocation2 + $0xbd0] sm:$0xff]
    %v542 = vld [vmem:[#allocation2 + $0xbd8] sm:$0xff]
    %v543 = vld [vmem:[#allocation2 + $0xbe0] sm:$0xff]
    %v544 = vld [vmem:[#allocation2 + $0xbe8] sm:$0xf]
    %v545 = vld [vmem:[#allocation2 + $0xbec] sm:$0xff]
    %v546 = vld [vmem:[#allocation2 + $0xbf4] sm:$0xff]
    %v547 = vld [vmem:[#allocation2 + $0xbfc] sm:$0xff]
    %v548 = vld [vmem:[#allocation2 + $0xc04] sm:$0xf]
    %v549 = vld [vmem:[#allocation2 + $0xc08] sm:$0xff]
    %v550 = vld [vmem:[#allocation2 + $0xc10] sm:$0xff]
    %v551 = vld [vmem:[#allocation2 + $0xc18] sm:$0xff]
    %v552 = vld [vmem:[#allocation2 + $0xc20] sm:$0xf]
    %v553 = vld [vmem:[#allocation2 + $0xc24] sm:$0xff]
    %v554 = vld [vmem:[#allocation2 + $0xc2c] sm:$0xff]
    %v555 = vld [vmem:[#allocation2 + $0xc34] sm:$0xff]
    %v556 = vld [vmem:[#allocation2 + $0xc3c] sm:$0xf]
    %v557 = vld [vmem:[#allocation2 + $0xc40] sm:$0xff]
    %v558 = vld [vmem:[#allocation2 + $0xc48] sm:$0xff]
    %v559 = vld [vmem:[#allocation2 + $0xc50] sm:$0xff]
    %v560 = vld [vmem:[#allocation2 + $0xc58] sm:$0xf]
    %v561 = vld [vmem:[#allocation2 + $0xc5c] sm:$0xff]
    %v562 = vld [vmem:[#allocation2 + $0xc64] sm:$0xff]
    %v563 = vld [vmem:[#allocation2 + $0xc6c] sm:$0xff]
    %v564 = vld [vmem:[#allocation2 + $0xc74] sm:$0xf]
    %v565 = vld [vmem:[#allocation2 + $0xc78] sm:$0xff]
    %v566 = vld [vmem:[#allocation2 + $0xc80] sm:$0xff]
    %v567 = vld [vmem:[#allocation2 + $0xc88] sm:$0xff]
    %v568 = vld [vmem:[#allocation2 + $0xc90] sm:$0xf]
    %v569 = vld [vmem:[#allocation2 + $0xc94] sm:$0xff]
    %v570 = vld [vmem:[#allocation2 + $0xc9c] sm:$0xff]
    %v571 = vld [vmem:[#allocation2 + $0xca4] sm:$0xff]
    %v572 = vld [vmem:[#allocation2 + $0xcac] sm:$0xf]
    %v573 = vld [vmem:[#allocation2 + $0xcb0] sm:$0xff]
    %v574 = vld [vmem:[#allocation2 + $0xcb8] sm:$0xff]
    %v575 = vld [vmem:[#allocation2 + $0xcc0] sm:$0xff]
    %v576 = vld [vmem:[#allocation2 + $0xcc8] sm:$0xf]
    %v577 = vld [vmem:[#allocation2 + $0xccc] sm:$0xff]
    %v578 = vld [vmem:[#allocation2 + $0xcd4] sm:$0xff]
    %v579 = vld [vmem:[#allocation2 + $0xcdc] sm:$0xff]
    %v580 = vld [vmem:[#allocation2 + $0xce4] sm:$0xf]
    %v581 = vld [vmem:[#allocation2 + $0xce8] sm:$0xff]
    %v582 = vld [vmem:[#allocation2 + $0xcf0] sm:$0xff]
    %v583 = vld [vmem:[#allocation2 + $0xcf8] sm:$0xff]
    %v584 = vld [vmem:[#allocation2 + $0xd00] sm:$0xf]
    %v585 = vld [vmem:[#allocation2 + $0xd04] sm:$0xff]
    %v586 = vld [vmem:[#allocation2 + $0xd0c] sm:$0xff]
    %v587 = vld [vmem:[#allocation2 + $0xd14] sm:$0xff]
    %v588 = vld [vmem:[#allocation2 + $0xd1c] sm:$0xf]
    %v589 = vld [vmem:[#allocation2 + $0xd20] sm:$0xff]
    %v590 = vld [vmem:[#allocation2 + $0xd28] sm:$0xff]
    %v591 = vld [vmem:[#allocation2 + $0xd30] sm:$0xff]
    %v592 = vld [vmem:[#allocation2 + $0xd38] sm:$0xf]
    %v593 = vld [vmem:[#allocation2 + $0xd3c] sm:$0xff]
    %v594 = vld [vmem:[#allocation2 + $0xd44] sm:$0xff]
    %v595 = vld [vmem:[#allocation2 + $0xd4c] sm:$0xff]
    %v596 = vld [vmem:[#allocation2 + $0xd54] sm:$0xf]
    %v597 = vld [vmem:[#allocation2 + $0xd58] sm:$0xff]
    %v598 = vld [vmem:[#allocation2 + $0xd60] sm:$0xff]
    %v599 = vld [vmem:[#allocation2 + $0xd68] sm:$0xff]
    %v600 = vld [vmem:[#allocation2 + $0xd70] sm:$0xf]
    %v601 = vld [vmem:[#allocation2 + $0xd74] sm:$0xff]
    %v602 = vld [vmem:[#allocation2 + $0xd7c] sm:$0xff]
    %v603 = vld [vmem:[#allocation2 + $0xd84] sm:$0xff]
    %v604 = vld [vmem:[#allocation2 + $0xd8c] sm:$0xf]
    %v605 = vld [vmem:[#allocation2 + $0xd90] sm:$0xff]
    %v606 = vld [vmem:[#allocation2 + $0xd98] sm:$0xff]
    %v607 = vld [vmem:[#allocation2 + $0xda0] sm:$0xff]
    %v608 = vld [vmem:[#allocation2 + $0xda8] sm:$0xf]
    %v609 = vld [vmem:[#allocation2 + $0xdac] sm:$0xff]
    %v610 = vld [vmem:[#allocation2 + $0xdb4] sm:$0xff]
    %v611 = vld [vmem:[#allocation2 + $0xdbc] sm:$0xff]
    %v612 = vld [vmem:[#allocation2 + $0xdc4] sm:$0xf]
    %v613 = vld [vmem:[#allocation2 + $0xdc8] sm:$0xff]
    %v614 = vld [vmem:[#allocation2 + $0xdd0] sm:$0xff]
    %v615 = vld [vmem:[#allocation2 + $0xdd8] sm:$0xff]
    %v616 = vld [vmem:[#allocation2 + $0xde0] sm:$0xf]
    %v617 = vld [vmem:[#allocation2 + $0xde4] sm:$0xff]
    %v618 = vld [vmem:[#allocation2 + $0xdec] sm:$0xff]
    %v619 = vld [vmem:[#allocation2 + $0xdf4] sm:$0xff]
    %v620 = vld [vmem:[#allocation2 + $0xdfc] sm:$0xf]
    %v629 = vunpack.c.l.b16 %v101
    %v630 = vunpack.c.h.b16 %v101
    %v631 = vunpack.c.l.b16 %v102
    %v632 = vunpack.c.h.b16 %v102
    %v633 = vunpack.c.l.b16 %v103
    %v634 = vunpack.c.h.b16 %v103
    %v635 = vunpack.c.l.b16 %v104
    %v636 = vunpack.c.h.b16 %v104
    %v637 = vunpack.c.l.b16 %v105
    %v638 = vunpack.c.h.b16 %v105
    %v639 = vunpack.c.l.b16 %v106
    %v640 = vunpack.c.h.b16 %v106
    %v641 = vunpack.c.l.b16 %v107
    %v642 = vunpack.c.h.b16 %v107
    %v643 = vunpack.c.l.b16 %v108
    %v644 = vunpack.c.h.b16 %v108
    %v645 = vpack.c.b16 %v637, %v629
    %v646 = vpack.c.b16 %v638, %v630
    %v647 = vpack.c.b16 %v639, %v631
    %v648 = vpack.c.b16 %v640, %v632
    %v649 = vpack.c.b16 %v641, %v633
    %v650 = vpack.c.b16 %v642, %v634
    %v651 = vpack.c.b16 %v643, %v635
    %v652 = vpack.c.b16 %v644, %v636
    %v1173 = vunpack.c.l.b16 %v109
    %v1174 = vunpack.c.h.b16 %v109
    %v1175 = vunpack.c.l.b16 %v110
    %v1176 = vunpack.c.h.b16 %v110
    %v1177 = vunpack.c.l.b16 %v111
    %v1178 = vunpack.c.h.b16 %v111
    %v1179 = vunpack.c.l.b16 %v112
    %v1180 = vunpack.c.l.b16 %v113
    %v1181 = vunpack.c.h.b16 %v113
    %v1182 = vunpack.c.l.b16 %v114
    %v1183 = vunpack.c.h.b16 %v114
    %v1184 = vunpack.c.l.b16 %v115
    %v1185 = vunpack.c.h.b16 %v115
    %v1186 = vunpack.c.l.b16 %v116
    %v1187 = vunpack.c.l.b16 %v117
    %v1188 = vunpack.c.h.b16 %v117
    %v1189 = vunpack.c.l.b16 %v118
    %v1190 = vunpack.c.h.b16 %v118
    %v1191 = vunpack.c.l.b16 %v119
    %v1192 = vunpack.c.h.b16 %v119
    %v1193 = vunpack.c.l.b16 %v120
    %v1194 = vunpack.c.l.b16 %v121
    %v1195 = vunpack.c.h.b16 %v121
    %v1196 = vunpack.c.l.b16 %v122
    %v1197 = vunpack.c.h.b16 %v122
    %v1198 = vunpack.c.l.b16 %v123
    %v1199 = vunpack.c.h.b16 %v123
    %v1200 = vunpack.c.l.b16 %v124
    %v1201 = vunpack.c.l.b16 %v125
    %v1202 = vunpack.c.h.b16 %v125
    %v1203 = vunpack.c.l.b16 %v126
    %v1204 = vunpack.c.h.b16 %v126
    %v1205 = vunpack.c.l.b16 %v127
    %v1206 = vunpack.c.h.b16 %v127
    %v1207 = vunpack.c.l.b16 %v128
    %v1208 = vunpack.c.l.b16 %v129
    %v1209 = vunpack.c.h.b16 %v129
    %v1210 = vunpack.c.l.b16 %v130
    %v1211 = vunpack.c.h.b16 %v130
    %v1212 = vunpack.c.l.b16 %v131
    %v1213 = vunpack.c.h.b16 %v131
    %v1214 = vunpack.c.l.b16 %v132
    %v1215 = vunpack.c.l.b16 %v133
    %v1216 = vunpack.c.h.b16 %v133
    %v1217 = vunpack.c.l.b16 %v134
    %v1218 = vunpack.c.h.b16 %v134
    %v1219 = vunpack.c.l.b16 %v135
    %v1220 = vunpack.c.h.b16 %v135
    %v1221 = vunpack.c.l.b16 %v136
    %v1222 = vunpack.c.l.b16 %v137
    %v1223 = vunpack.c.h.b16 %v137
    %v1224 = vunpack.c.l.b16 %v138
    %v1225 = vunpack.c.h.b16 %v138
    %v1226 = vunpack.c.l.b16 %v139
    %v1227 = vunpack.c.h.b16 %v139
    %v1228 = vunpack.c.l.b16 %v140
    %v1229 = vunpack.c.l.b16 %v141
    %v1230 = vunpack.c.h.b16 %v141
    %v1231 = vunpack.c.l.b16 %v142
    %v1232 = vunpack.c.h.b16 %v142
    %v1233 = vunpack.c.l.b16 %v143
    %v1234 = vunpack.c.h.b16 %v143
    %v1235 = vunpack.c.l.b16 %v144
    %v1236 = vunpack.c.l.b16 %v145
    %v1237 = vunpack.c.h.b16 %v145
    %v1238 = vunpack.c.l.b16 %v146
    %v1239 = vunpack.c.h.b16 %v146
    %v1240 = vunpack.c.l.b16 %v147
    %v1241 = vunpack.c.h.b16 %v147
    %v1242 = vunpack.c.l.b16 %v148
    %v1243 = vunpack.c.l.b16 %v149
    %v1244 = vunpack.c.h.b16 %v149
    %v1245 = vunpack.c.l.b16 %v150
    %v1246 = vunpack.c.h.b16 %v150
    %v1247 = vunpack.c.l.b16 %v151
    %v1248 = vunpack.c.h.b16 %v151
    %v1249 = vunpack.c.l.b16 %v152
    %v1250 = vunpack.c.l.b16 %v153
    %v1251 = vunpack.c.h.b16 %v153
    %v1252 = vunpack.c.l.b16 %v154
    %v1253 = vunpack.c.h.b16 %v154
    %v1254 = vunpack.c.l.b16 %v155
    %v1255 = vunpack.c.h.b16 %v155
    %v1256 = vunpack.c.l.b16 %v156
    %v1257 = vunpack.c.l.b16 %v157
    %v1258 = vunpack.c.h.b16 %v157
    %v1259 = vunpack.c.l.b16 %v158
    %v1260 = vunpack.c.h.b16 %v158
    %v1261 = vunpack.c.l.b16 %v159
    %v1262 = vunpack.c.h.b16 %v159
    %v1263 = vunpack.c.l.b16 %v160
    %v1264 = vunpack.c.l.b16 %v161
    %v1265 = vunpack.c.h.b16 %v161
    %v1266 = vunpack.c.l.b16 %v162
    %v1267 = vunpack.c.h.b16 %v162
    %v1268 = vunpack.c.l.b16 %v163
    %v1269 = vunpack.c.h.b16 %v163
    %v1270 = vunpack.c.l.b16 %v164
    %v1271 = vunpack.c.l.b16 %v165
    %v1272 = vunpack.c.h.b16 %v165
    %v1273 = vunpack.c.l.b16 %v166
    %v1274 = vunpack.c.h.b16 %v166
    %v1275 = vunpack.c.l.b16 %v167
    %v1276 = vunpack.c.h.b16 %v167
    %v1277 = vunpack.c.l.b16 %v168
    %v1278 = vunpack.c.l.b16 %v169
    %v1279 = vunpack.c.h.b16 %v169
    %v1280 = vunpack.c.l.b16 %v170
    %v1281 = vunpack.c.h.b16 %v170
    %v1282 = vunpack.c.l.b16 %v171
    %v1283 = vunpack.c.h.b16 %v171
    %v1284 = vunpack.c.l.b16 %v172
    %v1285 = vunpack.c.l.b16 %v173
    %v1286 = vunpack.c.h.b16 %v173
    %v1287 = vunpack.c.l.b16 %v174
    %v1288 = vunpack.c.h.b16 %v174
    %v1289 = vunpack.c.l.b16 %v175
    %v1290 = vunpack.c.h.b16 %v175
    %v1291 = vunpack.c.l.b16 %v176
    %v1292 = vunpack.c.l.b16 %v177
    %v1293 = vunpack.c.h.b16 %v177
    %v1294 = vunpack.c.l.b16 %v178
    %v1295 = vunpack.c.h.b16 %v178
    %v1296 = vunpack.c.l.b16 %v179
    %v1297 = vunpack.c.h.b16 %v179
    %v1298 = vunpack.c.l.b16 %v180
    %v1299 = vunpack.c.l.b16 %v181
    %v1300 = vunpack.c.h.b16 %v181
    %v1301 = vunpack.c.l.b16 %v182
    %v1302 = vunpack.c.h.b16 %v182
    %v1303 = vunpack.c.l.b16 %v183
    %v1304 = vunpack.c.h.b16 %v183
    %v1305 = vunpack.c.l.b16 %v184
    %v1306 = vunpack.c.l.b16 %v185
    %v1307 = vunpack.c.h.b16 %v185
    %v1308 = vunpack.c.l.b16 %v186
    %v1309 = vunpack.c.h.b16 %v186
    %v1310 = vunpack.c.l.b16 %v187
    %v1311 = vunpack.c.h.b16 %v187
    %v1312 = vunpack.c.l.b16 %v188
    %v1313 = vunpack.c.l.b16 %v189
    %v1314 = vunpack.c.h.b16 %v189
    %v1315 = vunpack.c.l.b16 %v190
    %v1316 = vunpack.c.h.b16 %v190
    %v1317 = vunpack.c.l.b16 %v191
    %v1318 = vunpack.c.h.b16 %v191
    %v1319 = vunpack.c.l.b16 %v192
    %v1320 = vunpack.c.l.b16 %v193
    %v1321 = vunpack.c.h.b16 %v193
    %v1322 = vunpack.c.l.b16 %v194
    %v1323 = vunpack.c.h.b16 %v194
    %v1324 = vunpack.c.l.b16 %v195
    %v1325 = vunpack.c.h.b16 %v195
    %v1326 = vunpack.c.l.b16 %v196
    %v1327 = vunpack.c.l.b16 %v197
    %v1328 = vunpack.c.h.b16 %v197
    %v1329 = vunpack.c.l.b16 %v198
    %v1330 = vunpack.c.h.b16 %v198
    %v1331 = vunpack.c.l.b16 %v199
    %v1332 = vunpack.c.h.b16 %v199
    %v1333 = vunpack.c.l.b16 %v200
    %v1334 = vunpack.c.l.b16 %v201
    %v1335 = vunpack.c.h.b16 %v201
    %v1336 = vunpack.c.l.b16 %v202
    %v1337 = vunpack.c.h.b16 %v202
    %v1338 = vunpack.c.l.b16 %v203
    %v1339 = vunpack.c.h.b16 %v203
    %v1340 = vunpack.c.l.b16 %v204
    %v1341 = vunpack.c.l.b16 %v205
    %v1342 = vunpack.c.h.b16 %v205
    %v1343 = vunpack.c.l.b16 %v206
    %v1344 = vunpack.c.h.b16 %v206
    %v1345 = vunpack.c.l.b16 %v207
    %v1346 = vunpack.c.h.b16 %v207
    %v1347 = vunpack.c.l.b16 %v208
    %v1348 = vunpack.c.l.b16 %v209
    %v1349 = vunpack.c.h.b16 %v209
    %v1350 = vunpack.c.l.b16 %v210
    %v1351 = vunpack.c.h.b16 %v210
    %v1352 = vunpack.c.l.b16 %v211
    %v1353 = vunpack.c.h.b16 %v211
    %v1354 = vunpack.c.l.b16 %v212
    %v1355 = vunpack.c.l.b16 %v213
    %v1356 = vunpack.c.h.b16 %v213
    %v1357 = vunpack.c.l.b16 %v214
    %v1358 = vunpack.c.h.b16 %v214
    %v1359 = vunpack.c.l.b16 %v215
    %v1360 = vunpack.c.h.b16 %v215
    %v1361 = vunpack.c.l.b16 %v216
    %v1362 = vunpack.c.l.b16 %v217
    %v1363 = vunpack.c.h.b16 %v217
    %v1364 = vunpack.c.l.b16 %v218
    %v1365 = vunpack.c.h.b16 %v218
    %v1366 = vunpack.c.l.b16 %v219
    %v1367 = vunpack.c.h.b16 %v219
    %v1368 = vunpack.c.l.b16 %v220
    %v1369 = vunpack.c.l.b16 %v221
    %v1370 = vunpack.c.h.b16 %v221
    %v1371 = vunpack.c.l.b16 %v222
    %v1372 = vunpack.c.h.b16 %v222
    %v1373 = vunpack.c.l.b16 %v223
    %v1374 = vunpack.c.h.b16 %v223
    %v1375 = vunpack.c.l.b16 %v224
    %v1376 = vunpack.c.l.b16 %v225
    %v1377 = vunpack.c.h.b16 %v225
    %v1378 = vunpack.c.l.b16 %v226
    %v1379 = vunpack.c.h.b16 %v226
    %v1380 = vunpack.c.l.b16 %v227
    %v1381 = vunpack.c.h.b16 %v227
    %v1382 = vunpack.c.l.b16 %v228
    %v1383 = vunpack.c.l.b16 %v229
    %v1384 = vunpack.c.h.b16 %v229
    %v1385 = vunpack.c.l.b16 %v230
    %v1386 = vunpack.c.h.b16 %v230
    %v1387 = vunpack.c.l.b16 %v231
    %v1388 = vunpack.c.h.b16 %v231
    %v1389 = vunpack.c.l.b16 %v232
    %v1390 = vunpack.c.l.b16 %v233
    %v1391 = vunpack.c.h.b16 %v233
    %v1392 = vunpack.c.l.b16 %v234
    %v1393 = vunpack.c.h.b16 %v234
    %v1394 = vunpack.c.l.b16 %v235
    %v1395 = vunpack.c.h.b16 %v235
    %v1396 = vunpack.c.l.b16 %v236
    %v1397 = vunpack.c.l.b16 %v237
    %v1398 = vunpack.c.h.b16 %v237
    %v1399 = vunpack.c.l.b16 %v238
    %v1400 = vunpack.c.h.b16 %v238
    %v1401 = vunpack.c.l.b16 %v239
    %v1402 = vunpack.c.h.b16 %v239
    %v1403 = vunpack.c.l.b16 %v240
    %v1404 = vunpack.c.l.b16 %v241
    %v1405 = vunpack.c.h.b16 %v241
    %v1406 = vunpack.c.l.b16 %v242
    %v1407 = vunpack.c.h.b16 %v242
    %v1408 = vunpack.c.l.b16 %v243
    %v1409 = vunpack.c.h.b16 %v243
    %v1410 = vunpack.c.l.b16 %v244
    %v1411 = vunpack.c.l.b16 %v245
    %v1412 = vunpack.c.h.b16 %v245
    %v1413 = vunpack.c.l.b16 %v246
    %v1414 = vunpack.c.h.b16 %v246
    %v1415 = vunpack.c.l.b16 %v247
    %v1416 = vunpack.c.h.b16 %v247
    %v1417 = vunpack.c.l.b16 %v248
    %v1418 = vunpack.c.l.b16 %v249
    %v1419 = vunpack.c.h.b16 %v249
    %v1420 = vunpack.c.l.b16 %v250
    %v1421 = vunpack.c.h.b16 %v250
    %v1422 = vunpack.c.l.b16 %v251
    %v1423 = vunpack.c.h.b16 %v251
    %v1424 = vunpack.c.l.b16 %v252
    %v1425 = vunpack.c.l.b16 %v253
    %v1426 = vunpack.c.h.b16 %v253
    %v1427 = vunpack.c.l.b16 %v254
    %v1428 = vunpack.c.h.b16 %v254
    %v1429 = vunpack.c.l.b16 %v255
    %v1430 = vunpack.c.h.b16 %v255
    %v1431 = vunpack.c.l.b16 %v256
    %v1432 = vunpack.c.l.b16 %v257
    %v1433 = vunpack.c.h.b16 %v257
    %v1434 = vunpack.c.l.b16 %v258
    %v1435 = vunpack.c.h.b16 %v258
    %v1436 = vunpack.c.l.b16 %v259
    %v1437 = vunpack.c.h.b16 %v259
    %v1438 = vunpack.c.l.b16 %v260
    %v1439 = vunpack.c.l.b16 %v261
    %v1440 = vunpack.c.h.b16 %v261
    %v1441 = vunpack.c.l.b16 %v262
    %v1442 = vunpack.c.h.b16 %v262
    %v1443 = vunpack.c.l.b16 %v263
    %v1444 = vunpack.c.h.b16 %v263
    %v1445 = vunpack.c.l.b16 %v264
    %v1446 = vunpack.c.l.b16 %v265
    %v1447 = vunpack.c.h.b16 %v265
    %v1448 = vunpack.c.l.b16 %v266
    %v1449 = vunpack.c.h.b16 %v266
    %v1450 = vunpack.c.l.b16 %v267
    %v1451 = vunpack.c.h.b16 %v267
    %v1452 = vunpack.c.l.b16 %v268
    %v1453 = vunpack.c.l.b16 %v269
    %v1454 = vunpack.c.h.b16 %v269
    %v1455 = vunpack.c.l.b16 %v270
    %v1456 = vunpack.c.h.b16 %v270
    %v1457 = vunpack.c.l.b16 %v271
    %v1458 = vunpack.c.h.b16 %v271
    %v1459 = vunpack.c.l.b16 %v272
    %v1460 = vunpack.c.l.b16 %v273
    %v1461 = vunpack.c.h.b16 %v273
    %v1462 = vunpack.c.l.b16 %v274
    %v1463 = vunpack.c.h.b16 %v274
    %v1464 = vunpack.c.l.b16 %v275
    %v1465 = vunpack.c.h.b16 %v275
    %v1466 = vunpack.c.l.b16 %v276
    %v1467 = vunpack.c.l.b16 %v277
    %v1468 = vunpack.c.h.b16 %v277
    %v1469 = vunpack.c.l.b16 %v278
    %v1470 = vunpack.c.h.b16 %v278
    %v1471 = vunpack.c.l.b16 %v279
    %v1472 = vunpack.c.h.b16 %v279
    %v1473 = vunpack.c.l.b16 %v280
    %v1474 = vunpack.c.l.b16 %v281
    %v1475 = vunpack.c.h.b16 %v281
    %v1476 = vunpack.c.l.b16 %v282
    %v1477 = vunpack.c.h.b16 %v282
    %v1478 = vunpack.c.l.b16 %v283
    %v1479 = vunpack.c.h.b16 %v283
    %v1480 = vunpack.c.l.b16 %v284
    %v1481 = vunpack.c.l.b16 %v285
    %v1482 = vunpack.c.h.b16 %v285
    %v1483 = vunpack.c.l.b16 %v286
    %v1484 = vunpack.c.h.b16 %v286
    %v1485 = vunpack.c.l.b16 %v287
    %v1486 = vunpack.c.h.b16 %v287
    %v1487 = vunpack.c.l.b16 %v288
    %v1488 = vunpack.c.l.b16 %v289
    %v1489 = vunpack.c.h.b16 %v289
    %v1490 = vunpack.c.l.b16 %v290
    %v1491 = vunpack.c.h.b16 %v290
    %v1492 = vunpack.c.l.b16 %v291
    %v1493 = vunpack.c.h.b16 %v291
    %v1494 = vunpack.c.l.b16 %v292
    %v1495 = vunpack.c.l.b16 %v293
    %v1496 = vunpack.c.h.b16 %v293
    %v1497 = vunpack.c.l.b16 %v294
    %v1498 = vunpack.c.h.b16 %v294
    %v1499 = vunpack.c.l.b16 %v295
    %v1500 = vunpack.c.h.b16 %v295
    %v1501 = vunpack.c.l.b16 %v296
    %v1502 = vunpack.c.l.b16 %v297
    %v1503 = vunpack.c.h.b16 %v297
    %v1504 = vunpack.c.l.b16 %v298
    %v1505 = vunpack.c.h.b16 %v298
    %v1506 = vunpack.c.l.b16 %v299
    %v1507 = vunpack.c.h.b16 %v299
    %v1508 = vunpack.c.l.b16 %v300
    %v1509 = vunpack.c.l.b16 %v301
    %v1510 = vunpack.c.h.b16 %v301
    %v1511 = vunpack.c.l.b16 %v302
    %v1512 = vunpack.c.h.b16 %v302
    %v1513 = vunpack.c.l.b16 %v303
    %v1514 = vunpack.c.h.b16 %v303
    %v1515 = vunpack.c.l.b16 %v304
    %v1516 = vunpack.c.l.b16 %v305
    %v1517 = vunpack.c.h.b16 %v305
    %v1518 = vunpack.c.l.b16 %v306
    %v1519 = vunpack.c.h.b16 %v306
    %v1520 = vunpack.c.l.b16 %v307
    %v1521 = vunpack.c.h.b16 %v307
    %v1522 = vunpack.c.l.b16 %v308
    %v1523 = vunpack.c.l.b16 %v309
    %v1524 = vunpack.c.h.b16 %v309
    %v1525 = vunpack.c.l.b16 %v310
    %v1526 = vunpack.c.h.b16 %v310
    %v1527 = vunpack.c.l.b16 %v311
    %v1528 = vunpack.c.h.b16 %v311
    %v1529 = vunpack.c.l.b16 %v312
    %v1530 = vunpack.c.l.b16 %v313
    %v1531 = vunpack.c.h.b16 %v313
    %v1532 = vunpack.c.l.b16 %v314
    %v1533 = vunpack.c.h.b16 %v314
    %v1534 = vunpack.c.l.b16 %v315
    %v1535 = vunpack.c.h.b16 %v315
    %v1536 = vunpack.c.l.b16 %v316
    %v1537 = vunpack.c.l.b16 %v317
    %v1538 = vunpack.c.h.b16 %v317
    %v1539 = vunpack.c.l.b16 %v318
    %v1540 = vunpack.c.h.b16 %v318
    %v1541 = vunpack.c.l.b16 %v319
    %v1542 = vunpack.c.h.b16 %v319
    %v1543 = vunpack.c.l.b16 %v320
    %v1544 = vunpack.c.l.b16 %v321
    %v1545 = vunpack.c.h.b16 %v321
    %v1546 = vunpack.c.l.b16 %v322
    %v1547 = vunpack.c.h.b16 %v322
    %v1548 = vunpack.c.l.b16 %v323
    %v1549 = vunpack.c.h.b16 %v323
    %v1550 = vunpack.c.l.b16 %v324
    %v1551 = vunpack.c.l.b16 %v325
    %v1552 = vunpack.c.h.b16 %v325
    %v1553 = vunpack.c.l.b16 %v326
    %v1554 = vunpack.c.h.b16 %v326
    %v1555 = vunpack.c.l.b16 %v327
    %v1556 = vunpack.c.h.b16 %v327
    %v1557 = vunpack.c.l.b16 %v328
    %v1558 = vunpack.c.l.b16 %v329
    %v1559 = vunpack.c.h.b16 %v329
    %v1560 = vunpack.c.l.b16 %v330
    %v1561 = vunpack.c.h.b16 %v330
    %v1562 = vunpack.c.l.b16 %v331
    %v1563 = vunpack.c.h.b16 %v331
    %v1564 = vunpack.c.l.b16 %v332
    %v1565 = vunpack.c.l.b16 %v333
    %v1566 = vunpack.c.h.b16 %v333
    %v1567 = vunpack.c.l.b16 %v334
    %v1568 = vunpack.c.h.b16 %v334
    %v1569 = vunpack.c.l.b16 %v335
    %v1570 = vunpack.c.h.b16 %v335
    %v1571 = vunpack.c.l.b16 %v336
    %v1572 = vunpack.c.l.b16 %v337
    %v1573 = vunpack.c.h.b16 %v337
    %v1574 = vunpack.c.l.b16 %v338
    %v1575 = vunpack.c.h.b16 %v338
    %v1576 = vunpack.c.l.b16 %v339
    %v1577 = vunpack.c.h.b16 %v339
    %v1578 = vunpack.c.l.b16 %v340
    %v1579 = vunpack.c.l.b16 %v341
    %v1580 = vunpack.c.h.b16 %v341
    %v1581 = vunpack.c.l.b16 %v342
    %v1582 = vunpack.c.h.b16 %v342
    %v1583 = vunpack.c.l.b16 %v343
    %v1584 = vunpack.c.h.b16 %v343
    %v1585 = vunpack.c.l.b16 %v344
    %v1586 = vunpack.c.l.b16 %v345
    %v1587 = vunpack.c.h.b16 %v345
    %v1588 = vunpack.c.l.b16 %v346
    %v1589 = vunpack.c.h.b16 %v346
    %v1590 = vunpack.c.l.b16 %v347
    %v1591 = vunpack.c.h.b16 %v347
    %v1592 = vunpack.c.l.b16 %v348
    %v1593 = vunpack.c.l.b16 %v349
    %v1594 = vunpack.c.h.b16 %v349
    %v1595 = vunpack.c.l.b16 %v350
    %v1596 = vunpack.c.h.b16 %v350
    %v1597 = vunpack.c.l.b16 %v351
    %v1598 = vunpack.c.h.b16 %v351
    %v1599 = vunpack.c.l.b16 %v352
    %v1600 = vunpack.c.l.b16 %v353
    %v1601 = vunpack.c.h.b16 %v353
    %v1602 = vunpack.c.l.b16 %v354
    %v1603 = vunpack.c.h.b16 %v354
    %v1604 = vunpack.c.l.b16 %v355
    %v1605 = vunpack.c.h.b16 %v355
    %v1606 = vunpack.c.l.b16 %v356
    %v1607 = vunpack.c.l.b16 %v357
    %v1608 = vunpack.c.h.b16 %v357
    %v1609 = vunpack.c.l.b16 %v358
    %v1610 = vunpack.c.h.b16 %v358
    %v1611 = vunpack.c.l.b16 %v359
    %v1612 = vunpack.c.h.b16 %v359
    %v1613 = vunpack.c.l.b16 %v360
    %v1614 = vunpack.c.l.b16 %v361
    %v1615 = vunpack.c.h.b16 %v361
    %v1616 = vunpack.c.l.b16 %v362
    %v1617 = vunpack.c.h.b16 %v362
    %v1618 = vunpack.c.l.b16 %v363
    %v1619 = vunpack.c.h.b16 %v363
    %v1620 = vunpack.c.l.b16 %v364
    %v1621 = vunpack.c.l.b16 %v365
    %v1622 = vunpack.c.h.b16 %v365
    %v1623 = vunpack.c.l.b16 %v366
    %v1624 = vunpack.c.h.b16 %v366
    %v1625 = vunpack.c.l.b16 %v367
    %v1626 = vunpack.c.h.b16 %v367
    %v1627 = vunpack.c.l.b16 %v368
    %v1628 = vunpack.c.l.b16 %v369
    %v1629 = vunpack.c.h.b16 %v369
    %v1630 = vunpack.c.l.b16 %v370
    %v1631 = vunpack.c.h.b16 %v370
    %v1632 = vunpack.c.l.b16 %v371
    %v1633 = vunpack.c.h.b16 %v371
    %v1634 = vunpack.c.l.b16 %v372
    %v1635 = vunpack.c.l.b16 %v373
    %v1636 = vunpack.c.h.b16 %v373
    %v1637 = vunpack.c.l.b16 %v374
    %v1638 = vunpack.c.h.b16 %v374
    %v1639 = vunpack.c.l.b16 %v375
    %v1640 = vunpack.c.h.b16 %v375
    %v1641 = vunpack.c.l.b16 %v376
    %v1642 = vunpack.c.l.b16 %v377
    %v1643 = vunpack.c.h.b16 %v377
    %v1644 = vunpack.c.l.b16 %v378
    %v1645 = vunpack.c.h.b16 %v378
    %v1646 = vunpack.c.l.b16 %v379
    %v1647 = vunpack.c.h.b16 %v379
    %v1648 = vunpack.c.l.b16 %v380
    %v1649 = vunpack.c.l.b16 %v381
    %v1650 = vunpack.c.h.b16 %v381
    %v1651 = vunpack.c.l.b16 %v382
    %v1652 = vunpack.c.h.b16 %v382
    %v1653 = vunpack.c.l.b16 %v383
    %v1654 = vunpack.c.h.b16 %v383
    %v1655 = vunpack.c.l.b16 %v384
    %v1656 = vunpack.c.l.b16 %v385
    %v1657 = vunpack.c.h.b16 %v385
    %v1658 = vunpack.c.l.b16 %v386
    %v1659 = vunpack.c.h.b16 %v386
    %v1660 = vunpack.c.l.b16 %v387
    %v1661 = vunpack.c.h.b16 %v387
    %v1662 = vunpack.c.l.b16 %v388
    %v1663 = vunpack.c.l.b16 %v389
    %v1664 = vunpack.c.h.b16 %v389
    %v1665 = vunpack.c.l.b16 %v390
    %v1666 = vunpack.c.h.b16 %v390
    %v1667 = vunpack.c.l.b16 %v391
    %v1668 = vunpack.c.h.b16 %v391
    %v1669 = vunpack.c.l.b16 %v392
    %v1670 = vunpack.c.l.b16 %v393
    %v1671 = vunpack.c.h.b16 %v393
    %v1672 = vunpack.c.l.b16 %v394
    %v1673 = vunpack.c.h.b16 %v394
    %v1674 = vunpack.c.l.b16 %v395
    %v1675 = vunpack.c.h.b16 %v395
    %v1676 = vunpack.c.l.b16 %v396
    %v1677 = vunpack.c.l.b16 %v397
    %v1678 = vunpack.c.h.b16 %v397
    %v1679 = vunpack.c.l.b16 %v398
    %v1680 = vunpack.c.h.b16 %v398
    %v1681 = vunpack.c.l.b16 %v399
    %v1682 = vunpack.c.h.b16 %v399
    %v1683 = vunpack.c.l.b16 %v400
    %v1684 = vunpack.c.l.b16 %v401
    %v1685 = vunpack.c.h.b16 %v401
    %v1686 = vunpack.c.l.b16 %v402
    %v1687 = vunpack.c.h.b16 %v402
    %v1688 = vunpack.c.l.b16 %v403
    %v1689 = vunpack.c.h.b16 %v403
    %v1690 = vunpack.c.l.b16 %v404
    %v1691 = vunpack.c.l.b16 %v405
    %v1692 = vunpack.c.h.b16 %v405
    %v1693 = vunpack.c.l.b16 %v406
    %v1694 = vunpack.c.h.b16 %v406
    %v1695 = vunpack.c.l.b16 %v407
    %v1696 = vunpack.c.h.b16 %v407
    %v1697 = vunpack.c.l.b16 %v408
    %v1698 = vunpack.c.l.b16 %v409
    %v1699 = vunpack.c.h.b16 %v409
    %v1700 = vunpack.c.l.b16 %v410
    %v1701 = vunpack.c.h.b16 %v410
    %v1702 = vunpack.c.l.b16 %v411
    %v1703 = vunpack.c.h.b16 %v411
    %v1704 = vunpack.c.l.b16 %v412
    %v1705 = vunpack.c.l.b16 %v413
    %v1706 = vunpack.c.h.b16 %v413
    %v1707 = vunpack.c.l.b16 %v414
    %v1708 = vunpack.c.h.b16 %v414
    %v1709 = vunpack.c.l.b16 %v415
    %v1710 = vunpack.c.h.b16 %v415
    %v1711 = vunpack.c.l.b16 %v416
    %v1712 = vunpack.c.l.b16 %v417
    %v1713 = vunpack.c.h.b16 %v417
    %v1714 = vunpack.c.l.b16 %v418
    %v1715 = vunpack.c.h.b16 %v418
    %v1716 = vunpack.c.l.b16 %v419
    %v1717 = vunpack.c.h.b16 %v419
    %v1718 = vunpack.c.l.b16 %v420
    %v1719 = vunpack.c.l.b16 %v421
    %v1720 = vunpack.c.h.b16 %v421
    %v1721 = vunpack.c.l.b16 %v422
    %v1722 = vunpack.c.h.b16 %v422
    %v1723 = vunpack.c.l.b16 %v423
    %v1724 = vunpack.c.h.b16 %v423
    %v1725 = vunpack.c.l.b16 %v424
    %v1726 = vunpack.c.l.b16 %v425
    %v1727 = vunpack.c.h.b16 %v425
    %v1728 = vunpack.c.l.b16 %v426
    %v1729 = vunpack.c.h.b16 %v426
    %v1730 = vunpack.c.l.b16 %v427
    %v1731 = vunpack.c.h.b16 %v427
    %v1732 = vunpack.c.l.b16 %v428
    %v1733 = vunpack.c.l.b16 %v429
    %v1734 = vunpack.c.h.b16 %v429
    %v1735 = vunpack.c.l.b16 %v430
    %v1736 = vunpack.c.h.b16 %v430
    %v1737 = vunpack.c.l.b16 %v431
    %v1738 = vunpack.c.h.b16 %v431
    %v1739 = vunpack.c.l.b16 %v432
    %v1740 = vunpack.c.l.b16 %v433
    %v1741 = vunpack.c.h.b16 %v433
    %v1742 = vunpack.c.l.b16 %v434
    %v1743 = vunpack.c.h.b16 %v434
    %v1744 = vunpack.c.l.b16 %v435
    %v1745 = vunpack.c.h.b16 %v435
    %v1746 = vunpack.c.l.b16 %v436
    %v1747 = vunpack.c.l.b16 %v437
    %v1748 = vunpack.c.h.b16 %v437
    %v1749 = vunpack.c.l.b16 %v438
    %v1750 = vunpack.c.h.b16 %v438
    %v1751 = vunpack.c.l.b16 %v439
    %v1752 = vunpack.c.h.b16 %v439
    %v1753 = vunpack.c.l.b16 %v440
    %v1754 = vunpack.c.l.b16 %v441
    %v1755 = vunpack.c.h.b16 %v441
    %v1756 = vunpack.c.l.b16 %v442
    %v1757 = vunpack.c.h.b16 %v442
    %v1758 = vunpack.c.l.b16 %v443
    %v1759 = vunpack.c.h.b16 %v443
    %v1760 = vunpack.c.l.b16 %v444
    %v1761 = vunpack.c.l.b16 %v445
    %v1762 = vunpack.c.h.b16 %v445
    %v1763 = vunpack.c.l.b16 %v446
    %v1764 = vunpack.c.h.b16 %v446
    %v1765 = vunpack.c.l.b16 %v447
    %v1766 = vunpack.c.h.b16 %v447
    %v1767 = vunpack.c.l.b16 %v448
    %v1768 = vunpack.c.l.b16 %v449
    %v1769 = vunpack.c.h.b16 %v449
    %v1770 = vunpack.c.l.b16 %v450
    %v1771 = vunpack.c.h.b16 %v450
    %v1772 = vunpack.c.l.b16 %v451
    %v1773 = vunpack.c.h.b16 %v451
    %v1774 = vunpack.c.l.b16 %v452
    %v1775 = vunpack.c.l.b16 %v453
    %v1776 = vunpack.c.h.b16 %v453
    %v1777 = vunpack.c.l.b16 %v454
    %v1778 = vunpack.c.h.b16 %v454
    %v1779 = vunpack.c.l.b16 %v455
    %v1780 = vunpack.c.h.b16 %v455
    %v1781 = vunpack.c.l.b16 %v456
    %v1782 = vunpack.c.l.b16 %v457
    %v1783 = vunpack.c.h.b16 %v457
    %v1784 = vunpack.c.l.b16 %v458
    %v1785 = vunpack.c.h.b16 %v458
    %v1786 = vunpack.c.l.b16 %v459
    %v1787 = vunpack.c.h.b16 %v459
    %v1788 = vunpack.c.l.b16 %v460
    %v1789 = vunpack.c.l.b16 %v461
    %v1790 = vunpack.c.h.b16 %v461
    %v1791 = vunpack.c.l.b16 %v462
    %v1792 = vunpack.c.h.b16 %v462
    %v1793 = vunpack.c.l.b16 %v463
    %v1794 = vunpack.c.h.b16 %v463
    %v1795 = vunpack.c.l.b16 %v464
    %v1796 = vunpack.c.l.b16 %v465
    %v1797 = vunpack.c.h.b16 %v465
    %v1798 = vunpack.c.l.b16 %v466
    %v1799 = vunpack.c.h.b16 %v466
    %v1800 = vunpack.c.l.b16 %v467
    %v1801 = vunpack.c.h.b16 %v467
    %v1802 = vunpack.c.l.b16 %v468
    %v1803 = vunpack.c.l.b16 %v469
    %v1804 = vunpack.c.h.b16 %v469
    %v1805 = vunpack.c.l.b16 %v470
    %v1806 = vunpack.c.h.b16 %v470
    %v1807 = vunpack.c.l.b16 %v471
    %v1808 = vunpack.c.h.b16 %v471
    %v1809 = vunpack.c.l.b16 %v472
    %v1810 = vunpack.c.l.b16 %v473
    %v1811 = vunpack.c.h.b16 %v473
    %v1812 = vunpack.c.l.b16 %v474
    %v1813 = vunpack.c.h.b16 %v474
    %v1814 = vunpack.c.l.b16 %v475
    %v1815 = vunpack.c.h.b16 %v475
    %v1816 = vunpack.c.l.b16 %v476
    %v1817 = vunpack.c.l.b16 %v477
    %v1818 = vunpack.c.h.b16 %v477
    %v1819 = vunpack.c.l.b16 %v478
    %v1820 = vunpack.c.h.b16 %v478
    %v1821 = vunpack.c.l.b16 %v479
    %v1822 = vunpack.c.h.b16 %v479
    %v1823 = vunpack.c.l.b16 %v480
    %v1824 = vunpack.c.l.b16 %v481
    %v1825 = vunpack.c.h.b16 %v481
    %v1826 = vunpack.c.l.b16 %v482
    %v1827 = vunpack.c.h.b16 %v482
    %v1828 = vunpack.c.l.b16 %v483
    %v1829 = vunpack.c.h.b16 %v483
    %v1830 = vunpack.c.l.b16 %v484
    %v1831 = vunpack.c.l.b16 %v485
    %v1832 = vunpack.c.h.b16 %v485
    %v1833 = vunpack.c.l.b16 %v486
    %v1834 = vunpack.c.h.b16 %v486
    %v1835 = vunpack.c.l.b16 %v487
    %v1836 = vunpack.c.h.b16 %v487
    %v1837 = vunpack.c.l.b16 %v488
    %v1838 = vunpack.c.l.b16 %v489
    %v1839 = vunpack.c.h.b16 %v489
    %v1840 = vunpack.c.l.b16 %v490
    %v1841 = vunpack.c.h.b16 %v490
    %v1842 = vunpack.c.l.b16 %v491
    %v1843 = vunpack.c.h.b16 %v491
    %v1844 = vunpack.c.l.b16 %v492
    %v1845 = vunpack.c.l.b16 %v493
    %v1846 = vunpack.c.h.b16 %v493
    %v1847 = vunpack.c.l.b16 %v494
    %v1848 = vunpack.c.h.b16 %v494
    %v1849 = vunpack.c.l.b16 %v495
    %v1850 = vunpack.c.h.b16 %v495
    %v1851 = vunpack.c.l.b16 %v496
    %v1852 = vunpack.c.l.b16 %v497
    %v1853 = vunpack.c.h.b16 %v497
    %v1854 = vunpack.c.l.b16 %v498
    %v1855 = vunpack.c.h.b16 %v498
    %v1856 = vunpack.c.l.b16 %v499
    %v1857 = vunpack.c.h.b16 %v499
    %v1858 = vunpack.c.l.b16 %v500
    %v1859 = vunpack.c.l.b16 %v501
    %v1860 = vunpack.c.h.b16 %v501
    %v1861 = vunpack.c.l.b16 %v502
    %v1862 = vunpack.c.h.b16 %v502
    %v1863 = vunpack.c.l.b16 %v503
    %v1864 = vunpack.c.h.b16 %v503
    %v1865 = vunpack.c.l.b16 %v504
    %v1866 = vunpack.c.l.b16 %v505
    %v1867 = vunpack.c.h.b16 %v505
    %v1868 = vunpack.c.l.b16 %v506
    %v1869 = vunpack.c.h.b16 %v506
    %v1870 = vunpack.c.l.b16 %v507
    %v1871 = vunpack.c.h.b16 %v507
    %v1872 = vunpack.c.l.b16 %v508
    %v1873 = vunpack.c.l.b16 %v509
    %v1874 = vunpack.c.h.b16 %v509
    %v1875 = vunpack.c.l.b16 %v510
    %v1876 = vunpack.c.h.b16 %v510
    %v1877 = vunpack.c.l.b16 %v511
    %v1878 = vunpack.c.h.b16 %v511
    %v1879 = vunpack.c.l.b16 %v512
    %v1880 = vunpack.c.l.b16 %v513
    %v1881 = vunpack.c.h.b16 %v513
    %v1882 = vunpack.c.l.b16 %v514
    %v1883 = vunpack.c.h.b16 %v514
    %v1884 = vunpack.c.l.b16 %v515
    %v1885 = vunpack.c.h.b16 %v515
    %v1886 = vunpack.c.l.b16 %v516
    %v1887 = vunpack.c.l.b16 %v517
    %v1888 = vunpack.c.h.b16 %v517
    %v1889 = vunpack.c.l.b16 %v518
    %v1890 = vunpack.c.h.b16 %v518
    %v1891 = vunpack.c.l.b16 %v519
    %v1892 = vunpack.c.h.b16 %v519
    %v1893 = vunpack.c.l.b16 %v520
    %v1894 = vunpack.c.l.b16 %v521
    %v1895 = vunpack.c.h.b16 %v521
    %v1896 = vunpack.c.l.b16 %v522
    %v1897 = vunpack.c.h.b16 %v522
    %v1898 = vunpack.c.l.b16 %v523
    %v1899 = vunpack.c.h.b16 %v523
    %v1900 = vunpack.c.l.b16 %v524
    %v1901 = vunpack.c.l.b16 %v525
    %v1902 = vunpack.c.h.b16 %v525
    %v1903 = vunpack.c.l.b16 %v526
    %v1904 = vunpack.c.h.b16 %v526
    %v1905 = vunpack.c.l.b16 %v527
    %v1906 = vunpack.c.h.b16 %v527
    %v1907 = vunpack.c.l.b16 %v528
    %v1908 = vunpack.c.l.b16 %v529
    %v1909 = vunpack.c.h.b16 %v529
    %v1910 = vunpack.c.l.b16 %v530
    %v1911 = vunpack.c.h.b16 %v530
    %v1912 = vunpack.c.l.b16 %v531
    %v1913 = vunpack.c.h.b16 %v531
    %v1914 = vunpack.c.l.b16 %v532
    %v1915 = vunpack.c.l.b16 %v533
    %v1916 = vunpack.c.h.b16 %v533
    %v1917 = vunpack.c.l.b16 %v534
    %v1918 = vunpack.c.h.b16 %v534
    %v1919 = vunpack.c.l.b16 %v535
    %v1920 = vunpack.c.h.b16 %v535
    %v1921 = vunpack.c.l.b16 %v536
    %v1922 = vunpack.c.l.b16 %v537
    %v1923 = vunpack.c.h.b16 %v537
    %v1924 = vunpack.c.l.b16 %v538
    %v1925 = vunpack.c.h.b16 %v538
    %v1926 = vunpack.c.l.b16 %v539
    %v1927 = vunpack.c.h.b16 %v539
    %v1928 = vunpack.c.l.b16 %v540
    %v1929 = vunpack.c.l.b16 %v541
    %v1930 = vunpack.c.h.b16 %v541
    %v1931 = vunpack.c.l.b16 %v542
    %v1932 = vunpack.c.h.b16 %v542
    %v1933 = vunpack.c.l.b16 %v543
    %v1934 = vunpack.c.h.b16 %v543
    %v1935 = vunpack.c.l.b16 %v544
    %v1936 = vunpack.c.l.b16 %v545
    %v1937 = vunpack.c.h.b16 %v545
    %v1938 = vunpack.c.l.b16 %v546
    %v1939 = vunpack.c.h.b16 %v546
    %v1940 = vunpack.c.l.b16 %v547
    %v1941 = vunpack.c.h.b16 %v547
    %v1942 = vunpack.c.l.b16 %v548
    %v1943 = vunpack.c.l.b16 %v549
    %v1944 = vunpack.c.h.b16 %v549
    %v1945 = vunpack.c.l.b16 %v550
    %v1946 = vunpack.c.h.b16 %v550
    %v1947 = vunpack.c.l.b16 %v551
    %v1948 = vunpack.c.h.b16 %v551
    %v1949 = vunpack.c.l.b16 %v552
    %v1950 = vunpack.c.l.b16 %v553
    %v1951 = vunpack.c.h.b16 %v553
    %v1952 = vunpack.c.l.b16 %v554
    %v1953 = vunpack.c.h.b16 %v554
    %v1954 = vunpack.c.l.b16 %v555
    %v1955 = vunpack.c.h.b16 %v555
    %v1956 = vunpack.c.l.b16 %v556
    %v1957 = vunpack.c.l.b16 %v557
    %v1958 = vunpack.c.h.b16 %v557
    %v1959 = vunpack.c.l.b16 %v558
    %v1960 = vunpack.c.h.b16 %v558
    %v1961 = vunpack.c.l.b16 %v559
    %v1962 = vunpack.c.h.b16 %v559
    %v1963 = vunpack.c.l.b16 %v560
    %v1964 = vunpack.c.l.b16 %v561
    %v1965 = vunpack.c.h.b16 %v561
    %v1966 = vunpack.c.l.b16 %v562
    %v1967 = vunpack.c.h.b16 %v562
    %v1968 = vunpack.c.l.b16 %v563
    %v1969 = vunpack.c.h.b16 %v563
    %v1970 = vunpack.c.l.b16 %v564
    %v1971 = vunpack.c.l.b16 %v565
    %v1972 = vunpack.c.h.b16 %v565
    %v1973 = vunpack.c.l.b16 %v566
    %v1974 = vunpack.c.h.b16 %v566
    %v1975 = vunpack.c.l.b16 %v567
    %v1976 = vunpack.c.h.b16 %v567
    %v1977 = vunpack.c.l.b16 %v568
    %v1978 = vunpack.c.l.b16 %v569
    %v1979 = vunpack.c.h.b16 %v569
    %v1980 = vunpack.c.l.b16 %v570
    %v1981 = vunpack.c.h.b16 %v570
    %v1982 = vunpack.c.l.b16 %v571
    %v1983 = vunpack.c.h.b16 %v571
    %v1984 = vunpack.c.l.b16 %v572
    %v1985 = vunpack.c.l.b16 %v573
    %v1986 = vunpack.c.h.b16 %v573
    %v1987 = vunpack.c.l.b16 %v574
    %v1988 = vunpack.c.h.b16 %v574
    %v1989 = vunpack.c.l.b16 %v575
    %v1990 = vunpack.c.h.b16 %v575
    %v1991 = vunpack.c.l.b16 %v576
    %v1992 = vunpack.c.l.b16 %v577
    %v1993 = vunpack.c.h.b16 %v577
    %v1994 = vunpack.c.l.b16 %v578
    %v1995 = vunpack.c.h.b16 %v578
    %v1996 = vunpack.c.l.b16 %v579
    %v1997 = vunpack.c.h.b16 %v579
    %v1998 = vunpack.c.l.b16 %v580
    %v1999 = vunpack.c.l.b16 %v581
    %v2000 = vunpack.c.h.b16 %v581
    %v2001 = vunpack.c.l.b16 %v582
    %v2002 = vunpack.c.h.b16 %v582
    %v2003 = vunpack.c.l.b16 %v583
    %v2004 = vunpack.c.h.b16 %v583
    %v2005 = vunpack.c.l.b16 %v584
    %v2006 = vunpack.c.l.b16 %v585
    %v2007 = vunpack.c.h.b16 %v585
    %v2008 = vunpack.c.l.b16 %v586
    %v2009 = vunpack.c.h.b16 %v586
    %v2010 = vunpack.c.l.b16 %v587
    %v2011 = vunpack.c.h.b16 %v587
    %v2012 = vunpack.c.l.b16 %v588
    %v2013 = vunpack.c.l.b16 %v589
    %v2014 = vunpack.c.h.b16 %v589
    %v2015 = vunpack.c.l.b16 %v590
    %v2016 = vunpack.c.h.b16 %v590
    %v2017 = vunpack.c.l.b16 %v591
    %v2018 = vunpack.c.h.b16 %v591
    %v2019 = vunpack.c.l.b16 %v592
    %v2020 = vunpack.c.l.b16 %v593
    %v2021 = vunpack.c.h.b16 %v593
    %v2022 = vunpack.c.l.b16 %v594
    %v2023 = vunpack.c.h.b16 %v594
    %v2024 = vunpack.c.l.b16 %v595
    %v2025 = vunpack.c.h.b16 %v595
    %v2026 = vunpack.c.l.b16 %v596
    %v2027 = vunpack.c.l.b16 %v597
    %v2028 = vunpack.c.h.b16 %v597
    %v2029 = vunpack.c.l.b16 %v598
    %v2030 = vunpack.c.h.b16 %v598
    %v2031 = vunpack.c.l.b16 %v599
    %v2032 = vunpack.c.h.b16 %v599
    %v2033 = vunpack.c.l.b16 %v600
    %v2034 = vunpack.c.l.b16 %v601
    %v2035 = vunpack.c.h.b16 %v601
    %v2036 = vunpack.c.l.b16 %v602
    %v2037 = vunpack.c.h.b16 %v602
    %v2038 = vunpack.c.l.b16 %v603
    %v2039 = vunpack.c.h.b16 %v603
    %v2040 = vunpack.c.l.b16 %v604
    %v2041 = vunpack.c.l.b16 %v605
    %v2042 = vunpack.c.h.b16 %v605
    %v2043 = vunpack.c.l.b16 %v606
    %v2044 = vunpack.c.h.b16 %v606
    %v2045 = vunpack.c.l.b16 %v607
    %v2046 = vunpack.c.h.b16 %v607
    %v2047 = vunpack.c.l.b16 %v608
    %v2048 = vunpack.c.l.b16 %v609
    %v2049 = vunpack.c.h.b16 %v609
    %v2050 = vunpack.c.l.b16 %v610
    %v2051 = vunpack.c.h.b16 %v610
    %v2052 = vunpack.c.l.b16 %v611
    %v2053 = vunpack.c.h.b16 %v611
    %v2054 = vunpack.c.l.b16 %v612
    %v2055 = vunpack.c.l.b16 %v613
    %v2056 = vunpack.c.h.b16 %v613
    %v2057 = vunpack.c.l.b16 %v614
    %v2058 = vunpack.c.h.b16 %v614
    %v2059 = vunpack.c.l.b16 %v615
    %v2060 = vunpack.c.h.b16 %v615
    %v2061 = vunpack.c.l.b16 %v616
    %v2062 = vunpack.c.l.b16 %v617
    %v2063 = vunpack.c.h.b16 %v617
    %v2064 = vunpack.c.l.b16 %v618
    %v2065 = vunpack.c.h.b16 %v618
    %v2066 = vunpack.c.l.b16 %v619
    %v2067 = vunpack.c.h.b16 %v619
    %v2068 = vunpack.c.l.b16 %v620
    %v2069 = vpack.c.b16 %v1180, %v1173
    %v2070 = vpack.c.b16 %v1181, %v1174
    %v2071 = vpack.c.b16 %v1182, %v1175
    %v2072 = vpack.c.b16 %v1183, %v1176
    %v2073 = vpack.c.b16 %v1184, %v1177
    %v2074 = vpack.c.b16 %v1185, %v1178
    %v2075 = vpack.c.b16 %v1186, %v1179
    %v2076 = vpack.c.b16 %v1194, %v1187
    %v2077 = vpack.c.b16 %v1195, %v1188
    %v2078 = vpack.c.b16 %v1196, %v1189
    %v2079 = vpack.c.b16 %v1197, %v1190
    %v2080 = vpack.c.b16 %v1198, %v1191
    %v2081 = vpack.c.b16 %v1199, %v1192
    %v2082 = vpack.c.b16 %v1200, %v1193
    %v2083 = vpack.c.b16 %v1208, %v1201
    %v2084 = vpack.c.b16 %v1209, %v1202
    %v2085 = vpack.c.b16 %v1210, %v1203
    %v2086 = vpack.c.b16 %v1211, %v1204
    %v2087 = vpack.c.b16 %v1212, %v1205
    %v2088 = vpack.c.b16 %v1213, %v1206
    %v2089 = vpack.c.b16 %v1214, %v1207
    %v2090 = vpack.c.b16 %v1222, %v1215
    %v2091 = vpack.c.b16 %v1223, %v1216
    %v2092 = vpack.c.b16 %v1224, %v1217
    %v2093 = vpack.c.b16 %v1225, %v1218
    %v2094 = vpack.c.b16 %v1226, %v1219
    %v2095 = vpack.c.b16 %v1227, %v1220
    %v2096 = vpack.c.b16 %v1228, %v1221
    %v2097 = vpack.c.b16 %v1236, %v1229
    %v2098 = vpack.c.b16 %v1237, %v1230
    %v2099 = vpack.c.b16 %v1238, %v1231
    %v2100 = vpack.c.b16 %v1239, %v1232
    %v2101 = vpack.c.b16 %v1240, %v1233
    %v2102 = vpack.c.b16 %v1241, %v1234
    %v2103 = vpack.c.b16 %v1242, %v1235
    %v2104 = vpack.c.b16 %v1250, %v1243
    %v2105 = vpack.c.b16 %v1251, %v1244
    %v2106 = vpack.c.b16 %v1252, %v1245
    %v2107 = vpack.c.b16 %v1253, %v1246
    %v2108 = vpack.c.b16 %v1254, %v1247
    %v2109 = vpack.c.b16 %v1255, %v1248
    %v2110 = vpack.c.b16 %v1256, %v1249
    %v2111 = vpack.c.b16 %v1264, %v1257
    %v2112 = vpack.c.b16 %v1265, %v1258
    %v2113 = vpack.c.b16 %v1266, %v1259
    %v2114 = vpack.c.b16 %v1267, %v1260
    %v2115 = vpack.c.b16 %v1268, %v1261
    %v2116 = vpack.c.b16 %v1269, %v1262
    %v2117 = vpack.c.b16 %v1270, %v1263
    %v2118 = vpack.c.b16 %v1278, %v1271
    %v2119 = vpack.c.b16 %v1279, %v1272
    %v2120 = vpack.c.b16 %v1280, %v1273
    %v2121 = vpack.c.b16 %v1281, %v1274
    %v2122 = vpack.c.b16 %v1282, %v1275
    %v2123 = vpack.c.b16 %v1283, %v1276
    %v2124 = vpack.c.b16 %v1284, %v1277
    %v2125 = vpack.c.b16 %v1292, %v1285
    %v2126 = vpack.c.b16 %v1293, %v1286
    %v2127 = vpack.c.b16 %v1294, %v1287
    %v2128 = vpack.c.b16 %v1295, %v1288
    %v2129 = vpack.c.b16 %v1296, %v1289
    %v2130 = vpack.c.b16 %v1297, %v1290
    %v2131 = vpack.c.b16 %v1298, %v1291
    %v2132 = vpack.c.b16 %v1306, %v1299
    %v2133 = vpack.c.b16 %v1307, %v1300
    %v2134 = vpack.c.b16 %v1308, %v1301
    %v2135 = vpack.c.b16 %v1309, %v1302
    %v2136 = vpack.c.b16 %v1310, %v1303
    %v2137 = vpack.c.b16 %v1311, %v1304
    %v2138 = vpack.c.b16 %v1312, %v1305
    %v2139 = vpack.c.b16 %v1320, %v1313
    %v2140 = vpack.c.b16 %v1321, %v1314
    %v2141 = vpack.c.b16 %v1322, %v1315
    %v2142 = vpack.c.b16 %v1323, %v1316
    %v2143 = vpack.c.b16 %v1324, %v1317
    %v2144 = vpack.c.b16 %v1325, %v1318
    %v2145 = vpack.c.b16 %v1326, %v1319
    %v2146 = vpack.c.b16 %v1334, %v1327
    %v2147 = vpack.c.b16 %v1335, %v1328
    %v2148 = vpack.c.b16 %v1336, %v1329
    %v2149 = vpack.c.b16 %v1337, %v1330
    %v2150 = vpack.c.b16 %v1338, %v1331
    %v2151 = vpack.c.b16 %v1339, %v1332
    %v2152 = vpack.c.b16 %v1340, %v1333
    %v2153 = vpack.c.b16 %v1348, %v1341
    %v2154 = vpack.c.b16 %v1349, %v1342
    %v2155 = vpack.c.b16 %v1350, %v1343
    %v2156 = vpack.c.b16 %v1351, %v1344
    %v2157 = vpack.c.b16 %v1352, %v1345
    %v2158 = vpack.c.b16 %v1353, %v1346
    %v2159 = vpack.c.b16 %v1354, %v1347
    %v2160 = vpack.c.b16 %v1362, %v1355
    %v2161 = vpack.c.b16 %v1363, %v1356
    %v2162 = vpack.c.b16 %v1364, %v1357
    %v2163 = vpack.c.b16 %v1365, %v1358
    %v2164 = vpack.c.b16 %v1366, %v1359
    %v2165 = vpack.c.b16 %v1367, %v1360
    %v2166 = vpack.c.b16 %v1368, %v1361
    %v2167 = vpack.c.b16 %v1376, %v1369
    %v2168 = vpack.c.b16 %v1377, %v1370
    %v2169 = vpack.c.b16 %v1378, %v1371
    %v2170 = vpack.c.b16 %v1379, %v1372
    %v2171 = vpack.c.b16 %v1380, %v1373
    %v2172 = vpack.c.b16 %v1381, %v1374
    %v2173 = vpack.c.b16 %v1382, %v1375
    %v2174 = vpack.c.b16 %v1390, %v1383
    %v2175 = vpack.c.b16 %v1391, %v1384
    %v2176 = vpack.c.b16 %v1392, %v1385
    %v2177 = vpack.c.b16 %v1393, %v1386
    %v2178 = vpack.c.b16 %v1394, %v1387
    %v2179 = vpack.c.b16 %v1395, %v1388
    %v2180 = vpack.c.b16 %v1396, %v1389
    %v2181 = vpack.c.b16 %v1404, %v1397
    %v2182 = vpack.c.b16 %v1405, %v1398
    %v2183 = vpack.c.b16 %v1406, %v1399
    %v2184 = vpack.c.b16 %v1407, %v1400
    %v2185 = vpack.c.b16 %v1408, %v1401
    %v2186 = vpack.c.b16 %v1409, %v1402
    %v2187 = vpack.c.b16 %v1410, %v1403
    %v2188 = vpack.c.b16 %v1418, %v1411
    %v2189 = vpack.c.b16 %v1419, %v1412
    %v2190 = vpack.c.b16 %v1420, %v1413
    %v2191 = vpack.c.b16 %v1421, %v1414
    %v2192 = vpack.c.b16 %v1422, %v1415
    %v2193 = vpack.c.b16 %v1423, %v1416
    %v2194 = vpack.c.b16 %v1424, %v1417
    %v2195 = vpack.c.b16 %v1432, %v1425
    %v2196 = vpack.c.b16 %v1433, %v1426
    %v2197 = vpack.c.b16 %v1434, %v1427
    %v2198 = vpack.c.b16 %v1435, %v1428
    %v2199 = vpack.c.b16 %v1436, %v1429
    %v2200 = vpack.c.b16 %v1437, %v1430
    %v2201 = vpack.c.b16 %v1438, %v1431
    %v2202 = vpack.c.b16 %v1446, %v1439
    %v2203 = vpack.c.b16 %v1447, %v1440
    %v2204 = vpack.c.b16 %v1448, %v1441
    %v2205 = vpack.c.b16 %v1449, %v1442
    %v2206 = vpack.c.b16 %v1450, %v1443
    %v2207 = vpack.c.b16 %v1451, %v1444
    %v2208 = vpack.c.b16 %v1452, %v1445
    %v2209 = vpack.c.b16 %v1460, %v1453
    %v2210 = vpack.c.b16 %v1461, %v1454
    %v2211 = vpack.c.b16 %v1462, %v1455
    %v2212 = vpack.c.b16 %v1463, %v1456
    %v2213 = vpack.c.b16 %v1464, %v1457
    %v2214 = vpack.c.b16 %v1465, %v1458
    %v2215 = vpack.c.b16 %v1466, %v1459
    %v2216 = vpack.c.b16 %v1474, %v1467
    %v2217 = vpack.c.b16 %v1475, %v1468
    %v2218 = vpack.c.b16 %v1476, %v1469
    %v2219 = vpack.c.b16 %v1477, %v1470
    %v2220 = vpack.c.b16 %v1478, %v1471
    %v2221 = vpack.c.b16 %v1479, %v1472
    %v2222 = vpack.c.b16 %v1480, %v1473
    %v2223 = vpack.c.b16 %v1488, %v1481
    %v2224 = vpack.c.b16 %v1489, %v1482
    %v2225 = vpack.c.b16 %v1490, %v1483
    %v2226 = vpack.c.b16 %v1491, %v1484
    %v2227 = vpack.c.b16 %v1492, %v1485
    %v2228 = vpack.c.b16 %v1493, %v1486
    %v2229 = vpack.c.b16 %v1494, %v1487
    %v2230 = vpack.c.b16 %v1502, %v1495
    %v2231 = vpack.c.b16 %v1503, %v1496
    %v2232 = vpack.c.b16 %v1504, %v1497
    %v2233 = vpack.c.b16 %v1505, %v1498
    %v2234 = vpack.c.b16 %v1506, %v1499
    %v2235 = vpack.c.b16 %v1507, %v1500
    %v2236 = vpack.c.b16 %v1508, %v1501
    %v2237 = vpack.c.b16 %v1516, %v1509
    %v2238 = vpack.c.b16 %v1517, %v1510
    %v2239 = vpack.c.b16 %v1518, %v1511
    %v2240 = vpack.c.b16 %v1519, %v1512
    %v2241 = vpack.c.b16 %v1520, %v1513
    %v2242 = vpack.c.b16 %v1521, %v1514
    %v2243 = vpack.c.b16 %v1522, %v1515
    %v2244 = vpack.c.b16 %v1530, %v1523
    %v2245 = vpack.c.b16 %v1531, %v1524
    %v2246 = vpack.c.b16 %v1532, %v1525
    %v2247 = vpack.c.b16 %v1533, %v1526
    %v2248 = vpack.c.b16 %v1534, %v1527
    %v2249 = vpack.c.b16 %v1535, %v1528
    %v2250 = vpack.c.b16 %v1536, %v1529
    %v2251 = vpack.c.b16 %v1544, %v1537
    %v2252 = vpack.c.b16 %v1545, %v1538
    %v2253 = vpack.c.b16 %v1546, %v1539
    %v2254 = vpack.c.b16 %v1547, %v1540
    %v2255 = vpack.c.b16 %v1548, %v1541
    %v2256 = vpack.c.b16 %v1549, %v1542
    %v2257 = vpack.c.b16 %v1550, %v1543
    %v2258 = vpack.c.b16 %v1558, %v1551
    %v2259 = vpack.c.b16 %v1559, %v1552
    %v2260 = vpack.c.b16 %v1560, %v1553
    %v2261 = vpack.c.b16 %v1561, %v1554
    %v2262 = vpack.c.b16 %v1562, %v1555
    %v2263 = vpack.c.b16 %v1563, %v1556
    %v2264 = vpack.c.b16 %v1564, %v1557
    %v2265 = vpack.c.b16 %v1572, %v1565
    %v2266 = vpack.c.b16 %v1573, %v1566
    %v2267 = vpack.c.b16 %v1574, %v1567
    %v2268 = vpack.c.b16 %v1575, %v1568
    %v2269 = vpack.c.b16 %v1576, %v1569
    %v2270 = vpack.c.b16 %v1577, %v1570
    %v2271 = vpack.c.b16 %v1578, %v1571
    %v2272 = vpack.c.b16 %v1586, %v1579
    %v2273 = vpack.c.b16 %v1587, %v1580
    %v2274 = vpack.c.b16 %v1588, %v1581
    %v2275 = vpack.c.b16 %v1589, %v1582
    %v2276 = vpack.c.b16 %v1590, %v1583
    %v2277 = vpack.c.b16 %v1591, %v1584
    %v2278 = vpack.c.b16 %v1592, %v1585
    %v2279 = vpack.c.b16 %v1600, %v1593
    %v2280 = vpack.c.b16 %v1601, %v1594
    %v2281 = vpack.c.b16 %v1602, %v1595
    %v2282 = vpack.c.b16 %v1603, %v1596
    %v2283 = vpack.c.b16 %v1604, %v1597
    %v2284 = vpack.c.b16 %v1605, %v1598
    %v2285 = vpack.c.b16 %v1606, %v1599
    %v2286 = vpack.c.b16 %v1614, %v1607
    %v2287 = vpack.c.b16 %v1615, %v1608
    %v2288 = vpack.c.b16 %v1616, %v1609
    %v2289 = vpack.c.b16 %v1617, %v1610
    %v2290 = vpack.c.b16 %v1618, %v1611
    %v2291 = vpack.c.b16 %v1619, %v1612
    %v2292 = vpack.c.b16 %v1620, %v1613
    %v2293 = vpack.c.b16 %v1628, %v1621
    %v2294 = vpack.c.b16 %v1629, %v1622
    %v2295 = vpack.c.b16 %v1630, %v1623
    %v2296 = vpack.c.b16 %v1631, %v1624
    %v2297 = vpack.c.b16 %v1632, %v1625
    %v2298 = vpack.c.b16 %v1633, %v1626
    %v2299 = vpack.c.b16 %v1634, %v1627
    %v2300 = vpack.c.b16 %v1642, %v1635
    %v2301 = vpack.c.b16 %v1643, %v1636
    %v2302 = vpack.c.b16 %v1644, %v1637
    %v2303 = vpack.c.b16 %v1645, %v1638
    %v2304 = vpack.c.b16 %v1646, %v1639
    %v2305 = vpack.c.b16 %v1647, %v1640
    %v2306 = vpack.c.b16 %v1648, %v1641
    %v2307 = vpack.c.b16 %v1656, %v1649
    %v2308 = vpack.c.b16 %v1657, %v1650
    %v2309 = vpack.c.b16 %v1658, %v1651
    %v2310 = vpack.c.b16 %v1659, %v1652
    %v2311 = vpack.c.b16 %v1660, %v1653
    %v2312 = vpack.c.b16 %v1661, %v1654
    %v2313 = vpack.c.b16 %v1662, %v1655
    %v2314 = vpack.c.b16 %v1670, %v1663
    %v2315 = vpack.c.b16 %v1671, %v1664
    %v2316 = vpack.c.b16 %v1672, %v1665
    %v2317 = vpack.c.b16 %v1673, %v1666
    %v2318 = vpack.c.b16 %v1674, %v1667
    %v2319 = vpack.c.b16 %v1675, %v1668
    %v2320 = vpack.c.b16 %v1676, %v1669
    %v2321 = vpack.c.b16 %v1684, %v1677
    %v2322 = vpack.c.b16 %v1685, %v1678
    %v2323 = vpack.c.b16 %v1686, %v1679
    %v2324 = vpack.c.b16 %v1687, %v1680
    %v2325 = vpack.c.b16 %v1688, %v1681
    %v2326 = vpack.c.b16 %v1689, %v1682
    %v2327 = vpack.c.b16 %v1690, %v1683
    %v2328 = vpack.c.b16 %v1698, %v1691
    %v2329 = vpack.c.b16 %v1699, %v1692
    %v2330 = vpack.c.b16 %v1700, %v1693
    %v2331 = vpack.c.b16 %v1701, %v1694
    %v2332 = vpack.c.b16 %v1702, %v1695
    %v2333 = vpack.c.b16 %v1703, %v1696
    %v2334 = vpack.c.b16 %v1704, %v1697
    %v2335 = vpack.c.b16 %v1712, %v1705
    %v2336 = vpack.c.b16 %v1713, %v1706
    %v2337 = vpack.c.b16 %v1714, %v1707
    %v2338 = vpack.c.b16 %v1715, %v1708
    %v2339 = vpack.c.b16 %v1716, %v1709
    %v2340 = vpack.c.b16 %v1717, %v1710
    %v2341 = vpack.c.b16 %v1718, %v1711
    %v2342 = vpack.c.b16 %v1726, %v1719
    %v2343 = vpack.c.b16 %v1727, %v1720
    %v2344 = vpack.c.b16 %v1728, %v1721
    %v2345 = vpack.c.b16 %v1729, %v1722
    %v2346 = vpack.c.b16 %v1730, %v1723
    %v2347 = vpack.c.b16 %v1731, %v1724
    %v2348 = vpack.c.b16 %v1732, %v1725
    %v2349 = vpack.c.b16 %v1740, %v1733
    %v2350 = vpack.c.b16 %v1741, %v1734
    %v2351 = vpack.c.b16 %v1742, %v1735
    %v2352 = vpack.c.b16 %v1743, %v1736
    %v2353 = vpack.c.b16 %v1744, %v1737
    %v2354 = vpack.c.b16 %v1745, %v1738
    %v2355 = vpack.c.b16 %v1746, %v1739
    %v2356 = vpack.c.b16 %v1754, %v1747
    %v2357 = vpack.c.b16 %v1755, %v1748
    %v2358 = vpack.c.b16 %v1756, %v1749
    %v2359 = vpack.c.b16 %v1757, %v1750
    %v2360 = vpack.c.b16 %v1758, %v1751
    %v2361 = vpack.c.b16 %v1759, %v1752
    %v2362 = vpack.c.b16 %v1760, %v1753
    %v2363 = vpack.c.b16 %v1768, %v1761
    %v2364 = vpack.c.b16 %v1769, %v1762
    %v2365 = vpack.c.b16 %v1770, %v1763
    %v2366 = vpack.c.b16 %v1771, %v1764
    %v2367 = vpack.c.b16 %v1772, %v1765
    %v2368 = vpack.c.b16 %v1773, %v1766
    %v2369 = vpack.c.b16 %v1774, %v1767
    %v2370 = vpack.c.b16 %v1782, %v1775
    %v2371 = vpack.c.b16 %v1783, %v1776
    %v2372 = vpack.c.b16 %v1784, %v1777
    %v2373 = vpack.c.b16 %v1785, %v1778
    %v2374 = vpack.c.b16 %v1786, %v1779
    %v2375 = vpack.c.b16 %v1787, %v1780
    %v2376 = vpack.c.b16 %v1788, %v1781
    %v2377 = vpack.c.b16 %v1796, %v1789
    %v2378 = vpack.c.b16 %v1797, %v1790
    %v2379 = vpack.c.b16 %v1798, %v1791
    %v2380 = vpack.c.b16 %v1799, %v1792
    %v2381 = vpack.c.b16 %v1800, %v1793
    %v2382 = vpack.c.b16 %v1801, %v1794
    %v2383 = vpack.c.b16 %v1802, %v1795
    %v2384 = vpack.c.b16 %v1810, %v1803
    %v2385 = vpack.c.b16 %v1811, %v1804
    %v2386 = vpack.c.b16 %v1812, %v1805
    %v2387 = vpack.c.b16 %v1813, %v1806
    %v2388 = vpack.c.b16 %v1814, %v1807
    %v2389 = vpack.c.b16 %v1815, %v1808
    %v2390 = vpack.c.b16 %v1816, %v1809
    %v2391 = vpack.c.b16 %v1824, %v1817
    %v2392 = vpack.c.b16 %v1825, %v1818
    %v2393 = vpack.c.b16 %v1826, %v1819
    %v2394 = vpack.c.b16 %v1827, %v1820
    %v2395 = vpack.c.b16 %v1828, %v1821
    %v2396 = vpack.c.b16 %v1829, %v1822
    %v2397 = vpack.c.b16 %v1830, %v1823
    %v2398 = vpack.c.b16 %v1838, %v1831
    %v2399 = vpack.c.b16 %v1839, %v1832
    %v2400 = vpack.c.b16 %v1840, %v1833
    %v2401 = vpack.c.b16 %v1841, %v1834
    %v2402 = vpack.c.b16 %v1842, %v1835
    %v2403 = vpack.c.b16 %v1843, %v1836
    %v2404 = vpack.c.b16 %v1844, %v1837
    %v2405 = vpack.c.b16 %v1852, %v1845
    %v2406 = vpack.c.b16 %v1853, %v1846
    %v2407 = vpack.c.b16 %v1854, %v1847
    %v2408 = vpack.c.b16 %v1855, %v1848
    %v2409 = vpack.c.b16 %v1856, %v1849
    %v2410 = vpack.c.b16 %v1857, %v1850
    %v2411 = vpack.c.b16 %v1858, %v1851
    %v2412 = vpack.c.b16 %v1866, %v1859
    %v2413 = vpack.c.b16 %v1867, %v1860
    %v2414 = vpack.c.b16 %v1868, %v1861
    %v2415 = vpack.c.b16 %v1869, %v1862
    %v2416 = vpack.c.b16 %v1870, %v1863
    %v2417 = vpack.c.b16 %v1871, %v1864
    %v2418 = vpack.c.b16 %v1872, %v1865
    %v2419 = vpack.c.b16 %v1880, %v1873
    %v2420 = vpack.c.b16 %v1881, %v1874
    %v2421 = vpack.c.b16 %v1882, %v1875
    %v2422 = vpack.c.b16 %v1883, %v1876
    %v2423 = vpack.c.b16 %v1884, %v1877
    %v2424 = vpack.c.b16 %v1885, %v1878
    %v2425 = vpack.c.b16 %v1886, %v1879
    %v2426 = vpack.c.b16 %v1894, %v1887
    %v2427 = vpack.c.b16 %v1895, %v1888
    %v2428 = vpack.c.b16 %v1896, %v1889
    %v2429 = vpack.c.b16 %v1897, %v1890
    %v2430 = vpack.c.b16 %v1898, %v1891
    %v2431 = vpack.c.b16 %v1899, %v1892
    %v2432 = vpack.c.b16 %v1900, %v1893
    %v2433 = vpack.c.b16 %v1908, %v1901
    %v2434 = vpack.c.b16 %v1909, %v1902
    %v2435 = vpack.c.b16 %v1910, %v1903
    %v2436 = vpack.c.b16 %v1911, %v1904
    %v2437 = vpack.c.b16 %v1912, %v1905
    %v2438 = vpack.c.b16 %v1913, %v1906
    %v2439 = vpack.c.b16 %v1914, %v1907
    %v2440 = vpack.c.b16 %v1922, %v1915
    %v2441 = vpack.c.b16 %v1923, %v1916
    %v2442 = vpack.c.b16 %v1924, %v1917
    %v2443 = vpack.c.b16 %v1925, %v1918
    %v2444 = vpack.c.b16 %v1926, %v1919
    %v2445 = vpack.c.b16 %v1927, %v1920
    %v2446 = vpack.c.b16 %v1928, %v1921
    %v2447 = vpack.c.b16 %v1936, %v1929
    %v2448 = vpack.c.b16 %v1937, %v1930
    %v2449 = vpack.c.b16 %v1938, %v1931
    %v2450 = vpack.c.b16 %v1939, %v1932
    %v2451 = vpack.c.b16 %v1940, %v1933
    %v2452 = vpack.c.b16 %v1941, %v1934
    %v2453 = vpack.c.b16 %v1942, %v1935
    %v2454 = vpack.c.b16 %v1950, %v1943
    %v2455 = vpack.c.b16 %v1951, %v1944
    %v2456 = vpack.c.b16 %v1952, %v1945
    %v2457 = vpack.c.b16 %v1953, %v1946
    %v2458 = vpack.c.b16 %v1954, %v1947
    %v2459 = vpack.c.b16 %v1955, %v1948
    %v2460 = vpack.c.b16 %v1956, %v1949
    %v2461 = vpack.c.b16 %v1964, %v1957
    %v2462 = vpack.c.b16 %v1965, %v1958
    %v2463 = vpack.c.b16 %v1966, %v1959
    %v2464 = vpack.c.b16 %v1967, %v1960
    %v2465 = vpack.c.b16 %v1968, %v1961
    %v2466 = vpack.c.b16 %v1969, %v1962
    %v2467 = vpack.c.b16 %v1970, %v1963
    %v2468 = vpack.c.b16 %v1978, %v1971
    %v2469 = vpack.c.b16 %v1979, %v1972
    %v2470 = vpack.c.b16 %v1980, %v1973
    %v2471 = vpack.c.b16 %v1981, %v1974
    %v2472 = vpack.c.b16 %v1982, %v1975
    %v2473 = vpack.c.b16 %v1983, %v1976
    %v2474 = vpack.c.b16 %v1984, %v1977
    %v2475 = vpack.c.b16 %v1992, %v1985
    %v2476 = vpack.c.b16 %v1993, %v1986
    %v2477 = vpack.c.b16 %v1994, %v1987
    %v2478 = vpack.c.b16 %v1995, %v1988
    %v2479 = vpack.c.b16 %v1996, %v1989
    %v2480 = vpack.c.b16 %v1997, %v1990
    %v2481 = vpack.c.b16 %v1998, %v1991
    %v2482 = vpack.c.b16 %v2006, %v1999
    %v2483 = vpack.c.b16 %v2007, %v2000
    %v2484 = vpack.c.b16 %v2008, %v2001
    %v2485 = vpack.c.b16 %v2009, %v2002
    %v2486 = vpack.c.b16 %v2010, %v2003
    %v2487 = vpack.c.b16 %v2011, %v2004
    %v2488 = vpack.c.b16 %v2012, %v2005
    %v2489 = vpack.c.b16 %v2020, %v2013
    %v2490 = vpack.c.b16 %v2021, %v2014
    %v2491 = vpack.c.b16 %v2022, %v2015
    %v2492 = vpack.c.b16 %v2023, %v2016
    %v2493 = vpack.c.b16 %v2024, %v2017
    %v2494 = vpack.c.b16 %v2025, %v2018
    %v2495 = vpack.c.b16 %v2026, %v2019
    %v2496 = vpack.c.b16 %v2034, %v2027
    %v2497 = vpack.c.b16 %v2035, %v2028
    %v2498 = vpack.c.b16 %v2036, %v2029
    %v2499 = vpack.c.b16 %v2037, %v2030
    %v2500 = vpack.c.b16 %v2038, %v2031
    %v2501 = vpack.c.b16 %v2039, %v2032
    %v2502 = vpack.c.b16 %v2040, %v2033
    %v2503 = vpack.c.b16 %v2048, %v2041
    %v2504 = vpack.c.b16 %v2049, %v2042
    %v2505 = vpack.c.b16 %v2050, %v2043
    %v2506 = vpack.c.b16 %v2051, %v2044
    %v2507 = vpack.c.b16 %v2052, %v2045
    %v2508 = vpack.c.b16 %v2053, %v2046
    %v2509 = vpack.c.b16 %v2054, %v2047
    %v2510 = vpack.c.b16 %v2062, %v2055
    %v2511 = vpack.c.b16 %v2063, %v2056
    %v2512 = vpack.c.b16 %v2064, %v2057
    %v2513 = vpack.c.b16 %v2065, %v2058
    %v2514 = vpack.c.b16 %v2066, %v2059
    %v2515 = vpack.c.b16 %v2067, %v2060
    %v2516 = vpack.c.b16 %v2068, %v2061
    %2965 = vmatprep.subr.bf16.mxu0 %v2070
    %2966 = vmatpush1.bf16.msra.mxu0 %v2069
    %2967 = vmatprep.subr.bf16.mxu0 %v2077
    %2968 = vmatpush1.bf16.msra.mxu0 %v2076
    %2969 = vmatprep.subr.bf16.mxu0 %v2084
    %2970 = vmatpush1.bf16.msra.mxu0 %v2083
    %2971 = vmatprep.subr.bf16.mxu0 %v2091
    %2972 = vmatpush1.bf16.msra.mxu0 %v2090
    %2973 = vmatprep.subr.bf16.mxu0 %v2098
    %2974 = vmatpush1.bf16.msra.mxu0 %v2097
    %2975 = vmatprep.subr.bf16.mxu0 %v2105
    %2976 = vmatpush1.bf16.msra.mxu0 %v2104
    %2977 = vmatprep.subr.bf16.mxu0 %v2112
    %2978 = vmatpush1.bf16.msra.mxu0 %v2111
    %2979 = vmatprep.subr.bf16.mxu0 %v2119
    %2980 = vmatpush1.bf16.msra.mxu0 %v2118
    %2981 = vmatprep.subr.bf16.mxu0 %v2126
    %2982 = vmatpush1.bf16.msra.mxu0 %v2125
    %2983 = vmatprep.subr.bf16.mxu0 %v2133
    %2984 = vmatpush1.bf16.msra.mxu0 %v2132
    %2985 = vmatprep.subr.bf16.mxu0 %v2140
    %2986 = vmatpush1.bf16.msra.mxu0 %v2139
    %2987 = vmatprep.subr.bf16.mxu0 %v2147
    %2988 = vmatpush1.bf16.msra.mxu0 %v2146
    %2989 = vmatprep.subr.bf16.mxu0 %v2154
    %2990 = vmatpush1.bf16.msra.mxu0 %v2153
    %2991 = vmatprep.subr.bf16.mxu0 %v2161
    %2992 = vmatpush1.bf16.msra.mxu0 %v2160
    %2993 = vmatprep.subr.bf16.mxu0 %v2168
    %2994 = vmatpush1.bf16.msra.mxu0 %v2167
    %2995 = vmatprep.subr.bf16.mxu0 %v2175
    %2996 = vmatpush1.bf16.msra.mxu0 %v2174
    %2997 = vmatprep.mubr.bf16.mxu0 %v646
    %2998 = vmatmul.mubr.bf16.gmra.mrb[0].mxu0 %v645
    %v2999 = vpop.f32.mrb[0].mxu0
    %v3000 = vadd.f32 0.0, %v2999
    %v3001 = vpop.f32.mrb[0].mxu0
    %v3002 = vadd.f32 0.0, %v3001
    %v3003 = vpop.f32.mrb[0].mxu0
    %v3004 = vadd.f32 0.0, %v3003
    %v3005 = vpop.f32.mrb[0].mxu0
    %v3006 = vadd.f32 0.0, %v3005
    %3007 = vdwg.mxu0
    %3008 = vmatprep.subr.bf16.mxu0 %v2182
    %3009 = vmatpush1.bf16.msra.mxu0 %v2181
    %3010 = vmatprep.subr.bf16.mxu0 %v2189
    %3011 = vmatpush1.bf16.msra.mxu0 %v2188
    %3012 = vmatprep.subr.bf16.mxu0 %v2196
    %3013 = vmatpush1.bf16.msra.mxu0 %v2195
    %3014 = vmatprep.subr.bf16.mxu0 %v2203
    %3015 = vmatpush1.bf16.msra.mxu0 %v2202
    %3016 = vmatprep.subr.bf16.mxu0 %v2210
    %3017 = vmatpush1.bf16.msra.mxu0 %v2209
    %3018 = vmatprep.subr.bf16.mxu0 %v2217
    %3019 = vmatpush1.bf16.msra.mxu0 %v2216
    %3020 = vmatprep.subr.bf16.mxu0 %v2224
    %3021 = vmatpush1.bf16.msra.mxu0 %v2223
    %3022 = vmatprep.subr.bf16.mxu0 %v2231
    %3023 = vmatpush1.bf16.msra.mxu0 %v2230
    %3024 = vmatprep.subr.bf16.mxu0 %v2238
    %3025 = vmatpush1.bf16.msra.mxu0 %v2237
    %3026 = vmatprep.subr.bf16.mxu0 %v2245
    %3027 = vmatpush1.bf16.msra.mxu0 %v2244
    %3028 = vmatprep.subr.bf16.mxu0 %v2252
    %3029 = vmatpush1.bf16.msra.mxu0 %v2251
    %3030 = vmatprep.subr.bf16.mxu0 %v2259
    %3031 = vmatpush1.bf16.msra.mxu0 %v2258
    %3032 = vmatprep.subr.bf16.mxu0 %v2266
    %3033 = vmatpush1.bf16.msra.mxu0 %v2265
    %3034 = vmatprep.subr.bf16.mxu0 %v2273
    %3035 = vmatpush1.bf16.msra.mxu0 %v2272
    %3036 = vmatprep.subr.bf16.mxu0 %v2280
    %3037 = vmatpush1.bf16.msra.mxu0 %v2279
    %3038 = vmatprep.subr.bf16.mxu0 %v2287
    %3039 = vmatpush1.bf16.msra.mxu0 %v2286
    %3040 = vmatprep.mubr.bf16.mxu0 %v648
    %3041 = vmatmul.mubr.bf16.gmra.mrb[0].mxu0 %v647
    %v3042 = vpop.f32.mrb[0].mxu0
    %v3043 = vadd.f32 %v3000, %v3042
    %v3044 = vpop.f32.mrb[0].mxu0
    %v3045 = vadd.f32 %v3002, %v3044
    %v3046 = vpop.f32.mrb[0].mxu0
    %v3047 = vadd.f32 %v3004, %v3046
    %v3048 = vpop.f32.mrb[0].mxu0
    %v3049 = vadd.f32 %v3006, %v3048
    %3050 = vdwg.mxu0
    %3051 = vmatprep.subr.bf16.mxu0 %v2294
    %3052 = vmatpush1.bf16.msra.mxu0 %v2293
    %3053 = vmatprep.subr.bf16.mxu0 %v2301
    %3054 = vmatpush1.bf16.msra.mxu0 %v2300
    %3055 = vmatprep.subr.bf16.mxu0 %v2308
    %3056 = vmatpush1.bf16.msra.mxu0 %v2307
    %3057 = vmatprep.subr.bf16.mxu0 %v2315
    %3058 = vmatpush1.bf16.msra.mxu0 %v2314
    %3059 = vmatprep.subr.bf16.mxu0 %v2322
    %3060 = vmatpush1.bf16.msra.mxu0 %v2321
    %3061 = vmatprep.subr.bf16.mxu0 %v2329
    %3062 = vmatpush1.bf16.msra.mxu0 %v2328
    %3063 = vmatprep.subr.bf16.mxu0 %v2336
    %3064 = vmatpush1.bf16.msra.mxu0 %v2335
    %3065 = vmatprep.subr.bf16.mxu0 %v2343
    %3066 = vmatpush1.bf16.msra.mxu0 %v2342
    %3067 = vmatprep.subr.bf16.mxu0 %v2350
    %3068 = vmatpush1.bf16.msra.mxu0 %v2349
    %3069 = vmatprep.subr.bf16.mxu0 %v2357
    %3070 = vmatpush1.bf16.msra.mxu0 %v2356
    %3071 = vmatprep.subr.bf16.mxu0 %v2364
    %3072 = vmatpush1.bf16.msra.mxu0 %v2363
    %3073 = vmatprep.subr.bf16.mxu0 %v2371
    %3074 = vmatpush1.bf16.msra.mxu0 %v2370
    %3075 = vmatprep.subr.bf16.mxu0 %v2378
    %3076 = vmatpush1.bf16.msra.mxu0 %v2377
    %3077 = vmatprep.subr.bf16.mxu0 %v2385
    %3078 = vmatpush1.bf16.msra.mxu0 %v2384
    %3079 = vmatprep.subr.bf16.mxu0 %v2392
    %3080 = vmatpush1.bf16.msra.mxu0 %v2391
    %3081 = vmatprep.subr.bf16.mxu0 %v2399
    %3082 = vmatpush1.bf16.msra.mxu0 %v2398
    %3083 = vmatprep.mubr.bf16.mxu0 %v650
    %3084 = vmatmul.mubr.bf16.gmra.mrb[0].mxu0 %v649
    %v3085 = vpop.f32.mrb[0].mxu0
    %v3086 = vadd.f32 %v3043, %v3085
    %v3087 = vpop.f32.mrb[0].mxu0
    %v3088 = vadd.f32 %v3045, %v3087
    %v3089 = vpop.f32.mrb[0].mxu0
    %v3090 = vadd.f32 %v3047, %v3089
    %v3091 = vpop.f32.mrb[0].mxu0
    %v3092 = vadd.f32 %v3049, %v3091
    %3093 = vdwg.mxu0
    %3094 = vmatprep.subr.bf16.mxu0 %v2406
    %3095 = vmatpush1.bf16.msra.mxu0 %v2405
    %3096 = vmatprep.subr.bf16.mxu0 %v2413
    %3097 = vmatpush1.bf16.msra.mxu0 %v2412
    %3098 = vmatprep.subr.bf16.mxu0 %v2420
    %3099 = vmatpush1.bf16.msra.mxu0 %v2419
    %3100 = vmatprep.subr.bf16.mxu0 %v2427
    %3101 = vmatpush1.bf16.msra.mxu0 %v2426
    %3102 = vmatprep.subr.bf16.mxu0 %v2434
    %3103 = vmatpush1.bf16.msra.mxu0 %v2433
    %3104 = vmatprep.subr.bf16.mxu0 %v2441
    %3105 = vmatpush1.bf16.msra.mxu0 %v2440
    %3106 = vmatprep.subr.bf16.mxu0 %v2448
    %3107 = vmatpush1.bf16.msra.mxu0 %v2447
    %3108 = vmatprep.subr.bf16.mxu0 %v2455
    %3109 = vmatpush1.bf16.msra.mxu0 %v2454
    %3110 = vmatprep.subr.bf16.mxu0 %v2462
    %3111 = vmatpush1.bf16.msra.mxu0 %v2461
    %3112 = vmatprep.subr.bf16.mxu0 %v2469
    %3113 = vmatpush1.bf16.msra.mxu0 %v2468
    %3114 = vmatprep.subr.bf16.mxu0 %v2476
    %3115 = vmatpush1.bf16.msra.mxu0 %v2475
    %3116 = vmatprep.subr.bf16.mxu0 %v2483
    %3117 = vmatpush1.bf16.msra.mxu0 %v2482
    %3118 = vmatprep.subr.bf16.mxu0 %v2490
    %3119 = vmatpush1.bf16.msra.mxu0 %v2489
    %3120 = vmatprep.subr.bf16.mxu0 %v2497
    %3121 = vmatpush1.bf16.msra.mxu0 %v2496
    %3122 = vmatprep.subr.bf16.mxu0 %v2504
    %3123 = vmatpush1.bf16.msra.mxu0 %v2503
    %3124 = vmatprep.subr.bf16.mxu0 %v2511
    %3125 = vmatpush1.bf16.msra.mxu0 %v2510
    %3126 = vmatprep.mubr.bf16.mxu0 %v652
    %3127 = vmatmul.mubr.bf16.gmra.mrb[0].mxu0 %v651
    %v3128 = vpop.f32.mrb[0].mxu0
    %v3129 = vadd.f32 %v3086, %v3128
    %v3130 = vpop.f32.mrb[0].mxu0
    %v3131 = vadd.f32 %v3088, %v3130
    %v3132 = vpop.f32.mrb[0].mxu0
    %v3133 = vadd.f32 %v3090, %v3132
    %v3134 = vpop.f32.mrb[0].mxu0
    %v3135 = vadd.f32 %v3092, %v3134
    %3136 = vdwg.mxu0
    %3137 = vmatprep.subr.bf16.mxu0 %v2072
    %3138 = vmatpush1.bf16.msra.mxu0 %v2071
    %3139 = vmatprep.subr.bf16.mxu0 %v2079
    %3140 = vmatpush1.bf16.msra.mxu0 %v2078
    %3141 = vmatprep.subr.bf16.mxu0 %v2086
    %3142 = vmatpush1.bf16.msra.mxu0 %v2085
    %3143 = vmatprep.subr.bf16.mxu0 %v2093
    %3144 = vmatpush1.bf16.msra.mxu0 %v2092
    %3145 = vmatprep.subr.bf16.mxu0 %v2100
    %3146 = vmatpush1.bf16.msra.mxu0 %v2099
    %3147 = vmatprep.subr.bf16.mxu0 %v2107
    %3148 = vmatpush1.bf16.msra.mxu0 %v2106
    %3149 = vmatprep.subr.bf16.mxu0 %v2114
    %3150 = vmatpush1.bf16.msra.mxu0 %v2113
    %3151 = vmatprep.subr.bf16.mxu0 %v2121
    %3152 = vmatpush1.bf16.msra.mxu0 %v2120
    %3153 = vmatprep.subr.bf16.mxu0 %v2128
    %3154 = vmatpush1.bf16.msra.mxu0 %v2127
    %3155 = vmatprep.subr.bf16.mxu0 %v2135
    %3156 = vmatpush1.bf16.msra.mxu0 %v2134
    %3157 = vmatprep.subr.bf16.mxu0 %v2142
    %3158 = vmatpush1.bf16.msra.mxu0 %v2141
    %3159 = vmatprep.subr.bf16.mxu0 %v2149
    %3160 = vmatpush1.bf16.msra.mxu0 %v2148
    %3161 = vmatprep.subr.bf16.mxu0 %v2156
    %3162 = vmatpush1.bf16.msra.mxu0 %v2155
    %3163 = vmatprep.subr.bf16.mxu0 %v2163
    %3164 = vmatpush1.bf16.msra.mxu0 %v2162
    %3165 = vmatprep.subr.bf16.mxu0 %v2170
    %3166 = vmatpush1.bf16.msra.mxu0 %v2169
    %3167 = vmatprep.subr.bf16.mxu0 %v2177
    %3168 = vmatpush1.bf16.msra.mxu0 %v2176
    %3169 = vmatprep.mubr.bf16.mxu0 %v646
    %3170 = vmatmul.mubr.bf16.gmra.mrb[0].mxu0 %v645
    %v3171 = vpop.f32.mrb[0].mxu0
    %v3172 = vadd.f32 0.0, %v3171
    %v3173 = vpop.f32.mrb[0].mxu0
    %v3174 = vadd.f32 0.0, %v3173
    %v3175 = vpop.f32.mrb[0].mxu0
    %v3176 = vadd.f32 0.0, %v3175
    %v3177 = vpop.f32.mrb[0].mxu0
    %v3178 = vadd.f32 0.0, %v3177
    %3179 = vdwg.mxu0
    %3180 = vmatprep.subr.bf16.mxu0 %v2184
    %3181 = vmatpush1.bf16.msra.mxu0 %v2183
    %3182 = vmatprep.subr.bf16.mxu0 %v2191
    %3183 = vmatpush1.bf16.msra.mxu0 %v2190
    %3184 = vmatprep.subr.bf16.mxu0 %v2198
    %3185 = vmatpush1.bf16.msra.mxu0 %v2197
    %3186 = vmatprep.subr.bf16.mxu0 %v2205
    %3187 = vmatpush1.bf16.msra.mxu0 %v2204
    %3188 = vmatprep.subr.bf16.mxu0 %v2212
    %3189 = vmatpush1.bf16.msra.mxu0 %v2211
    %3190 = vmatprep.subr.bf16.mxu0 %v2219
    %3191 = vmatpush1.bf16.msra.mxu0 %v2218
    %3192 = vmatprep.subr.bf16.mxu0 %v2226
    %3193 = vmatpush1.bf16.msra.mxu0 %v2225
    %3194 = vmatprep.subr.bf16.mxu0 %v2233
    %3195 = vmatpush1.bf16.msra.mxu0 %v2232
    %3196 = vmatprep.subr.bf16.mxu0 %v2240
    %3197 = vmatpush1.bf16.msra.mxu0 %v2239
    %3198 = vmatprep.subr.bf16.mxu0 %v2247
    %3199 = vmatpush1.bf16.msra.mxu0 %v2246
    %3200 = vmatprep.subr.bf16.mxu0 %v2254
    %3201 = vmatpush1.bf16.msra.mxu0 %v2253
    %3202 = vmatprep.subr.bf16.mxu0 %v2261
    %3203 = vmatpush1.bf16.msra.mxu0 %v2260
    %3204 = vmatprep.subr.bf16.mxu0 %v2268
    %3205 = vmatpush1.bf16.msra.mxu0 %v2267
    %3206 = vmatprep.subr.bf16.mxu0 %v2275
    %3207 = vmatpush1.bf16.msra.mxu0 %v2274
    %3208 = vmatprep.subr.bf16.mxu0 %v2282
    %3209 = vmatpush1.bf16.msra.mxu0 %v2281
    %3210 = vmatprep.subr.bf16.mxu0 %v2289
    %3211 = vmatpush1.bf16.msra.mxu0 %v2288
    %3212 = vmatprep.mubr.bf16.mxu0 %v648
    %3213 = vmatmul.mubr.bf16.gmra.mrb[0].mxu0 %v647
    %v3214 = vpop.f32.mrb[0].mxu0
    %v3215 = vadd.f32 %v3172, %v3214
    %v3216 = vpop.f32.mrb[0].mxu0
    %v3217 = vadd.f32 %v3174, %v3216
    %v3218 = vpop.f32.mrb[0].mxu0
    %v3219 = vadd.f32 %v3176, %v3218
    %v3220 = vpop.f32.mrb[0].mxu0
    %v3221 = vadd.f32 %v3178, %v3220
    %3222 = vdwg.mxu0
    %3223 = vmatprep.subr.bf16.mxu0 %v2296
    %3224 = vmatpush1.bf16.msra.mxu0 %v2295
    %3225 = vmatprep.subr.bf16.mxu0 %v2303
    %3226 = vmatpush1.bf16.msra.mxu0 %v2302
    %3227 = vmatprep.subr.bf16.mxu0 %v2310
    %3228 = vmatpush1.bf16.msra.mxu0 %v2309
    %3229 = vmatprep.subr.bf16.mxu0 %v2317
    %3230 = vmatpush1.bf16.msra.mxu0 %v2316
    %3231 = vmatprep.subr.bf16.mxu0 %v2324
    %3232 = vmatpush1.bf16.msra.mxu0 %v2323
    %3233 = vmatprep.subr.bf16.mxu0 %v2331
    %3234 = vmatpush1.bf16.msra.mxu0 %v2330
    %3235 = vmatprep.subr.bf16.mxu0 %v2338
    %3236 = vmatpush1.bf16.msra.mxu0 %v2337
    %3237 = vmatprep.subr.bf16.mxu0 %v2345
    %3238 = vmatpush1.bf16.msra.mxu0 %v2344
    %3239 = vmatprep.subr.bf16.mxu0 %v2352
    %3240 = vmatpush1.bf16.msra.mxu0 %v2351
    %3241 = vmatprep.subr.bf16.mxu0 %v2359
    %3242 = vmatpush1.bf16.msra.mxu0 %v2358
    %3243 = vmatprep.subr.bf16.mxu0 %v2366
    %3244 = vmatpush1.bf16.msra.mxu0 %v2365
    %3245 = vmatprep.subr.bf16.mxu0 %v2373
    %3246 = vmatpush1.bf16.msra.mxu0 %v2372
    %3247 = vmatprep.subr.bf16.mxu0 %v2380
    %3248 = vmatpush1.bf16.msra.mxu0 %v2379
    %3249 = vmatprep.subr.bf16.mxu0 %v2387
    %3250 = vmatpush1.bf16.msra.mxu0 %v2386
    %3251 = vmatprep.subr.bf16.mxu0 %v2394
    %3252 = vmatpush1.bf16.msra.mxu0 %v2393
    %3253 = vmatprep.subr.bf16.mxu0 %v2401
    %3254 = vmatpush1.bf16.msra.mxu0 %v2400
    %3255 = vmatprep.mubr.bf16.mxu0 %v650
    %3256 = vmatmul.mubr.bf16.gmra.mrb[0].mxu0 %v649
    %v3257 = vpop.f32.mrb[0].mxu0
    %v3258 = vadd.f32 %v3215, %v3257
    %v3259 = vpop.f32.mrb[0].mxu0
    %v3260 = vadd.f32 %v3217, %v3259
    %v3261 = vpop.f32.mrb[0].mxu0
    %v3262 = vadd.f32 %v3219, %v3261
    %v3263 = vpop.f32.mrb[0].mxu0
    %v3264 = vadd.f32 %v3221, %v3263
    %3265 = vdwg.mxu0
    %3266 = vmatprep.subr.bf16.mxu0 %v2408
    %3267 = vmatpush1.bf16.msra.mxu0 %v2407
    %3268 = vmatprep.subr.bf16.mxu0 %v2415
    %3269 = vmatpush1.bf16.msra.mxu0 %v2414
    %3270 = vmatprep.subr.bf16.mxu0 %v2422
    %3271 = vmatpush1.bf16.msra.mxu0 %v2421
    %3272 = vmatprep.subr.bf16.mxu0 %v2429
    %3273 = vmatpush1.bf16.msra.mxu0 %v2428
    %3274 = vmatprep.subr.bf16.mxu0 %v2436
    %3275 = vmatpush1.bf16.msra.mxu0 %v2435
    %3276 = vmatprep.subr.bf16.mxu0 %v2443
    %3277 = vmatpush1.bf16.msra.mxu0 %v2442
    %3278 = vmatprep.subr.bf16.mxu0 %v2450
    %3279 = vmatpush1.bf16.msra.mxu0 %v2449
    %3280 = vmatprep.subr.bf16.mxu0 %v2457
    %3281 = vmatpush1.bf16.msra.mxu0 %v2456
    %3282 = vmatprep.subr.bf16.mxu0 %v2464
    %3283 = vmatpush1.bf16.msra.mxu0 %v2463
    %3284 = vmatprep.subr.bf16.mxu0 %v2471
    %3285 = vmatpush1.bf16.msra.mxu0 %v2470
    %3286 = vmatprep.subr.bf16.mxu0 %v2478
    %3287 = vmatpush1.bf16.msra.mxu0 %v2477
    %3288 = vmatprep.subr.bf16.mxu0 %v2485
    %3289 = vmatpush1.bf16.msra.mxu0 %v2484
    %3290 = vmatprep.subr.bf16.mxu0 %v2492
    %3291 = vmatpush1.bf16.msra.mxu0 %v2491
    %3292 = vmatprep.subr.bf16.mxu0 %v2499
    %3293 = vmatpush1.bf16.msra.mxu0 %v2498
    %3294 = vmatprep.subr.bf16.mxu0 %v2506
    %3295 = vmatpush1.bf16.msra.mxu0 %v2505
    %3296 = vmatprep.subr.bf16.mxu0 %v2513
    %3297 = vmatpush1.bf16.msra.mxu0 %v2512
    %3298 = vmatprep.mubr.bf16.mxu0 %v652
    %3299 = vmatmul.mubr.bf16.gmra.mrb[0].mxu0 %v651
    %v3300 = vpop.f32.mrb[0].mxu0
    %v3301 = vadd.f32 %v3258, %v3300
    %v3302 = vpop.f32.mrb[0].mxu0
    %v3303 = vadd.f32 %v3260, %v3302
    %v3304 = vpop.f32.mrb[0].mxu0
    %v3305 = vadd.f32 %v3262, %v3304
    %v3306 = vpop.f32.mrb[0].mxu0
    %v3307 = vadd.f32 %v3264, %v3306
    %3308 = vdwg.mxu0
    %3309 = vmatprep.subr.bf16.mxu0 %v2074
    %3310 = vmatpush1.bf16.msra.mxu0 %v2073
    %3311 = vmatprep.subr.bf16.mxu0 %v2081
    %3312 = vmatpush1.bf16.msra.mxu0 %v2080
    %3313 = vmatprep.subr.bf16.mxu0 %v2088
    %3314 = vmatpush1.bf16.msra.mxu0 %v2087
    %3315 = vmatprep.subr.bf16.mxu0 %v2095
    %3316 = vmatpush1.bf16.msra.mxu0 %v2094
    %3317 = vmatprep.subr.bf16.mxu0 %v2102
    %3318 = vmatpush1.bf16.msra.mxu0 %v2101
    %3319 = vmatprep.subr.bf16.mxu0 %v2109
    %3320 = vmatpush1.bf16.msra.mxu0 %v2108
    %3321 = vmatprep.subr.bf16.mxu0 %v2116
    %3322 = vmatpush1.bf16.msra.mxu0 %v2115
    %3323 = vmatprep.subr.bf16.mxu0 %v2123
    %3324 = vmatpush1.bf16.msra.mxu0 %v2122
    %3325 = vmatprep.subr.bf16.mxu0 %v2130
    %3326 = vmatpush1.bf16.msra.mxu0 %v2129
    %3327 = vmatprep.subr.bf16.mxu0 %v2137
    %3328 = vmatpush1.bf16.msra.mxu0 %v2136
    %3329 = vmatprep.subr.bf16.mxu0 %v2144
    %3330 = vmatpush1.bf16.msra.mxu0 %v2143
    %3331 = vmatprep.subr.bf16.mxu0 %v2151
    %3332 = vmatpush1.bf16.msra.mxu0 %v2150
    %3333 = vmatprep.subr.bf16.mxu0 %v2158
    %3334 = vmatpush1.bf16.msra.mxu0 %v2157
    %3335 = vmatprep.subr.bf16.mxu0 %v2165
    %3336 = vmatpush1.bf16.msra.mxu0 %v2164
    %3337 = vmatprep.subr.bf16.mxu0 %v2172
    %3338 = vmatpush1.bf16.msra.mxu0 %v2171
    %3339 = vmatprep.subr.bf16.mxu0 %v2179
    %3340 = vmatpush1.bf16.msra.mxu0 %v2178
    %3341 = vmatprep.mubr.bf16.mxu0 %v646
    %3342 = vmatmul.mubr.bf16.gmra.mrb[0].mxu0 %v645
    %v3343 = vpop.f32.mrb[0].mxu0
    %v3344 = vadd.f32 0.0, %v3343
    %v3345 = vpop.f32.mrb[0].mxu0
    %v3346 = vadd.f32 0.0, %v3345
    %v3347 = vpop.f32.mrb[0].mxu0
    %v3348 = vadd.f32 0.0, %v3347
    %v3349 = vpop.f32.mrb[0].mxu0
    %v3350 = vadd.f32 0.0, %v3349
    %3351 = vdwg.mxu0
    %3352 = vmatprep.subr.bf16.mxu0 %v2186
    %3353 = vmatpush1.bf16.msra.mxu0 %v2185
    %3354 = vmatprep.subr.bf16.mxu0 %v2193
    %3355 = vmatpush1.bf16.msra.mxu0 %v2192
    %3356 = vmatprep.subr.bf16.mxu0 %v2200
    %3357 = vmatpush1.bf16.msra.mxu0 %v2199
    %3358 = vmatprep.subr.bf16.mxu0 %v2207
    %3359 = vmatpush1.bf16.msra.mxu0 %v2206
    %3360 = vmatprep.subr.bf16.mxu0 %v2214
    %3361 = vmatpush1.bf16.msra.mxu0 %v2213
    %3362 = vmatprep.subr.bf16.mxu0 %v2221
    %3363 = vmatpush1.bf16.msra.mxu0 %v2220
    %3364 = vmatprep.subr.bf16.mxu0 %v2228
    %3365 = vmatpush1.bf16.msra.mxu0 %v2227
    %3366 = vmatprep.subr.bf16.mxu0 %v2235
    %3367 = vmatpush1.bf16.msra.mxu0 %v2234
    %3368 = vmatprep.subr.bf16.mxu0 %v2242
    %3369 = vmatpush1.bf16.msra.mxu0 %v2241
    %3370 = vmatprep.subr.bf16.mxu0 %v2249
    %3371 = vmatpush1.bf16.msra.mxu0 %v2248
    %3372 = vmatprep.subr.bf16.mxu0 %v2256
    %3373 = vmatpush1.bf16.msra.mxu0 %v2255
    %3374 = vmatprep.subr.bf16.mxu0 %v2263
    %3375 = vmatpush1.bf16.msra.mxu0 %v2262
    %3376 = vmatprep.subr.bf16.mxu0 %v2270
    %3377 = vmatpush1.bf16.msra.mxu0 %v2269
    %3378 = vmatprep.subr.bf16.mxu0 %v2277
    %3379 = vmatpush1.bf16.msra.mxu0 %v2276
    %3380 = vmatprep.subr.bf16.mxu0 %v2284
    %3381 = vmatpush1.bf16.msra.mxu0 %v2283
    %3382 = vmatprep.subr.bf16.mxu0 %v2291
    %3383 = vmatpush1.bf16.msra.mxu0 %v2290
    %3384 = vmatprep.mubr.bf16.mxu0 %v648
    %3385 = vmatmul.mubr.bf16.gmra.mrb[0].mxu0 %v647
    %v3386 = vpop.f32.mrb[0].mxu0
    %v3387 = vadd.f32 %v3344, %v3386
    %v3388 = vpop.f32.mrb[0].mxu0
    %v3389 = vadd.f32 %v3346, %v3388
    %v3390 = vpop.f32.mrb[0].mxu0
    %v3391 = vadd.f32 %v3348, %v3390
    %v3392 = vpop.f32.mrb[0].mxu0
    %v3393 = vadd.f32 %v3350, %v3392
    %3394 = vdwg.mxu0
    %3395 = vmatprep.subr.bf16.mxu0 %v2298
    %3396 = vmatpush1.bf16.msra.mxu0 %v2297
    %3397 = vmatprep.subr.bf16.mxu0 %v2305
    %3398 = vmatpush1.bf16.msra.mxu0 %v2304
    %3399 = vmatprep.subr.bf16.mxu0 %v2312
    %3400 = vmatpush1.bf16.msra.mxu0 %v2311
    %3401 = vmatprep.subr.bf16.mxu0 %v2319
    %3402 = vmatpush1.bf16.msra.mxu0 %v2318
    %3403 = vmatprep.subr.bf16.mxu0 %v2326
    %3404 = vmatpush1.bf16.msra.mxu0 %v2325
    %3405 = vmatprep.subr.bf16.mxu0 %v2333
    %3406 = vmatpush1.bf16.msra.mxu0 %v2332
    %3407 = vmatprep.subr.bf16.mxu0 %v2340
    %3408 = vmatpush1.bf16.msra.mxu0 %v2339
    %3409 = vmatprep.subr.bf16.mxu0 %v2347
    %3410 = vmatpush1.bf16.msra.mxu0 %v2346
    %3411 = vmatprep.subr.bf16.mxu0 %v2354
    %3412 = vmatpush1.bf16.msra.mxu0 %v2353
    %3413 = vmatprep.subr.bf16.mxu0 %v2361
    %3414 = vmatpush1.bf16.msra.mxu0 %v2360
    %3415 = vmatprep.subr.bf16.mxu0 %v2368
    %3416 = vmatpush1.bf16.msra.mxu0 %v2367
    %3417 = vmatprep.subr.bf16.mxu0 %v2375
    %3418 = vmatpush1.bf16.msra.mxu0 %v2374
    %3419 = vmatprep.subr.bf16.mxu0 %v2382
    %3420 = vmatpush1.bf16.msra.mxu0 %v2381
    %3421 = vmatprep.subr.bf16.mxu0 %v2389
    %3422 = vmatpush1.bf16.msra.mxu0 %v2388
    %3423 = vmatprep.subr.bf16.mxu0 %v2396
    %3424 = vmatpush1.bf16.msra.mxu0 %v2395
    %3425 = vmatprep.subr.bf16.mxu0 %v2403
    %3426 = vmatpush1.bf16.msra.mxu0 %v2402
    %3427 = vmatprep.mubr.bf16.mxu0 %v650
    %3428 = vmatmul.mubr.bf16.gmra.mrb[0].mxu0 %v649
    %v3429 = vpop.f32.mrb[0].mxu0
    %v3430 = vadd.f32 %v3387, %v3429
    %v3431 = vpop.f32.mrb[0].mxu0
    %v3432 = vadd.f32 %v3389, %v3431
    %v3433 = vpop.f32.mrb[0].mxu0
    %v3434 = vadd.f32 %v3391, %v3433
    %v3435 = vpop.f32.mrb[0].mxu0
    %v3436 = vadd.f32 %v3393, %v3435
    %3437 = vdwg.mxu0
    %3438 = vmatprep.subr.bf16.mxu0 %v2410
    %3439 = vmatpush1.bf16.msra.mxu0 %v2409
    %3440 = vmatprep.subr.bf16.mxu0 %v2417
    %3441 = vmatpush1.bf16.msra.mxu0 %v2416
    %3442 = vmatprep.subr.bf16.mxu0 %v2424
    %3443 = vmatpush1.bf16.msra.mxu0 %v2423
    %3444 = vmatprep.subr.bf16.mxu0 %v2431
    %3445 = vmatpush1.bf16.msra.mxu0 %v2430
    %3446 = vmatprep.subr.bf16.mxu0 %v2438
    %3447 = vmatpush1.bf16.msra.mxu0 %v2437
    %3448 = vmatprep.subr.bf16.mxu0 %v2445
    %3449 = vmatpush1.bf16.msra.mxu0 %v2444
    %3450 = vmatprep.subr.bf16.mxu0 %v2452
    %3451 = vmatpush1.bf16.msra.mxu0 %v2451
    %3452 = vmatprep.subr.bf16.mxu0 %v2459
    %3453 = vmatpush1.bf16.msra.mxu0 %v2458
    %3454 = vmatprep.subr.bf16.mxu0 %v2466
    %3455 = vmatpush1.bf16.msra.mxu0 %v2465
    %3456 = vmatprep.subr.bf16.mxu0 %v2473
    %3457 = vmatpush1.bf16.msra.mxu0 %v2472
    %3458 = vmatprep.subr.bf16.mxu0 %v2480
    %3459 = vmatpush1.bf16.msra.mxu0 %v2479
    %3460 = vmatprep.subr.bf16.mxu0 %v2487
    %3461 = vmatpush1.bf16.msra.mxu0 %v2486
    %3462 = vmatprep.subr.bf16.mxu0 %v2494
    %3463 = vmatpush1.bf16.msra.mxu0 %v2493
    %3464 = vmatprep.subr.bf16.mxu0 %v2501
    %3465 = vmatpush1.bf16.msra.mxu0 %v2500
    %3466 = vmatprep.subr.bf16.mxu0 %v2508
    %3467 = vmatpush1.bf16.msra.mxu0 %v2507
    %3468 = vmatprep.subr.bf16.mxu0 %v2515
    %3469 = vmatpush1.bf16.msra.mxu0 %v2514
    %3470 = vmatprep.mubr.bf16.mxu0 %v652
    %3471 = vmatmul.mubr.bf16.gmra.mrb[0].mxu0 %v651
    %v3472 = vpop.f32.mrb[0].mxu0
    %v3473 = vadd.f32 %v3430, %v3472
    %v3474 = vpop.f32.mrb[0].mxu0
    %v3475 = vadd.f32 %v3432, %v3474
    %v3476 = vpop.f32.mrb[0].mxu0
    %v3477 = vadd.f32 %v3434, %v3476
    %v3478 = vpop.f32.mrb[0].mxu0
    %v3479 = vadd.f32 %v3436, %v3478
    %3480 = vdwg.mxu0
    %3481 = vmatprep.subr.bf16.mxu0 0
    %3482 = vmatpush1.bf16.msra.mxu0 %v2075
    %3483 = vmatprep.subr.bf16.mxu0 0
    %3484 = vmatpush1.bf16.msra.mxu0 %v2082
    %3485 = vmatprep.subr.bf16.mxu0 0
    %3486 = vmatpush1.bf16.msra.mxu0 %v2089
    %3487 = vmatprep.subr.bf16.mxu0 0
    %3488 = vmatpush1.bf16.msra.mxu0 %v2096
    %3489 = vmatprep.subr.bf16.mxu0 0
    %3490 = vmatpush1.bf16.msra.mxu0 %v2103
    %3491 = vmatprep.subr.bf16.mxu0 0
    %3492 = vmatpush1.bf16.msra.mxu0 %v2110
    %3493 = vmatprep.subr.bf16.mxu0 0
    %3494 = vmatpush1.bf16.msra.mxu0 %v2117
    %3495 = vmatprep.subr.bf16.mxu0 0
    %3496 = vmatpush1.bf16.msra.mxu0 %v2124
    %3497 = vmatprep.subr.bf16.mxu0 0
    %3498 = vmatpush1.bf16.msra.mxu0 %v2131
    %3499 = vmatprep.subr.bf16.mxu0 0
    %3500 = vmatpush1.bf16.msra.mxu0 %v2138
    %3501 = vmatprep.subr.bf16.mxu0 0
    %3502 = vmatpush1.bf16.msra.mxu0 %v2145
    %3503 = vmatprep.subr.bf16.mxu0 0
    %3504 = vmatpush1.bf16.msra.mxu0 %v2152
    %3505 = vmatprep.subr.bf16.mxu0 0
    %3506 = vmatpush1.bf16.msra.mxu0 %v2159
    %3507 = vmatprep.subr.bf16.mxu0 0
    %3508 = vmatpush1.bf16.msra.mxu0 %v2166
    %3509 = vmatprep.subr.bf16.mxu0 0
    %3510 = vmatpush1.bf16.msra.mxu0 %v2173
    %3511 = vmatprep.subr.bf16.mxu0 0
    %3512 = vmatpush1.bf16.msra.mxu0 %v2180
    %3513 = vmatprep.mubr.bf16.mxu0 %v646
    %3514 = vmatmul.mubr.bf16.gmra.mrb[0].mxu0 %v645
    %v3515 = vpop.f32.mrb[0].mxu0
    %v3516 = vadd.f32 0.0, %v3515
    %v3517 = vpop.f32.mrb[0].mxu0
    %v3518 = vpop.f32.mrb[0].mxu0
    %v3519 = vadd.f32 0.0, %v3518
    %v3520 = vpop.f32.mrb[0].mxu0
    %3521 = vdwg.mxu0
    %3522 = vmatprep.subr.bf16.mxu0 0
    %3523 = vmatpush1.bf16.msra.mxu0 %v2187
    %3524 = vmatprep.subr.bf16.mxu0 0
    %3525 = vmatpush1.bf16.msra.mxu0 %v2194
    %3526 = vmatprep.subr.bf16.mxu0 0
    %3527 = vmatpush1.bf16.msra.mxu0 %v2201
    %3528 = vmatprep.subr.bf16.mxu0 0
    %3529 = vmatpush1.bf16.msra.mxu0 %v2208
    %3530 = vmatprep.subr.bf16.mxu0 0
    %3531 = vmatpush1.bf16.msra.mxu0 %v2215
    %3532 = vmatprep.subr.bf16.mxu0 0
    %3533 = vmatpush1.bf16.msra.mxu0 %v2222
    %3534 = vmatprep.subr.bf16.mxu0 0
    %3535 = vmatpush1.bf16.msra.mxu0 %v2229
    %3536 = vmatprep.subr.bf16.mxu0 0
    %3537 = vmatpush1.bf16.msra.mxu0 %v2236
    %3538 = vmatprep.subr.bf16.mxu0 0
    %3539 = vmatpush1.bf16.msra.mxu0 %v2243
    %3540 = vmatprep.subr.bf16.mxu0 0
    %3541 = vmatpush1.bf16.msra.mxu0 %v2250
    %3542 = vmatprep.subr.bf16.mxu0 0
    %3543 = vmatpush1.bf16.msra.mxu0 %v2257
    %3544 = vmatprep.subr.bf16.mxu0 0
    %3545 = vmatpush1.bf16.msra.mxu0 %v2264
    %3546 = vmatprep.subr.bf16.mxu0 0
    %3547 = vmatpush1.bf16.msra.mxu0 %v2271
    %3548 = vmatprep.subr.bf16.mxu0 0
    %3549 = vmatpush1.bf16.msra.mxu0 %v2278
    %3550 = vmatprep.subr.bf16.mxu0 0
    %3551 = vmatpush1.bf16.msra.mxu0 %v2285
    %3552 = vmatprep.subr.bf16.mxu0 0
    %3553 = vmatpush1.bf16.msra.mxu0 %v2292
    %3554 = vmatprep.mubr.bf16.mxu0 %v648
    %3555 = vmatmul.mubr.bf16.gmra.mrb[0].mxu0 %v647
    %v3556 = vpop.f32.mrb[0].mxu0
    %v3557 = vadd.f32 %v3516, %v3556
    %v3558 = vpop.f32.mrb[0].mxu0
    %v3559 = vpop.f32.mrb[0].mxu0
    %v3560 = vadd.f32 %v3519, %v3559
    %v3561 = vpop.f32.mrb[0].mxu0
    %3562 = vdwg.mxu0
    %3563 = vmatprep.subr.bf16.mxu0 0
    %3564 = vmatpush1.bf16.msra.mxu0 %v2299
    %3565 = vmatprep.subr.bf16.mxu0 0
    %3566 = vmatpush1.bf16.msra.mxu0 %v2306
    %3567 = vmatprep.subr.bf16.mxu0 0
    %3568 = vmatpush1.bf16.msra.mxu0 %v2313
    %3569 = vmatprep.subr.bf16.mxu0 0
    %3570 = vmatpush1.bf16.msra.mxu0 %v2320
    %3571 = vmatprep.subr.bf16.mxu0 0
    %3572 = vmatpush1.bf16.msra.mxu0 %v2327
    %3573 = vmatprep.subr.bf16.mxu0 0
    %3574 = vmatpush1.bf16.msra.mxu0 %v2334
    %3575 = vmatprep.subr.bf16.mxu0 0
    %3576 = vmatpush1.bf16.msra.mxu0 %v2341
    %3577 = vmatprep.subr.bf16.mxu0 0
    %3578 = vmatpush1.bf16.msra.mxu0 %v2348
    %3579 = vmatprep.subr.bf16.mxu0 0
    %3580 = vmatpush1.bf16.msra.mxu0 %v2355
    %3581 = vmatprep.subr.bf16.mxu0 0
    %3582 = vmatpush1.bf16.msra.mxu0 %v2362
    %3583 = vmatprep.subr.bf16.mxu0 0
    %3584 = vmatpush1.bf16.msra.mxu0 %v2369
    %3585 = vmatprep.subr.bf16.mxu0 0
    %3586 = vmatpush1.bf16.msra.mxu0 %v2376
    %3587 = vmatprep.subr.bf16.mxu0 0
    %3588 = vmatpush1.bf16.msra.mxu0 %v2383
    %3589 = vmatprep.subr.bf16.mxu0 0
    %3590 = vmatpush1.bf16.msra.mxu0 %v2390
    %3591 = vmatprep.subr.bf16.mxu0 0
    %3592 = vmatpush1.bf16.msra.mxu0 %v2397
    %3593 = vmatprep.subr.bf16.mxu0 0
    %3594 = vmatpush1.bf16.msra.mxu0 %v2404
    %3595 = vmatprep.mubr.bf16.mxu0 %v650
    %3596 = vmatmul.mubr.bf16.gmra.mrb[0].mxu0 %v649
    %v3597 = vpop.f32.mrb[0].mxu0
    %v3598 = vadd.f32 %v3557, %v3597
    %v3599 = vpop.f32.mrb[0].mxu0
    %v3600 = vpop.f32.mrb[0].mxu0
    %v3601 = vadd.f32 %v3560, %v3600
    %v3602 = vpop.f32.mrb[0].mxu0
    %3603 = vdwg.mxu0
    %3604 = vmatprep.subr.bf16.mxu0 0
    %3605 = vmatpush1.bf16.msra.mxu0 %v2411
    %3606 = vmatprep.subr.bf16.mxu0 0
    %3607 = vmatpush1.bf16.msra.mxu0 %v2418
    %3608 = vmatprep.subr.bf16.mxu0 0
    %3609 = vmatpush1.bf16.msra.mxu0 %v2425
    %3610 = vmatprep.subr.bf16.mxu0 0
    %3611 = vmatpush1.bf16.msra.mxu0 %v2432
    %3612 = vmatprep.subr.bf16.mxu0 0
    %3613 = vmatpush1.bf16.msra.mxu0 %v2439
    %3614 = vmatprep.subr.bf16.mxu0 0
    %3615 = vmatpush1.bf16.msra.mxu0 %v2446
    %3616 = vmatprep.subr.bf16.mxu0 0
    %3617 = vmatpush1.bf16.msra.mxu0 %v2453
    %3618 = vmatprep.subr.bf16.mxu0 0
    %3619 = vmatpush1.bf16.msra.mxu0 %v2460
    %3620 = vmatprep.subr.bf16.mxu0 0
    %3621 = vmatpush1.bf16.msra.mxu0 %v2467
    %3622 = vmatprep.subr.bf16.mxu0 0
    %3623 = vmatpush1.bf16.msra.mxu0 %v2474
    %3624 = vmatprep.subr.bf16.mxu0 0
    %3625 = vmatpush1.bf16.msra.mxu0 %v2481
    %3626 = vmatprep.subr.bf16.mxu0 0
    %3627 = vmatpush1.bf16.msra.mxu0 %v2488
    %3628 = vmatprep.subr.bf16.mxu0 0
    %3629 = vmatpush1.bf16.msra.mxu0 %v2495
    %3630 = vmatprep.subr.bf16.mxu0 0
    %3631 = vmatpush1.bf16.msra.mxu0 %v2502
    %3632 = vmatprep.subr.bf16.mxu0 0
    %3633 = vmatpush1.bf16.msra.mxu0 %v2509
    %3634 = vmatprep.subr.bf16.mxu0 0
    %3635 = vmatpush1.bf16.msra.mxu0 %v2516
    %3636 = vmatprep.mubr.bf16.mxu0 %v652
    %3637 = vmatmul.mubr.bf16.gmra.mrb[0].mxu0 %v651
    %v3638 = vpop.f32.mrb[0].mxu0
    %v3639 = vadd.f32 %v3598, %v3638
    %v3640 = vpop.f32.mrb[0].mxu0
    %v3641 = vpop.f32.mrb[0].mxu0
    %v3642 = vadd.f32 %v3601, %v3641
    %v3643 = vpop.f32.mrb[0].mxu0
    %3644 = vdwg.mxu0
    %v3645 = vadd.f32 %v3129, %v3131
    %v3646 = vadd.f32 %v3645, %v3301
    %v3647 = vadd.f32 %v3646, %v3303
    %v3648 = vadd.f32 %v3647, %v3473
    %v3649 = vadd.f32 %v3648, %v3475
    %v3650 = vadd.f32 %v3649, %v3639
    %3651 = vadd.xlane.f32.xlu0 %v3650
    %v3652 = vpop.xlane.xlu0 %3651
    %v3653 = vadd.f32 %v3133, %v3135
    %v3654 = vadd.f32 %v3653, %v3305
    %v3655 = vadd.f32 %v3654, %v3307
    %v3656 = vadd.f32 %v3655, %v3477
    %v3657 = vadd.f32 %v3656, %v3479
    %v3658 = vadd.f32 %v3657, %v3642
    %3659 = vadd.xlane.f32.xlu0 %v3658
    %v3660 = vpop.xlane.xlu0 %3659
    %v3661 = vmul.f32 %v3129, %v3129
    %v3662 = vmul.f32 %v3131, %v3131
    %v3663 = vmul.f32 %v3301, %v3301
    %v3664 = vmul.f32 %v3303, %v3303
    %v3665 = vmul.f32 %v3473, %v3473
    %v3666 = vmul.f32 %v3475, %v3475
    %v3667 = vmul.f32 %v3639, %v3639
    %v3668 = vmul.f32 %v3133, %v3133
    %v3669 = vmul.f32 %v3135, %v3135
    %v3670 = vmul.f32 %v3305, %v3305
    %v3671 = vmul.f32 %v3307, %v3307
    %v3672 = vmul.f32 %v3477, %v3477
    %v3673 = vmul.f32 %v3479, %v3479
    %v3674 = vmul.f32 %v3642, %v3642
    %v3675 = vadd.f32 %v3661, %v3662
    %v3676 = vadd.f32 %v3675, %v3663
    %v3677 = vadd.f32 %v3676, %v3664
    %v3678 = vadd.f32 %v3677, %v3665
    %v3679 = vadd.f32 %v3678, %v3666
    %v3680 = vadd.f32 %v3679, %v3667
    %3681 = vadd.xlane.f32.xlu0 %v3680
    %v3682 = vpop.xlane.xlu0 %3681
    %v3683 = vadd.f32 %v3668, %v3669
    %v3684 = vadd.f32 %v3683, %v3670
    %v3685 = vadd.f32 %v3684, %v3671
    %v3686 = vadd.f32 %v3685, %v3672
    %v3687 = vadd.f32 %v3686, %v3673
    %v3688 = vadd.f32 %v3687, %v3674
    %3689 = vadd.xlane.f32.xlu0 %v3688
    %v3690 = vpop.xlane.xlu0 %3689
    %v3691 = vmul.f32 %v3652, 0.0012755102
    %v3692 = vmul.f32 %v3660, 0.0012755102
    %v3693 = vmul.f32 %v3682, 0.0012755102
    %v3694 = vmul.f32 %v3690, 0.0012755102
    %v3695 = vmul.f32 %v3691, %v3691
    %v3696 = vmul.f32 %v3692, %v3692
    %v3697 = vsub.f32 %v3693, %v3695
    %v3698 = vsub.f32 %v3694, %v3696
    %v3699 = vld [vmem:[#allocation4] sm:$0xff]
    %v3700 = vadd.f32 %v3697, 1e-05
    %v3701 = vadd.f32 %v3698, 1e-05
    %v3702 = vrsqrt.pop %v3700
    %v3703 = vrsqrt.pop %v3701
    %v3705 = vlaneseq
    %v3706 = vshrl.u32 %v3705, 7
    %v3707 = vsub.s32 0, %v3706
    %v3708 = vrot.slane %v3699, %v3707
    %v3709 = vlaneseq
    %v3710 = vshrl.u32 %v3709, 7
    %v3711 = vsub.s32 1, %v3710
    %v3712 = vrot.slane %v3699, %v3711
    %v3713 = vlaneseq
    %v3714 = vshrl.u32 %v3713, 7
    %v3715 = vsub.s32 2, %v3714
    %v3716 = vrot.slane %v3699, %v3715
    %v3717 = vlaneseq
    %v3718 = vshrl.u32 %v3717, 7
    %v3719 = vsub.s32 3, %v3718
    %v3720 = vrot.slane %v3699, %v3719
    %v3721 = vlaneseq
    %v3722 = vshrl.u32 %v3721, 7
    %v3723 = vsub.s32 4, %v3722
    %v3724 = vrot.slane %v3699, %v3723
    %v3725 = vlaneseq
    %v3726 = vshrl.u32 %v3725, 7
    %v3727 = vsub.s32 5, %v3726
    %v3728 = vrot.slane %v3699, %v3727
    %v3729 = vlaneseq
    %v3730 = vshrl.u32 %v3729, 7
    %v3731 = vsub.s32 6, %v3730
    %v3732 = vrot.slane %v3699, %v3731
    %v3740 = vmul.f32 %v3708, %v3702
    %v3741 = vmul.f32 %v3712, %v3702
    %v3742 = vmul.f32 %v3716, %v3702
    %v3743 = vmul.f32 %v3720, %v3702
    %v3744 = vmul.f32 %v3724, %v3702
    %v3745 = vmul.f32 %v3728, %v3702
    %v3746 = vmul.f32 %v3732, %v3702
    %v3747 = vmul.f32 %v3708, %v3703
    %v3748 = vmul.f32 %v3712, %v3703
    %v3749 = vmul.f32 %v3716, %v3703
    %v3750 = vmul.f32 %v3720, %v3703
    %v3751 = vmul.f32 %v3724, %v3703
    %v3752 = vmul.f32 %v3728, %v3703
    %v3753 = vmul.f32 %v3732, %v3703
    %v3754 = vld [vmem:[#allocation6] sm:$0xff]
    %v3755 = vmul.f32 %v3691, %v3740
    %v3756 = vmul.f32 %v3691, %v3741
    %v3757 = vmul.f32 %v3691, %v3742
    %v3758 = vmul.f32 %v3691, %v3743
    %v3759 = vmul.f32 %v3691, %v3744
    %v3760 = vmul.f32 %v3691, %v3745
    %v3761 = vmul.f32 %v3691, %v3746
    %v3762 = vmul.f32 %v3692, %v3747
    %v3763 = vmul.f32 %v3692, %v3748
    %v3764 = vmul.f32 %v3692, %v3749
    %v3765 = vmul.f32 %v3692, %v3750
    %v3766 = vmul.f32 %v3692, %v3751
    %v3767 = vmul.f32 %v3692, %v3752
    %v3768 = vmul.f32 %v3692, %v3753
    %v3770 = vlaneseq
    %v3771 = vshrl.u32 %v3770, 7
    %v3772 = vsub.s32 0, %v3771
    %v3773 = vrot.slane %v3754, %v3772
    %v3774 = vlaneseq
    %v3775 = vshrl.u32 %v3774, 7
    %v3776 = vsub.s32 1, %v3775
    %v3777 = vrot.slane %v3754, %v3776
    %v3778 = vlaneseq
    %v3779 = vshrl.u32 %v3778, 7
    %v3780 = vsub.s32 2, %v3779
    %v3781 = vrot.slane %v3754, %v3780
    %v3782 = vlaneseq
    %v3783 = vshrl.u32 %v3782, 7
    %v3784 = vsub.s32 3, %v3783
    %v3785 = vrot.slane %v3754, %v3784
    %v3786 = vlaneseq
    %v3787 = vshrl.u32 %v3786, 7
    %v3788 = vsub.s32 4, %v3787
    %v3789 = vrot.slane %v3754, %v3788
    %v3790 = vlaneseq
    %v3791 = vshrl.u32 %v3790, 7
    %v3792 = vsub.s32 5, %v3791
    %v3793 = vrot.slane %v3754, %v3792
    %v3794 = vlaneseq
    %v3795 = vshrl.u32 %v3794, 7
    %v3796 = vsub.s32 6, %v3795
    %v3797 = vrot.slane %v3754, %v3796
    %v3805 = vsub.f32 %v3773, %v3755
    %v3806 = vsub.f32 %v3777, %v3756
    %v3807 = vsub.f32 %v3781, %v3757
    %v3808 = vsub.f32 %v3785, %v3758
    %v3809 = vsub.f32 %v3789, %v3759
    %v3810 = vsub.f32 %v3793, %v3760
    %v3811 = vsub.f32 %v3797, %v3761
    %v3812 = vsub.f32 %v3773, %v3762
    %v3813 = vsub.f32 %v3777, %v3763
    %v3814 = vsub.f32 %v3781, %v3764
    %v3815 = vsub.f32 %v3785, %v3765
    %v3816 = vsub.f32 %v3789, %v3766
    %v3817 = vsub.f32 %v3793, %v3767
    %v3818 = vsub.f32 %v3797, %v3768
    %v3819 = vmul.f32 %v3129, %v3740
    %v3820 = vmul.f32 %v3131, %v3741
    %v3821 = vmul.f32 %v3301, %v3742
    %v3822 = vmul.f32 %v3303, %v3743
    %v3823 = vmul.f32 %v3473, %v3744
    %v3824 = vmul.f32 %v3475, %v3745
    %v3825 = vmul.f32 %v3639, %v3746
    %v3826 = vmul.f32 %v3133, %v3747
    %v3827 = vmul.f32 %v3135, %v3748
    %v3828 = vmul.f32 %v3305, %v3749
    %v3829 = vmul.f32 %v3307, %v3750
    %v3830 = vmul.f32 %v3477, %v3751
    %v3831 = vmul.f32 %v3479, %v3752
    %v3832 = vmul.f32 %v3642, %v3753
    %v3833 = vadd.f32 %v3819, %v3805
    %v3834 = vadd.f32 %v3820, %v3806
    %v3835 = vadd.f32 %v3821, %v3807
    %v3836 = vadd.f32 %v3822, %v3808
    %v3837 = vadd.f32 %v3823, %v3809
    %v3838 = vadd.f32 %v3824, %v3810
    %v3839 = vadd.f32 %v3825, %v3811
    %v3840 = vadd.f32 %v3826, %v3812
    %v3841 = vadd.f32 %v3827, %v3813
    %v3842 = vadd.f32 %v3828, %v3814
    %v3843 = vadd.f32 %v3829, %v3815
    %v3844 = vadd.f32 %v3830, %v3816
    %v3845 = vadd.f32 %v3831, %v3817
    %v3846 = vadd.f32 %v3832, %v3818
    %v3847 = vmax.f32 %v3833, 0.0
    %v3848 = vmax.f32 %v3834, 0.0
    %v3849 = vmax.f32 %v3835, 0.0
    %v3850 = vmax.f32 %v3836, 0.0
    %v3851 = vmax.f32 %v3837, 0.0
    %v3852 = vmax.f32 %v3838, 0.0
    %v3853 = vmax.f32 %v3839, 0.0
    %v3854 = vmax.f32 %v3840, 0.0
    %v3855 = vmax.f32 %v3841, 0.0
    %v3856 = vmax.f32 %v3842, 0.0
    %v3857 = vmax.f32 %v3843, 0.0
    %v3858 = vmax.f32 %v3844, 0.0
    %v3859 = vmax.f32 %v3845, 0.0
    %v3860 = vmax.f32 %v3846, 0.0
    %v3861 = vpack.c.bf16 %v3854, %v3847
    %v3862 = vpack.c.bf16 %v3855, %v3848
    %v3863 = vpack.c.bf16 %v3856, %v3849
    %v3864 = vpack.c.bf16 %v3857, %v3850
    %v3865 = vpack.c.bf16 %v3858, %v3851
    %v3866 = vpack.c.bf16 %v3859, %v3852
    %v3867 = vpack.c.bf16 %v3860, %v3853
    %v3868 = vld [vmem:[#allocation7] sm:$0xff]
    %v3869 = vld [vmem:[#allocation7 + $0x8] sm:$0xff]
    %v3870 = vld [vmem:[#allocation7 + $0x10] sm:$0xff]
    %v3871 = vld [vmem:[#allocation7 + $0x18] sm:$0xff]
    %v3872 = vld [vmem:[#allocation7 + $0x20] sm:$0xff]
    %v3873 = vld [vmem:[#allocation7 + $0x28] sm:$0xff]
    %v3874 = vld [vmem:[#allocation7 + $0x30] sm:$0xff]
    %v3875 = vld [vmem:[#allocation7 + $0x38] sm:$0xff]
    %v3876 = vld [vmem:[#allocation7 + $0x40] sm:$0xff]
    %v3877 = vld [vmem:[#allocation7 + $0x48] sm:$0xff]
    %v3878 = vld [vmem:[#allocation7 + $0x50] sm:$0xff]
    %v3879 = vld [vmem:[#allocation7 + $0x58] sm:$0xff]
    %v3880 = vld [vmem:[#allocation7 + $0x60] sm:$0xff]
    %v3881 = vld [vmem:[#allocation7 + $0x68] sm:$0xff]
    %v3882 = vld [vmem:[#allocation7 + $0x70] sm:$0xff]
    %v3883 = vld [vmem:[#allocation7 + $0x78] sm:$0xff]
    %v3884 = vld [vmem:[#allocation7 + $0x80] sm:$0xff]
    %v3885 = vld [vmem:[#allocation7 + $0x88] sm:$0xff]
    %v3886 = vld [vmem:[#allocation7 + $0x90] sm:$0xff]
    %v3887 = vld [vmem:[#allocation7 + $0x98] sm:$0xff]
    %v3888 = vld [vmem:[#allocation7 + $0xa0] sm:$0xff]
    %v3889 = vld [vmem:[#allocation7 + $0xa8] sm:$0xff]
    %v3890 = vld [vmem:[#allocation7 + $0xb0] sm:$0xff]
    %v3891 = vld [vmem:[#allocation7 + $0xb8] sm:$0xff]
    %v3892 = vld [vmem:[#allocation7 + $0xc0] sm:$0xff]
    %v3893 = vld [vmem:[#allocation7 + $0xc8] sm:$0xff]
    %v3894 = vld [vmem:[#allocation7 + $0xd0] sm:$0xff]
    %v3895 = vld [vmem:[#allocation7 + $0xd8] sm:$0xff]
    %v3896 = vld [vmem:[#allocation7 + $0xe0] sm:$0xff]
    %v3897 = vld [vmem:[#allocation7 + $0xe8] sm:$0xff]
    %v3898 = vld [vmem:[#allocation7 + $0xf0] sm:$0xff]
    %v3899 = vld [vmem:[#allocation7 + $0xf8] sm:$0xff]
    %v3900 = vld [vmem:[#allocation7 + $0x100] sm:$0xff]
    %v3901 = vld [vmem:[#allocation7 + $0x108] sm:$0xff]
    %v3902 = vld [vmem:[#allocation7 + $0x110] sm:$0xff]
    %v3903 = vld [vmem:[#allocation7 + $0x118] sm:$0xff]
    %v3904 = vld [vmem:[#allocation7 + $0x120] sm:$0xff]
    %v3905 = vld [vmem:[#allocation7 + $0x128] sm:$0xff]
    %v3906 = vld [vmem:[#allocation7 + $0x130] sm:$0xff]
    %v3907 = vld [vmem:[#allocation7 + $0x138] sm:$0xff]
    %v3908 = vld [vmem:[#allocation7 + $0x140] sm:$0xff]
    %v3909 = vld [vmem:[#allocation7 + $0x148] sm:$0xff]
    %v3910 = vld [vmem:[#allocation7 + $0x150] sm:$0xff]
    %v3911 = vld [vmem:[#allocation7 + $0x158] sm:$0xff]
    %v3912 = vld [vmem:[#allocation7 + $0x160] sm:$0xff]
    %v3913 = vld [vmem:[#allocation7 + $0x168] sm:$0xff]
    %v3914 = vld [vmem:[#allocation7 + $0x170] sm:$0xff]
    %v3915 = vld [vmem:[#allocation7 + $0x178] sm:$0xff]
    %v3916 = vld [vmem:[#allocation7 + $0x180] sm:$0xff]
    %v3917 = vld [vmem:[#allocation7 + $0x188] sm:$0xff]
    %v3918 = vld [vmem:[#allocation7 + $0x190] sm:$0xff]
    %v3919 = vld [vmem:[#allocation7 + $0x198] sm:$0xff]
    %v3920 = vld [vmem:[#allocation7 + $0x1a0] sm:$0xff]
    %v3921 = vld [vmem:[#allocation7 + $0x1a8] sm:$0xff]
    %v3922 = vld [vmem:[#allocation7 + $0x1b0] sm:$0xff]
    %v3923 = vld [vmem:[#allocation7 + $0x1b8] sm:$0xff]
    %v3924 = vld [vmem:[#allocation7 + $0x1c0] sm:$0xff]
    %v3925 = vld [vmem:[#allocation7 + $0x1c8] sm:$0xff]
    %v3926 = vld [vmem:[#allocation7 + $0x1d0] sm:$0xff]
    %v3927 = vld [vmem:[#allocation7 + $0x1d8] sm:$0xff]
    %v3928 = vld [vmem:[#allocation7 + $0x1e0] sm:$0xff]
    %v3929 = vld [vmem:[#allocation7 + $0x1e8] sm:$0xff]
    %v3930 = vld [vmem:[#allocation7 + $0x1f0] sm:$0xff]
    %v3931 = vld [vmem:[#allocation7 + $0x1f8] sm:$0xff]
    %v3932 = vld [vmem:[#allocation7 + $0x200] sm:$0xff]
    %v3933 = vld [vmem:[#allocation7 + $0x208] sm:$0xff]
    %v3934 = vld [vmem:[#allocation7 + $0x210] sm:$0xff]
    %v3935 = vld [vmem:[#allocation7 + $0x218] sm:$0xff]
    %v3936 = vld [vmem:[#allocation7 + $0x220] sm:$0xff]
    %v3937 = vld [vmem:[#allocation7 + $0x228] sm:$0xff]
    %v3938 = vld [vmem:[#allocation7 + $0x230] sm:$0xff]
    %v3939 = vld [vmem:[#allocation7 + $0x238] sm:$0xff]
    %v3940 = vld [vmem:[#allocation7 + $0x240] sm:$0xff]
    %v3941 = vld [vmem:[#allocation7 + $0x248] sm:$0xff]
    %v3942 = vld [vmem:[#allocation7 + $0x250] sm:$0xff]
    %v3943 = vld [vmem:[#allocation7 + $0x258] sm:$0xff]
    %v3944 = vld [vmem:[#allocation7 + $0x260] sm:$0xff]
    %v3945 = vld [vmem:[#allocation7 + $0x268] sm:$0xff]
    %v3946 = vld [vmem:[#allocation7 + $0x270] sm:$0xff]
    %v3947 = vld [vmem:[#allocation7 + $0x278] sm:$0xff]
    %v3948 = vld [vmem:[#allocation7 + $0x280] sm:$0xff]
    %v3949 = vld [vmem:[#allocation7 + $0x288] sm:$0xff]
    %v3950 = vld [vmem:[#allocation7 + $0x290] sm:$0xff]
    %v3951 = vld [vmem:[#allocation7 + $0x298] sm:$0xff]
    %v3952 = vld [vmem:[#allocation7 + $0x2a0] sm:$0xff]
    %v3953 = vld [vmem:[#allocation7 + $0x2a8] sm:$0xff]
    %v3954 = vld [vmem:[#allocation7 + $0x2b0] sm:$0xff]
    %v3955 = vld [vmem:[#allocation7 + $0x2b8] sm:$0xff]
    %v3956 = vld [vmem:[#allocation7 + $0x2c0] sm:$0xff]
    %v3957 = vld [vmem:[#allocation7 + $0x2c8] sm:$0xff]
    %v3958 = vld [vmem:[#allocation7 + $0x2d0] sm:$0xff]
    %v3959 = vld [vmem:[#allocation7 + $0x2d8] sm:$0xff]
    %v3960 = vld [vmem:[#allocation7 + $0x2e0] sm:$0xff]
    %v3961 = vld [vmem:[#allocation7 + $0x2e8] sm:$0xff]
    %v3962 = vld [vmem:[#allocation7 + $0x2f0] sm:$0xff]
    %v3963 = vld [vmem:[#allocation7 + $0x2f8] sm:$0xff]
    %v3964 = vld [vmem:[#allocation7 + $0x300] sm:$0xff]
    %v3965 = vld [vmem:[#allocation7 + $0x308] sm:$0xff]
    %v3966 = vld [vmem:[#allocation7 + $0x310] sm:$0xff]
    %v3967 = vld [vmem:[#allocation7 + $0x318] sm:$0xff]
    %v3968 = vld [vmem:[#allocation7 + $0x320] sm:$0xff]
    %v3969 = vld [vmem:[#allocation7 + $0x328] sm:$0xff]
    %v3970 = vld [vmem:[#allocation7 + $0x330] sm:$0xff]
    %v3971 = vld [vmem:[#allocation7 + $0x338] sm:$0xff]
    %v3972 = vld [vmem:[#allocation7 + $0x340] sm:$0xff]
    %v3973 = vld [vmem:[#allocation7 + $0x348] sm:$0xff]
    %v3974 = vld [vmem:[#allocation7 + $0x350] sm:$0xff]
    %v3975 = vld [vmem:[#allocation7 + $0x358] sm:$0xff]
    %v3976 = vld [vmem:[#allocation7 + $0x360] sm:$0xff]
    %v3977 = vld [vmem:[#allocation7 + $0x368] sm:$0xff]
    %v3978 = vld [vmem:[#allocation7 + $0x370] sm:$0xff]
    %v3979 = vld [vmem:[#allocation7 + $0x378] sm:$0xff]
    %v3980 = vld [vmem:[#allocation7 + $0x380] sm:$0xff]
    %v3981 = vld [vmem:[#allocation7 + $0x388] sm:$0xff]
    %v3982 = vld [vmem:[#allocation7 + $0x390] sm:$0xff]
    %v3983 = vld [vmem:[#allocation7 + $0x398] sm:$0xff]
    %v3984 = vld [vmem:[#allocation7 + $0x3a0] sm:$0xff]
    %v3985 = vld [vmem:[#allocation7 + $0x3a8] sm:$0xff]
    %v3986 = vld [vmem:[#allocation7 + $0x3b0] sm:$0xff]
    %v3987 = vld [vmem:[#allocation7 + $0x3b8] sm:$0xff]
    %v3988 = vld [vmem:[#allocation7 + $0x3c0] sm:$0xff]
    %v3989 = vld [vmem:[#allocation7 + $0x3c8] sm:$0xff]
    %v3990 = vld [vmem:[#allocation7 + $0x3d0] sm:$0xff]
    %v3991 = vld [vmem:[#allocation7 + $0x3d8] sm:$0xff]
    %v3992 = vld [vmem:[#allocation7 + $0x3e0] sm:$0xff]
    %v3993 = vld [vmem:[#allocation7 + $0x3e8] sm:$0xff]
    %v3994 = vld [vmem:[#allocation7 + $0x3f0] sm:$0xff]
    %v3995 = vld [vmem:[#allocation7 + $0x3f8] sm:$0xff]
    %v3996 = vld [vmem:[#allocation7 + $0x400] sm:$0xff]
    %v3997 = vld [vmem:[#allocation7 + $0x408] sm:$0xff]
    %v3998 = vld [vmem:[#allocation7 + $0x410] sm:$0xff]
    %v3999 = vld [vmem:[#allocation7 + $0x418] sm:$0xff]
    %v4000 = vld [vmem:[#allocation7 + $0x420] sm:$0xff]
    %v4001 = vld [vmem:[#allocation7 + $0x428] sm:$0xff]
    %v4002 = vld [vmem:[#allocation7 + $0x430] sm:$0xff]
    %v4003 = vld [vmem:[#allocation7 + $0x438] sm:$0xff]
    %v4004 = vld [vmem:[#allocation7 + $0x440] sm:$0xff]
    %v4005 = vld [vmem:[#allocation7 + $0x448] sm:$0xff]
    %v4006 = vld [vmem:[#allocation7 + $0x450] sm:$0xff]
    %v4007 = vld [vmem:[#allocation7 + $0x458] sm:$0xff]
    %v4008 = vld [vmem:[#allocation7 + $0x460] sm:$0xff]
    %v4009 = vld [vmem:[#allocation7 + $0x468] sm:$0xff]
    %v4010 = vld [vmem:[#allocation7 + $0x470] sm:$0xff]
    %v4011 = vld [vmem:[#allocation7 + $0x478] sm:$0xff]
    %v4012 = vld [vmem:[#allocation7 + $0x480] sm:$0xff]
    %v4013 = vld [vmem:[#allocation7 + $0x488] sm:$0xff]
    %v4014 = vld [vmem:[#allocation7 + $0x490] sm:$0xff]
    %v4015 = vld [vmem:[#allocation7 + $0x498] sm:$0xff]
    %v4016 = vld [vmem:[#allocation7 + $0x4a0] sm:$0xff]
    %v4017 = vld [vmem:[#allocation7 + $0x4a8] sm:$0xff]
    %v4018 = vld [vmem:[#allocation7 + $0x4b0] sm:$0xff]
    %v4019 = vld [vmem:[#allocation7 + $0x4b8] sm:$0xff]
    %v4020 = vld [vmem:[#allocation7 + $0x4c0] sm:$0xff]
    %v4021 = vld [vmem:[#allocation7 + $0x4c8] sm:$0xff]
    %v4022 = vld [vmem:[#allocation7 + $0x4d0] sm:$0xff]
    %v4023 = vld [vmem:[#allocation7 + $0x4d8] sm:$0xff]
    %v4024 = vld [vmem:[#allocation7 + $0x4e0] sm:$0xff]
    %v4025 = vld [vmem:[#allocation7 + $0x4e8] sm:$0xff]
    %v4026 = vld [vmem:[#allocation7 + $0x4f0] sm:$0xff]
    %v4027 = vld [vmem:[#allocation7 + $0x4f8] sm:$0xff]
    %v4028 = vld [vmem:[#allocation7 + $0x500] sm:$0xff]
    %v4029 = vld [vmem:[#allocation7 + $0x508] sm:$0xff]
    %v4030 = vld [vmem:[#allocation7 + $0x510] sm:$0xff]
    %v4031 = vld [vmem:[#allocation7 + $0x518] sm:$0xff]
    %v4032 = vld [vmem:[#allocation7 + $0x520] sm:$0xff]
    %v4033 = vld [vmem:[#allocation7 + $0x528] sm:$0xff]
    %v4034 = vld [vmem:[#allocation7 + $0x530] sm:$0xff]
    %v4035 = vld [vmem:[#allocation7 + $0x538] sm:$0xff]
    %v4036 = vld [vmem:[#allocation7 + $0x540] sm:$0xff]
    %v4037 = vld [vmem:[#allocation7 + $0x548] sm:$0xff]
    %v4038 = vld [vmem:[#allocation7 + $0x550] sm:$0xff]
    %v4039 = vld [vmem:[#allocation7 + $0x558] sm:$0xff]
    %v4040 = vld [vmem:[#allocation7 + $0x560] sm:$0xff]
    %v4041 = vld [vmem:[#allocation7 + $0x568] sm:$0xff]
    %v4042 = vld [vmem:[#allocation7 + $0x570] sm:$0xff]
    %v4043 = vld [vmem:[#allocation7 + $0x578] sm:$0xff]
    %v4044 = vld [vmem:[#allocation7 + $0x580] sm:$0xff]
    %v4045 = vld [vmem:[#allocation7 + $0x588] sm:$0xff]
    %v4046 = vld [vmem:[#allocation7 + $0x590] sm:$0xff]
    %v4047 = vld [vmem:[#allocation7 + $0x598] sm:$0xff]
    %v4048 = vld [vmem:[#allocation7 + $0x5a0] sm:$0xff]
    %v4049 = vld [vmem:[#allocation7 + $0x5a8] sm:$0xff]
    %v4050 = vld [vmem:[#allocation7 + $0x5b0] sm:$0xff]
    %v4051 = vld [vmem:[#allocation7 + $0x5b8] sm:$0xff]
    %v4052 = vld [vmem:[#allocation7 + $0x5c0] sm:$0xff]
    %v4053 = vld [vmem:[#allocation7 + $0x5c8] sm:$0xff]
    %v4054 = vld [vmem:[#allocation7 + $0x5d0] sm:$0xff]
    %v4055 = vld [vmem:[#allocation7 + $0x5d8] sm:$0xff]
    %v4056 = vld [vmem:[#allocation7 + $0x5e0] sm:$0xff]
    %v4057 = vld [vmem:[#allocation7 + $0x5e8] sm:$0xff]
    %v4058 = vld [vmem:[#allocation7 + $0x5f0] sm:$0xff]
    %v4059 = vld [vmem:[#allocation7 + $0x5f8] sm:$0xff]
    %v4060 = vld [vmem:[#allocation7 + $0x600] sm:$0xff]
    %v4061 = vld [vmem:[#allocation7 + $0x608] sm:$0xff]
    %v4062 = vld [vmem:[#allocation7 + $0x610] sm:$0xff]
    %v4063 = vld [vmem:[#allocation7 + $0x618] sm:$0xff]
    %v4064 = vld [vmem:[#allocation7 + $0x620] sm:$0xff]
    %v4065 = vld [vmem:[#allocation7 + $0x628] sm:$0xff]
    %v4066 = vld [vmem:[#allocation7 + $0x630] sm:$0xff]
    %v4067 = vld [vmem:[#allocation7 + $0x638] sm:$0xff]
    %v4068 = vld [vmem:[#allocation7 + $0x640] sm:$0xff]
    %v4069 = vld [vmem:[#allocation7 + $0x648] sm:$0xff]
    %v4070 = vld [vmem:[#allocation7 + $0x650] sm:$0xff]
    %v4071 = vld [vmem:[#allocation7 + $0x658] sm:$0xff]
    %v4072 = vld [vmem:[#allocation7 + $0x660] sm:$0xff]
    %v4073 = vld [vmem:[#allocation7 + $0x668] sm:$0xff]
    %v4074 = vld [vmem:[#allocation7 + $0x670] sm:$0xff]
    %v4075 = vld [vmem:[#allocation7 + $0x678] sm:$0xff]
    %v4076 = vld [vmem:[#allocation7 + $0x680] sm:$0xff]
    %v4077 = vld [vmem:[#allocation7 + $0x688] sm:$0xff]
    %v4078 = vld [vmem:[#allocation7 + $0x690] sm:$0xff]
    %v4079 = vld [vmem:[#allocation7 + $0x698] sm:$0xff]
    %v4080 = vld [vmem:[#allocation7 + $0x6a0] sm:$0xff]
    %v4081 = vld [vmem:[#allocation7 + $0x6a8] sm:$0xff]
    %v4082 = vld [vmem:[#allocation7 + $0x6b0] sm:$0xff]
    %v4083 = vld [vmem:[#allocation7 + $0x6b8] sm:$0xff]
    %v4084 = vld [vmem:[#allocation7 + $0x6c0] sm:$0xff]
    %v4085 = vld [vmem:[#allocation7 + $0x6c8] sm:$0xff]
    %v4086 = vld [vmem:[#allocation7 + $0x6d0] sm:$0xff]
    %v4087 = vld [vmem:[#allocation7 + $0x6d8] sm:$0xff]
    %v4088 = vld [vmem:[#allocation7 + $0x6e0] sm:$0xff]
    %v4089 = vld [vmem:[#allocation7 + $0x6e8] sm:$0xff]
    %v4090 = vld [vmem:[#allocation7 + $0x6f0] sm:$0xff]
    %v4091 = vld [vmem:[#allocation7 + $0x6f8] sm:$0xff]
    %v4316 = vunpack.c.l.b16 %v3868
    %v4317 = vunpack.c.h.b16 %v3868
    %v4318 = vunpack.c.l.b16 %v3869
    %v4319 = vunpack.c.h.b16 %v3869
    %v4320 = vunpack.c.l.b16 %v3870
    %v4321 = vunpack.c.h.b16 %v3870
    %v4322 = vunpack.c.l.b16 %v3871
    %v4323 = vunpack.c.h.b16 %v3871
    %v4324 = vunpack.c.l.b16 %v3872
    %v4325 = vunpack.c.h.b16 %v3872
    %v4326 = vunpack.c.l.b16 %v3873
    %v4327 = vunpack.c.h.b16 %v3873
    %v4328 = vunpack.c.l.b16 %v3874
    %v4329 = vunpack.c.h.b16 %v3874
    %v4330 = vunpack.c.l.b16 %v3875
    %v4331 = vunpack.c.h.b16 %v3875
    %v4332 = vunpack.c.l.b16 %v3876
    %v4333 = vunpack.c.h.b16 %v3876
    %v4334 = vunpack.c.l.b16 %v3877
    %v4335 = vunpack.c.h.b16 %v3877
    %v4336 = vunpack.c.l.b16 %v3878
    %v4337 = vunpack.c.h.b16 %v3878
    %v4338 = vunpack.c.l.b16 %v3879
    %v4339 = vunpack.c.h.b16 %v3879
    %v4340 = vunpack.c.l.b16 %v3880
    %v4341 = vunpack.c.h.b16 %v3880
    %v4342 = vunpack.c.l.b16 %v3881
    %v4343 = vunpack.c.h.b16 %v3881
    %v4344 = vunpack.c.l.b16 %v3882
    %v4345 = vunpack.c.h.b16 %v3882
    %v4346 = vunpack.c.l.b16 %v3883
    %v4347 = vunpack.c.h.b16 %v3883
    %v4348 = vunpack.c.l.b16 %v3884
    %v4349 = vunpack.c.h.b16 %v3884
    %v4350 = vunpack.c.l.b16 %v3885
    %v4351 = vunpack.c.h.b16 %v3885
    %v4352 = vunpack.c.l.b16 %v3886
    %v4353 = vunpack.c.h.b16 %v3886
    %v4354 = vunpack.c.l.b16 %v3887
    %v4355 = vunpack.c.h.b16 %v3887
    %v4356 = vunpack.c.l.b16 %v3888
    %v4357 = vunpack.c.h.b16 %v3888
    %v4358 = vunpack.c.l.b16 %v3889
    %v4359 = vunpack.c.h.b16 %v3889
    %v4360 = vunpack.c.l.b16 %v3890
    %v4361 = vunpack.c.h.b16 %v3890
    %v4362 = vunpack.c.l.b16 %v3891
    %v4363 = vunpack.c.h.b16 %v3891
    %v4364 = vunpack.c.l.b16 %v3892
    %v4365 = vunpack.c.h.b16 %v3892
    %v4366 = vunpack.c.l.b16 %v3893
    %v4367 = vunpack.c.h.b16 %v3893
    %v4368 = vunpack.c.l.b16 %v3894
    %v4369 = vunpack.c.h.b16 %v3894
    %v4370 = vunpack.c.l.b16 %v3895
    %v4371 = vunpack.c.h.b16 %v3895
    %v4372 = vunpack.c.l.b16 %v3896
    %v4373 = vunpack.c.h.b16 %v3896
    %v4374 = vunpack.c.l.b16 %v3897
    %v4375 = vunpack.c.h.b16 %v3897
    %v4376 = vunpack.c.l.b16 %v3898
    %v4377 = vunpack.c.h.b16 %v3898
    %v4378 = vunpack.c.l.b16 %v3899
    %v4379 = vunpack.c.h.b16 %v3899
    %v4380 = vunpack.c.l.b16 %v3900
    %v4381 = vunpack.c.h.b16 %v3900
    %v4382 = vunpack.c.l.b16 %v3901
    %v4383 = vunpack.c.h.b16 %v3901
    %v4384 = vunpack.c.l.b16 %v3902
    %v4385 = vunpack.c.h.b16 %v3902
    %v4386 = vunpack.c.l.b16 %v3903
    %v4387 = vunpack.c.h.b16 %v3903
    %v4388 = vunpack.c.l.b16 %v3904
    %v4389 = vunpack.c.h.b16 %v3904
    %v4390 = vunpack.c.l.b16 %v3905
    %v4391 = vunpack.c.h.b16 %v3905
    %v4392 = vunpack.c.l.b16 %v3906
    %v4393 = vunpack.c.h.b16 %v3906
    %v4394 = vunpack.c.l.b16 %v3907
    %v4395 = vunpack.c.h.b16 %v3907
    %v4396 = vunpack.c.l.b16 %v3908
    %v4397 = vunpack.c.h.b16 %v3908
    %v4398 = vunpack.c.l.b16 %v3909
    %v4399 = vunpack.c.h.b16 %v3909
    %v4400 = vunpack.c.l.b16 %v3910
    %v4401 = vunpack.c.h.b16 %v3910
    %v4402 = vunpack.c.l.b16 %v3911
    %v4403 = vunpack.c.h.b16 %v3911
    %v4404 = vunpack.c.l.b16 %v3912
    %v4405 = vunpack.c.h.b16 %v3912
    %v4406 = vunpack.c.l.b16 %v3913
    %v4407 = vunpack.c.h.b16 %v3913
    %v4408 = vunpack.c.l.b16 %v3914
    %v4409 = vunpack.c.h.b16 %v3914
    %v4410 = vunpack.c.l.b16 %v3915
    %v4411 = vunpack.c.h.b16 %v3915
    %v4412 = vunpack.c.l.b16 %v3916
    %v4413 = vunpack.c.h.b16 %v3916
    %v4414 = vunpack.c.l.b16 %v3917
    %v4415 = vunpack.c.h.b16 %v3917
    %v4416 = vunpack.c.l.b16 %v3918
    %v4417 = vunpack.c.h.b16 %v3918
    %v4418 = vunpack.c.l.b16 %v3919
    %v4419 = vunpack.c.h.b16 %v3919
    %v4420 = vunpack.c.l.b16 %v3920
    %v4421 = vunpack.c.h.b16 %v3920
    %v4422 = vunpack.c.l.b16 %v3921
    %v4423 = vunpack.c.h.b16 %v3921
    %v4424 = vunpack.c.l.b16 %v3922
    %v4425 = vunpack.c.h.b16 %v3922
    %v4426 = vunpack.c.l.b16 %v3923
    %v4427 = vunpack.c.h.b16 %v3923
    %v4428 = vunpack.c.l.b16 %v3924
    %v4429 = vunpack.c.h.b16 %v3924
    %v4430 = vunpack.c.l.b16 %v3925
    %v4431 = vunpack.c.h.b16 %v3925
    %v4432 = vunpack.c.l.b16 %v3926
    %v4433 = vunpack.c.h.b16 %v3926
    %v4434 = vunpack.c.l.b16 %v3927
    %v4435 = vunpack.c.h.b16 %v3927
    %v4436 = vunpack.c.l.b16 %v3928
    %v4437 = vunpack.c.h.b16 %v3928
    %v4438 = vunpack.c.l.b16 %v3929
    %v4439 = vunpack.c.h.b16 %v3929
    %v4440 = vunpack.c.l.b16 %v3930
    %v4441 = vunpack.c.h.b16 %v3930
    %v4442 = vunpack.c.l.b16 %v3931
    %v4443 = vunpack.c.h.b16 %v3931
    %v4444 = vunpack.c.l.b16 %v3932
    %v4445 = vunpack.c.h.b16 %v3932
    %v4446 = vunpack.c.l.b16 %v3933
    %v4447 = vunpack.c.h.b16 %v3933
    %v4448 = vunpack.c.l.b16 %v3934
    %v4449 = vunpack.c.h.b16 %v3934
    %v4450 = vunpack.c.l.b16 %v3935
    %v4451 = vunpack.c.h.b16 %v3935
    %v4452 = vunpack.c.l.b16 %v3936
    %v4453 = vunpack.c.h.b16 %v3936
    %v4454 = vunpack.c.l.b16 %v3937
    %v4455 = vunpack.c.h.b16 %v3937
    %v4456 = vunpack.c.l.b16 %v3938
    %v4457 = vunpack.c.h.b16 %v3938
    %v4458 = vunpack.c.l.b16 %v3939
    %v4459 = vunpack.c.h.b16 %v3939
    %v4460 = vunpack.c.l.b16 %v3940
    %v4461 = vunpack.c.h.b16 %v3940
    %v4462 = vunpack.c.l.b16 %v3941
    %v4463 = vunpack.c.h.b16 %v3941
    %v4464 = vunpack.c.l.b16 %v3942
    %v4465 = vunpack.c.h.b16 %v3942
    %v4466 = vunpack.c.l.b16 %v3943
    %v4467 = vunpack.c.h.b16 %v3943
    %v4468 = vunpack.c.l.b16 %v3944
    %v4469 = vunpack.c.h.b16 %v3944
    %v4470 = vunpack.c.l.b16 %v3945
    %v4471 = vunpack.c.h.b16 %v3945
    %v4472 = vunpack.c.l.b16 %v3946
    %v4473 = vunpack.c.h.b16 %v3946
    %v4474 = vunpack.c.l.b16 %v3947
    %v4475 = vunpack.c.h.b16 %v3947
    %v4476 = vunpack.c.l.b16 %v3948
    %v4477 = vunpack.c.h.b16 %v3948
    %v4478 = vunpack.c.l.b16 %v3949
    %v4479 = vunpack.c.h.b16 %v3949
    %v4480 = vunpack.c.l.b16 %v3950
    %v4481 = vunpack.c.h.b16 %v3950
    %v4482 = vunpack.c.l.b16 %v3951
    %v4483 = vunpack.c.h.b16 %v3951
    %v4484 = vunpack.c.l.b16 %v3952
    %v4485 = vunpack.c.h.b16 %v3952
    %v4486 = vunpack.c.l.b16 %v3953
    %v4487 = vunpack.c.h.b16 %v3953
    %v4488 = vunpack.c.l.b16 %v3954
    %v4489 = vunpack.c.h.b16 %v3954
    %v4490 = vunpack.c.l.b16 %v3955
    %v4491 = vunpack.c.h.b16 %v3955
    %v4492 = vunpack.c.l.b16 %v3956
    %v4493 = vunpack.c.h.b16 %v3956
    %v4494 = vunpack.c.l.b16 %v3957
    %v4495 = vunpack.c.h.b16 %v3957
    %v4496 = vunpack.c.l.b16 %v3958
    %v4497 = vunpack.c.h.b16 %v3958
    %v4498 = vunpack.c.l.b16 %v3959
    %v4499 = vunpack.c.h.b16 %v3959
    %v4500 = vunpack.c.l.b16 %v3960
    %v4501 = vunpack.c.h.b16 %v3960
    %v4502 = vunpack.c.l.b16 %v3961
    %v4503 = vunpack.c.h.b16 %v3961
    %v4504 = vunpack.c.l.b16 %v3962
    %v4505 = vunpack.c.h.b16 %v3962
    %v4506 = vunpack.c.l.b16 %v3963
    %v4507 = vunpack.c.h.b16 %v3963
    %v4508 = vunpack.c.l.b16 %v3964
    %v4509 = vunpack.c.h.b16 %v3964
    %v4510 = vunpack.c.l.b16 %v3965
    %v4511 = vunpack.c.h.b16 %v3965
    %v4512 = vunpack.c.l.b16 %v3966
    %v4513 = vunpack.c.h.b16 %v3966
    %v4514 = vunpack.c.l.b16 %v3967
    %v4515 = vunpack.c.h.b16 %v3967
    %v4516 = vunpack.c.l.b16 %v3968
    %v4517 = vunpack.c.h.b16 %v3968
    %v4518 = vunpack.c.l.b16 %v3969
    %v4519 = vunpack.c.h.b16 %v3969
    %v4520 = vunpack.c.l.b16 %v3970
    %v4521 = vunpack.c.h.b16 %v3970
    %v4522 = vunpack.c.l.b16 %v3971
    %v4523 = vunpack.c.h.b16 %v3971
    %v4524 = vunpack.c.l.b16 %v3972
    %v4525 = vunpack.c.h.b16 %v3972
    %v4526 = vunpack.c.l.b16 %v3973
    %v4527 = vunpack.c.h.b16 %v3973
    %v4528 = vunpack.c.l.b16 %v3974
    %v4529 = vunpack.c.h.b16 %v3974
    %v4530 = vunpack.c.l.b16 %v3975
    %v4531 = vunpack.c.h.b16 %v3975
    %v4532 = vunpack.c.l.b16 %v3976
    %v4533 = vunpack.c.h.b16 %v3976
    %v4534 = vunpack.c.l.b16 %v3977
    %v4535 = vunpack.c.h.b16 %v3977
    %v4536 = vunpack.c.l.b16 %v3978
    %v4537 = vunpack.c.h.b16 %v3978
    %v4538 = vunpack.c.l.b16 %v3979
    %v4539 = vunpack.c.h.b16 %v3979
    %v4540 = vunpack.c.l.b16 %v3980
    %v4541 = vunpack.c.h.b16 %v3980
    %v4542 = vunpack.c.l.b16 %v3981
    %v4543 = vunpack.c.h.b16 %v3981
    %v4544 = vunpack.c.l.b16 %v3982
    %v4545 = vunpack.c.h.b16 %v3982
    %v4546 = vunpack.c.l.b16 %v3983
    %v4547 = vunpack.c.h.b16 %v3983
    %v4548 = vunpack.c.l.b16 %v3984
    %v4549 = vunpack.c.h.b16 %v3984
    %v4550 = vunpack.c.l.b16 %v3985
    %v4551 = vunpack.c.h.b16 %v3985
    %v4552 = vunpack.c.l.b16 %v3986
    %v4553 = vunpack.c.h.b16 %v3986
    %v4554 = vunpack.c.l.b16 %v3987
    %v4555 = vunpack.c.h.b16 %v3987
    %v4556 = vunpack.c.l.b16 %v3988
    %v4557 = vunpack.c.h.b16 %v3988
    %v4558 = vunpack.c.l.b16 %v3989
    %v4559 = vunpack.c.h.b16 %v3989
    %v4560 = vunpack.c.l.b16 %v3990
    %v4561 = vunpack.c.h.b16 %v3990
    %v4562 = vunpack.c.l.b16 %v3991
    %v4563 = vunpack.c.h.b16 %v3991
    %v4564 = vunpack.c.l.b16 %v3992
    %v4565 = vunpack.c.h.b16 %v3992
    %v4566 = vunpack.c.l.b16 %v3993
    %v4567 = vunpack.c.h.b16 %v3993
    %v4568 = vunpack.c.l.b16 %v3994
    %v4569 = vunpack.c.h.b16 %v3994
    %v4570 = vunpack.c.l.b16 %v3995
    %v4571 = vunpack.c.h.b16 %v3995
    %v4572 = vunpack.c.l.b16 %v3996
    %v4573 = vunpack.c.h.b16 %v3996
    %v4574 = vunpack.c.l.b16 %v3997
    %v4575 = vunpack.c.h.b16 %v3997
    %v4576 = vunpack.c.l.b16 %v3998
    %v4577 = vunpack.c.h.b16 %v3998
    %v4578 = vunpack.c.l.b16 %v3999
    %v4579 = vunpack.c.h.b16 %v3999
    %v4580 = vunpack.c.l.b16 %v4000
    %v4581 = vunpack.c.h.b16 %v4000
    %v4582 = vunpack.c.l.b16 %v4001
    %v4583 = vunpack.c.h.b16 %v4001
    %v4584 = vunpack.c.l.b16 %v4002
    %v4585 = vunpack.c.h.b16 %v4002
    %v4586 = vunpack.c.l.b16 %v4003
    %v4587 = vunpack.c.h.b16 %v4003
    %v4588 = vunpack.c.l.b16 %v4004
    %v4589 = vunpack.c.h.b16 %v4004
    %v4590 = vunpack.c.l.b16 %v4005
    %v4591 = vunpack.c.h.b16 %v4005
    %v4592 = vunpack.c.l.b16 %v4006
    %v4593 = vunpack.c.h.b16 %v4006
    %v4594 = vunpack.c.l.b16 %v4007
    %v4595 = vunpack.c.h.b16 %v4007
    %v4596 = vunpack.c.l.b16 %v4008
    %v4597 = vunpack.c.h.b16 %v4008
    %v4598 = vunpack.c.l.b16 %v4009
    %v4599 = vunpack.c.h.b16 %v4009
    %v4600 = vunpack.c.l.b16 %v4010
    %v4601 = vunpack.c.h.b16 %v4010
    %v4602 = vunpack.c.l.b16 %v4011
    %v4603 = vunpack.c.h.b16 %v4011
    %v4604 = vunpack.c.l.b16 %v4012
    %v4605 = vunpack.c.h.b16 %v4012
    %v4606 = vunpack.c.l.b16 %v4013
    %v4607 = vunpack.c.h.b16 %v4013
    %v4608 = vunpack.c.l.b16 %v4014
    %v4609 = vunpack.c.h.b16 %v4014
    %v4610 = vunpack.c.l.b16 %v4015
    %v4611 = vunpack.c.h.b16 %v4015
    %v4612 = vunpack.c.l.b16 %v4016
    %v4613 = vunpack.c.h.b16 %v4016
    %v4614 = vunpack.c.l.b16 %v4017
    %v4615 = vunpack.c.h.b16 %v4017
    %v4616 = vunpack.c.l.b16 %v4018
    %v4617 = vunpack.c.h.b16 %v4018
    %v4618 = vunpack.c.l.b16 %v4019
    %v4619 = vunpack.c.h.b16 %v4019
    %v4620 = vunpack.c.l.b16 %v4020
    %v4621 = vunpack.c.h.b16 %v4020
    %v4622 = vunpack.c.l.b16 %v4021
    %v4623 = vunpack.c.h.b16 %v4021
    %v4624 = vunpack.c.l.b16 %v4022
    %v4625 = vunpack.c.h.b16 %v4022
    %v4626 = vunpack.c.l.b16 %v4023
    %v4627 = vunpack.c.h.b16 %v4023
    %v4628 = vunpack.c.l.b16 %v4024
    %v4629 = vunpack.c.h.b16 %v4024
    %v4630 = vunpack.c.l.b16 %v4025
    %v4631 = vunpack.c.h.b16 %v4025
    %v4632 = vunpack.c.l.b16 %v4026
    %v4633 = vunpack.c.h.b16 %v4026
    %v4634 = vunpack.c.l.b16 %v4027
    %v4635 = vunpack.c.h.b16 %v4027
    %v4636 = vunpack.c.l.b16 %v4028
    %v4637 = vunpack.c.h.b16 %v4028
    %v4638 = vunpack.c.l.b16 %v4029
    %v4639 = vunpack.c.h.b16 %v4029
    %v4640 = vunpack.c.l.b16 %v4030
    %v4641 = vunpack.c.h.b16 %v4030
    %v4642 = vunpack.c.l.b16 %v4031
    %v4643 = vunpack.c.h.b16 %v4031
    %v4644 = vunpack.c.l.b16 %v4032
    %v4645 = vunpack.c.h.b16 %v4032
    %v4646 = vunpack.c.l.b16 %v4033
    %v4647 = vunpack.c.h.b16 %v4033
    %v4648 = vunpack.c.l.b16 %v4034
    %v4649 = vunpack.c.h.b16 %v4034
    %v4650 = vunpack.c.l.b16 %v4035
    %v4651 = vunpack.c.h.b16 %v4035
    %v4652 = vunpack.c.l.b16 %v4036
    %v4653 = vunpack.c.h.b16 %v4036
    %v4654 = vunpack.c.l.b16 %v4037
    %v4655 = vunpack.c.h.b16 %v4037
    %v4656 = vunpack.c.l.b16 %v4038
    %v4657 = vunpack.c.h.b16 %v4038
    %v4658 = vunpack.c.l.b16 %v4039
    %v4659 = vunpack.c.h.b16 %v4039
    %v4660 = vunpack.c.l.b16 %v4040
    %v4661 = vunpack.c.h.b16 %v4040
    %v4662 = vunpack.c.l.b16 %v4041
    %v4663 = vunpack.c.h.b16 %v4041
    %v4664 = vunpack.c.l.b16 %v4042
    %v4665 = vunpack.c.h.b16 %v4042
    %v4666 = vunpack.c.l.b16 %v4043
    %v4667 = vunpack.c.h.b16 %v4043
    %v4668 = vunpack.c.l.b16 %v4044
    %v4669 = vunpack.c.h.b16 %v4044
    %v4670 = vunpack.c.l.b16 %v4045
    %v4671 = vunpack.c.h.b16 %v4045
    %v4672 = vunpack.c.l.b16 %v4046
    %v4673 = vunpack.c.h.b16 %v4046
    %v4674 = vunpack.c.l.b16 %v4047
    %v4675 = vunpack.c.h.b16 %v4047
    %v4676 = vunpack.c.l.b16 %v4048
    %v4677 = vunpack.c.h.b16 %v4048
    %v4678 = vunpack.c.l.b16 %v4049
    %v4679 = vunpack.c.h.b16 %v4049
    %v4680 = vunpack.c.l.b16 %v4050
    %v4681 = vunpack.c.h.b16 %v4050
    %v4682 = vunpack.c.l.b16 %v4051
    %v4683 = vunpack.c.h.b16 %v4051
    %v4684 = vunpack.c.l.b16 %v4052
    %v4685 = vunpack.c.h.b16 %v4052
    %v4686 = vunpack.c.l.b16 %v4053
    %v4687 = vunpack.c.h.b16 %v4053
    %v4688 = vunpack.c.l.b16 %v4054
    %v4689 = vunpack.c.h.b16 %v4054
    %v4690 = vunpack.c.l.b16 %v4055
    %v4691 = vunpack.c.h.b16 %v4055
    %v4692 = vunpack.c.l.b16 %v4056
    %v4693 = vunpack.c.h.b16 %v4056
    %v4694 = vunpack.c.l.b16 %v4057
    %v4695 = vunpack.c.h.b16 %v4057
    %v4696 = vunpack.c.l.b16 %v4058
    %v4697 = vunpack.c.h.b16 %v4058
    %v4698 = vunpack.c.l.b16 %v4059
    %v4699 = vunpack.c.h.b16 %v4059
    %v4700 = vunpack.c.l.b16 %v4060
    %v4701 = vunpack.c.h.b16 %v4060
    %v4702 = vunpack.c.l.b16 %v4061
    %v4703 = vunpack.c.h.b16 %v4061
    %v4704 = vunpack.c.l.b16 %v4062
    %v4705 = vunpack.c.h.b16 %v4062
    %v4706 = vunpack.c.l.b16 %v4063
    %v4707 = vunpack.c.h.b16 %v4063
    %v4708 = vunpack.c.l.b16 %v4064
    %v4709 = vunpack.c.h.b16 %v4064
    %v4710 = vunpack.c.l.b16 %v4065
    %v4711 = vunpack.c.h.b16 %v4065
    %v4712 = vunpack.c.l.b16 %v4066
    %v4713 = vunpack.c.h.b16 %v4066
    %v4714 = vunpack.c.l.b16 %v4067
    %v4715 = vunpack.c.h.b16 %v4067
    %v4716 = vunpack.c.l.b16 %v4068
    %v4717 = vunpack.c.h.b16 %v4068
    %v4718 = vunpack.c.l.b16 %v4069
    %v4719 = vunpack.c.h.b16 %v4069
    %v4720 = vunpack.c.l.b16 %v4070
    %v4721 = vunpack.c.h.b16 %v4070
    %v4722 = vunpack.c.l.b16 %v4071
    %v4723 = vunpack.c.h.b16 %v4071
    %v4724 = vunpack.c.l.b16 %v4072
    %v4725 = vunpack.c.h.b16 %v4072
    %v4726 = vunpack.c.l.b16 %v4073
    %v4727 = vunpack.c.h.b16 %v4073
    %v4728 = vunpack.c.l.b16 %v4074
    %v4729 = vunpack.c.h.b16 %v4074
    %v4730 = vunpack.c.l.b16 %v4075
    %v4731 = vunpack.c.h.b16 %v4075
    %v4732 = vunpack.c.l.b16 %v4076
    %v4733 = vunpack.c.h.b16 %v4076
    %v4734 = vunpack.c.l.b16 %v4077
    %v4735 = vunpack.c.h.b16 %v4077
    %v4736 = vunpack.c.l.b16 %v4078
    %v4737 = vunpack.c.h.b16 %v4078
    %v4738 = vunpack.c.l.b16 %v4079
    %v4739 = vunpack.c.h.b16 %v4079
    %v4740 = vunpack.c.l.b16 %v4080
    %v4741 = vunpack.c.h.b16 %v4080
    %v4742 = vunpack.c.l.b16 %v4081
    %v4743 = vunpack.c.h.b16 %v4081
    %v4744 = vunpack.c.l.b16 %v4082
    %v4745 = vunpack.c.h.b16 %v4082
    %v4746 = vunpack.c.l.b16 %v4083
    %v4747 = vunpack.c.h.b16 %v4083
    %v4748 = vunpack.c.l.b16 %v4084
    %v4749 = vunpack.c.h.b16 %v4084
    %v4750 = vunpack.c.l.b16 %v4085
    %v4751 = vunpack.c.h.b16 %v4085
    %v4752 = vunpack.c.l.b16 %v4086
    %v4753 = vunpack.c.h.b16 %v4086
    %v4754 = vunpack.c.l.b16 %v4087
    %v4755 = vunpack.c.h.b16 %v4087
    %v4756 = vunpack.c.l.b16 %v4088
    %v4757 = vunpack.c.h.b16 %v4088
    %v4758 = vunpack.c.l.b16 %v4089
    %v4759 = vunpack.c.h.b16 %v4089
    %v4760 = vunpack.c.l.b16 %v4090
    %v4761 = vunpack.c.h.b16 %v4090
    %v4762 = vunpack.c.l.b16 %v4091
    %v4763 = vunpack.c.h.b16 %v4091
    %v4764 = vpack.c.b16 %v4320, %v4316
    %v4765 = vpack.c.b16 %v4321, %v4317
    %v4766 = vpack.c.b16 %v4322, %v4318
    %v4767 = vpack.c.b16 %v4323, %v4319
    %v4768 = vpack.c.b16 %v4328, %v4324
    %v4769 = vpack.c.b16 %v4329, %v4325
    %v4770 = vpack.c.b16 %v4330, %v4326
    %v4771 = vpack.c.b16 %v4331, %v4327
    %v4772 = vpack.c.b16 %v4336, %v4332
    %v4773 = vpack.c.b16 %v4337, %v4333
    %v4774 = vpack.c.b16 %v4338, %v4334
    %v4775 = vpack.c.b16 %v4339, %v4335
    %v4776 = vpack.c.b16 %v4344, %v4340
    %v4777 = vpack.c.b16 %v4345, %v4341
    %v4778 = vpack.c.b16 %v4346, %v4342
    %v4779 = vpack.c.b16 %v4347, %v4343
    %v4780 = vpack.c.b16 %v4352, %v4348
    %v4781 = vpack.c.b16 %v4353, %v4349
    %v4782 = vpack.c.b16 %v4354, %v4350
    %v4783 = vpack.c.b16 %v4355, %v4351
    %v4784 = vpack.c.b16 %v4360, %v4356
    %v4785 = vpack.c.b16 %v4361, %v4357
    %v4786 = vpack.c.b16 %v4362, %v4358
    %v4787 = vpack.c.b16 %v4363, %v4359
    %v4788 = vpack.c.b16 %v4368, %v4364
    %v4789 = vpack.c.b16 %v4369, %v4365
    %v4790 = vpack.c.b16 %v4370, %v4366
    %v4791 = vpack.c.b16 %v4371, %v4367
    %v4792 = vpack.c.b16 %v4376, %v4372
    %v4793 = vpack.c.b16 %v4377, %v4373
    %v4794 = vpack.c.b16 %v4378, %v4374
    %v4795 = vpack.c.b16 %v4379, %v4375
    %v4796 = vpack.c.b16 %v4384, %v4380
    %v4797 = vpack.c.b16 %v4385, %v4381
    %v4798 = vpack.c.b16 %v4386, %v4382
    %v4799 = vpack.c.b16 %v4387, %v4383
    %v4800 = vpack.c.b16 %v4392, %v4388
    %v4801 = vpack.c.b16 %v4393, %v4389
    %v4802 = vpack.c.b16 %v4394, %v4390
    %v4803 = vpack.c.b16 %v4395, %v4391
    %v4804 = vpack.c.b16 %v4400, %v4396
    %v4805 = vpack.c.b16 %v4401, %v4397
    %v4806 = vpack.c.b16 %v4402, %v4398
    %v4807 = vpack.c.b16 %v4403, %v4399
    %v4808 = vpack.c.b16 %v4408, %v4404
    %v4809 = vpack.c.b16 %v4409, %v4405
    %v4810 = vpack.c.b16 %v4410, %v4406
    %v4811 = vpack.c.b16 %v4411, %v4407
    %v4812 = vpack.c.b16 %v4416, %v4412
    %v4813 = vpack.c.b16 %v4417, %v4413
    %v4814 = vpack.c.b16 %v4418, %v4414
    %v4815 = vpack.c.b16 %v4419, %v4415
    %v4816 = vpack.c.b16 %v4424, %v4420
    %v4817 = vpack.c.b16 %v4425, %v4421
    %v4818 = vpack.c.b16 %v4426, %v4422
    %v4819 = vpack.c.b16 %v4427, %v4423
    %v4820 = vpack.c.b16 %v4432, %v4428
    %v4821 = vpack.c.b16 %v4433, %v4429
    %v4822 = vpack.c.b16 %v4434, %v4430
    %v4823 = vpack.c.b16 %v4435, %v4431
    %v4824 = vpack.c.b16 %v4440, %v4436
    %v4825 = vpack.c.b16 %v4441, %v4437
    %v4826 = vpack.c.b16 %v4442, %v4438
    %v4827 = vpack.c.b16 %v4443, %v4439
    %v4828 = vpack.c.b16 %v4448, %v4444
    %v4829 = vpack.c.b16 %v4449, %v4445
    %v4830 = vpack.c.b16 %v4450, %v4446
    %v4831 = vpack.c.b16 %v4451, %v4447
    %v4832 = vpack.c.b16 %v4456, %v4452
    %v4833 = vpack.c.b16 %v4457, %v4453
    %v4834 = vpack.c.b16 %v4458, %v4454
    %v4835 = vpack.c.b16 %v4459, %v4455
    %v4836 = vpack.c.b16 %v4464, %v4460
    %v4837 = vpack.c.b16 %v4465, %v4461
    %v4838 = vpack.c.b16 %v4466, %v4462
    %v4839 = vpack.c.b16 %v4467, %v4463
    %v4840 = vpack.c.b16 %v4472, %v4468
    %v4841 = vpack.c.b16 %v4473, %v4469
    %v4842 = vpack.c.b16 %v4474, %v4470
    %v4843 = vpack.c.b16 %v4475, %v4471
    %v4844 = vpack.c.b16 %v4480, %v4476
    %v4845 = vpack.c.b16 %v4481, %v4477
    %v4846 = vpack.c.b16 %v4482, %v4478
    %v4847 = vpack.c.b16 %v4483, %v4479
    %v4848 = vpack.c.b16 %v4488, %v4484
    %v4849 = vpack.c.b16 %v4489, %v4485
    %v4850 = vpack.c.b16 %v4490, %v4486
    %v4851 = vpack.c.b16 %v4491, %v4487
    %v4852 = vpack.c.b16 %v4496, %v4492
    %v4853 = vpack.c.b16 %v4497, %v4493
    %v4854 = vpack.c.b16 %v4498, %v4494
    %v4855 = vpack.c.b16 %v4499, %v4495
    %v4856 = vpack.c.b16 %v4504, %v4500
    %v4857 = vpack.c.b16 %v4505, %v4501
    %v4858 = vpack.c.b16 %v4506, %v4502
    %v4859 = vpack.c.b16 %v4507, %v4503
    %v4860 = vpack.c.b16 %v4512, %v4508
    %v4861 = vpack.c.b16 %v4513, %v4509
    %v4862 = vpack.c.b16 %v4514, %v4510
    %v4863 = vpack.c.b16 %v4515, %v4511
    %v4864 = vpack.c.b16 %v4520, %v4516
    %v4865 = vpack.c.b16 %v4521, %v4517
    %v4866 = vpack.c.b16 %v4522, %v4518
    %v4867 = vpack.c.b16 %v4523, %v4519
    %v4868 = vpack.c.b16 %v4528, %v4524
    %v4869 = vpack.c.b16 %v4529, %v4525
    %v4870 = vpack.c.b16 %v4530, %v4526
    %v4871 = vpack.c.b16 %v4531, %v4527
    %v4872 = vpack.c.b16 %v4536, %v4532
    %v4873 = vpack.c.b16 %v4537, %v4533
    %v4874 = vpack.c.b16 %v4538, %v4534
    %v4875 = vpack.c.b16 %v4539, %v4535
    %v4876 = vpack.c.b16 %v4544, %v4540
    %v4877 = vpack.c.b16 %v4545, %v4541
    %v4878 = vpack.c.b16 %v4546, %v4542
    %v4879 = vpack.c.b16 %v4547, %v4543
    %v4880 = vpack.c.b16 %v4552, %v4548
    %v4881 = vpack.c.b16 %v4553, %v4549
    %v4882 = vpack.c.b16 %v4554, %v4550
    %v4883 = vpack.c.b16 %v4555, %v4551
    %v4884 = vpack.c.b16 %v4560, %v4556
    %v4885 = vpack.c.b16 %v4561, %v4557
    %v4886 = vpack.c.b16 %v4562, %v4558
    %v4887 = vpack.c.b16 %v4563, %v4559
    %v4888 = vpack.c.b16 %v4568, %v4564
    %v4889 = vpack.c.b16 %v4569, %v4565
    %v4890 = vpack.c.b16 %v4570, %v4566
    %v4891 = vpack.c.b16 %v4571, %v4567
    %v4892 = vpack.c.b16 %v4576, %v4572
    %v4893 = vpack.c.b16 %v4577, %v4573
    %v4894 = vpack.c.b16 %v4578, %v4574
    %v4895 = vpack.c.b16 %v4579, %v4575
    %v4896 = vpack.c.b16 %v4584, %v4580
    %v4897 = vpack.c.b16 %v4585, %v4581
    %v4898 = vpack.c.b16 %v4586, %v4582
    %v4899 = vpack.c.b16 %v4587, %v4583
    %v4900 = vpack.c.b16 %v4592, %v4588
    %v4901 = vpack.c.b16 %v4593, %v4589
    %v4902 = vpack.c.b16 %v4594, %v4590
    %v4903 = vpack.c.b16 %v4595, %v4591
    %v4904 = vpack.c.b16 %v4600, %v4596
    %v4905 = vpack.c.b16 %v4601, %v4597
    %v4906 = vpack.c.b16 %v4602, %v4598
    %v4907 = vpack.c.b16 %v4603, %v4599
    %v4908 = vpack.c.b16 %v4608, %v4604
    %v4909 = vpack.c.b16 %v4609, %v4605
    %v4910 = vpack.c.b16 %v4610, %v4606
    %v4911 = vpack.c.b16 %v4611, %v4607
    %v4912 = vpack.c.b16 %v4616, %v4612
    %v4913 = vpack.c.b16 %v4617, %v4613
    %v4914 = vpack.c.b16 %v4618, %v4614
    %v4915 = vpack.c.b16 %v4619, %v4615
    %v4916 = vpack.c.b16 %v4624, %v4620
    %v4917 = vpack.c.b16 %v4625, %v4621
    %v4918 = vpack.c.b16 %v4626, %v4622
    %v4919 = vpack.c.b16 %v4627, %v4623
    %v4920 = vpack.c.b16 %v4632, %v4628
    %v4921 = vpack.c.b16 %v4633, %v4629
    %v4922 = vpack.c.b16 %v4634, %v4630
    %v4923 = vpack.c.b16 %v4635, %v4631
    %v4924 = vpack.c.b16 %v4640, %v4636
    %v4925 = vpack.c.b16 %v4641, %v4637
    %v4926 = vpack.c.b16 %v4642, %v4638
    %v4927 = vpack.c.b16 %v4643, %v4639
    %v4928 = vpack.c.b16 %v4648, %v4644
    %v4929 = vpack.c.b16 %v4649, %v4645
    %v4930 = vpack.c.b16 %v4650, %v4646
    %v4931 = vpack.c.b16 %v4651, %v4647
    %v4932 = vpack.c.b16 %v4656, %v4652
    %v4933 = vpack.c.b16 %v4657, %v4653
    %v4934 = vpack.c.b16 %v4658, %v4654
    %v4935 = vpack.c.b16 %v4659, %v4655
    %v4936 = vpack.c.b16 %v4664, %v4660
    %v4937 = vpack.c.b16 %v4665, %v4661
    %v4938 = vpack.c.b16 %v4666, %v4662
    %v4939 = vpack.c.b16 %v4667, %v4663
    %v4940 = vpack.c.b16 %v4672, %v4668
    %v4941 = vpack.c.b16 %v4673, %v4669
    %v4942 = vpack.c.b16 %v4674, %v4670
    %v4943 = vpack.c.b16 %v4675, %v4671
    %v4944 = vpack.c.b16 %v4680, %v4676
    %v4945 = vpack.c.b16 %v4681, %v4677
    %v4946 = vpack.c.b16 %v4682, %v4678
    %v4947 = vpack.c.b16 %v4683, %v4679
    %v4948 = vpack.c.b16 %v4688, %v4684
    %v4949 = vpack.c.b16 %v4689, %v4685
    %v4950 = vpack.c.b16 %v4690, %v4686
    %v4951 = vpack.c.b16 %v4691, %v4687
    %v4952 = vpack.c.b16 %v4696, %v4692
    %v4953 = vpack.c.b16 %v4697, %v4693
    %v4954 = vpack.c.b16 %v4698, %v4694
    %v4955 = vpack.c.b16 %v4699, %v4695
    %v4956 = vpack.c.b16 %v4704, %v4700
    %v4957 = vpack.c.b16 %v4705, %v4701
    %v4958 = vpack.c.b16 %v4706, %v4702
    %v4959 = vpack.c.b16 %v4707, %v4703
    %v4960 = vpack.c.b16 %v4712, %v4708
    %v4961 = vpack.c.b16 %v4713, %v4709
    %v4962 = vpack.c.b16 %v4714, %v4710
    %v4963 = vpack.c.b16 %v4715, %v4711
    %v4964 = vpack.c.b16 %v4720, %v4716
    %v4965 = vpack.c.b16 %v4721, %v4717
    %v4966 = vpack.c.b16 %v4722, %v4718
    %v4967 = vpack.c.b16 %v4723, %v4719
    %v4968 = vpack.c.b16 %v4728, %v4724
    %v4969 = vpack.c.b16 %v4729, %v4725
    %v4970 = vpack.c.b16 %v4730, %v4726
    %v4971 = vpack.c.b16 %v4731, %v4727
    %v4972 = vpack.c.b16 %v4736, %v4732
    %v4973 = vpack.c.b16 %v4737, %v4733
    %v4974 = vpack.c.b16 %v4738, %v4734
    %v4975 = vpack.c.b16 %v4739, %v4735
    %v4976 = vpack.c.b16 %v4744, %v4740
    %v4977 = vpack.c.b16 %v4745, %v4741
    %v4978 = vpack.c.b16 %v4746, %v4742
    %v4979 = vpack.c.b16 %v4747, %v4743
    %v4980 = vpack.c.b16 %v4752, %v4748
    %v4981 = vpack.c.b16 %v4753, %v4749
    %v4982 = vpack.c.b16 %v4754, %v4750
    %v4983 = vpack.c.b16 %v4755, %v4751
    %v4984 = vpack.c.b16 %v4760, %v4756
    %v4985 = vpack.c.b16 %v4761, %v4757
    %v4986 = vpack.c.b16 %v4762, %v4758
    %v4987 = vpack.c.b16 %v4763, %v4759
    %5212 = vmatprep.subr.bf16.mxu0 %v4765
    %5213 = vmatpush1.bf16.msra.mxu0 %v4764
    %5214 = vmatprep.subr.bf16.mxu0 %v4769
    %5215 = vmatpush1.bf16.msra.mxu0 %v4768
    %5216 = vmatprep.subr.bf16.mxu0 %v4773
    %5217 = vmatpush1.bf16.msra.mxu0 %v4772
    %5218 = vmatprep.subr.bf16.mxu0 %v4777
    %5219 = vmatpush1.bf16.msra.mxu0 %v4776
    %5220 = vmatprep.subr.bf16.mxu0 %v4781
    %5221 = vmatpush1.bf16.msra.mxu0 %v4780
    %5222 = vmatprep.subr.bf16.mxu0 %v4785
    %5223 = vmatpush1.bf16.msra.mxu0 %v4784
    %5224 = vmatprep.subr.bf16.mxu0 %v4789
    %5225 = vmatpush1.bf16.msra.mxu0 %v4788
    %5226 = vmatprep.subr.bf16.mxu0 %v4793
    %5227 = vmatpush1.bf16.msra.mxu0 %v4792
    %5228 = vmatprep.subr.bf16.mxu0 %v4797
    %5229 = vmatpush1.bf16.msra.mxu0 %v4796
    %5230 = vmatprep.subr.bf16.mxu0 %v4801
    %5231 = vmatpush1.bf16.msra.mxu0 %v4800
    %5232 = vmatprep.subr.bf16.mxu0 %v4805
    %5233 = vmatpush1.bf16.msra.mxu0 %v4804
    %5234 = vmatprep.subr.bf16.mxu0 %v4809
    %5235 = vmatpush1.bf16.msra.mxu0 %v4808
    %5236 = vmatprep.subr.bf16.mxu0 %v4813
    %5237 = vmatpush1.bf16.msra.mxu0 %v4812
    %5238 = vmatprep.subr.bf16.mxu0 %v4817
    %5239 = vmatpush1.bf16.msra.mxu0 %v4816
    %5240 = vmatprep.subr.bf16.mxu0 %v4821
    %5241 = vmatpush1.bf16.msra.mxu0 %v4820
    %5242 = vmatprep.subr.bf16.mxu0 %v4825
    %5243 = vmatpush1.bf16.msra.mxu0 %v4824
    %5244 = vmatprep.mubr.bf16.mxu0 %v3862
    %5245 = vmatmul.mubr.bf16.gmra.mrb[0].mxu0 %v3861
    %v5246 = vpop.f32.mrb[0].mxu0
    %v5247 = vadd.f32 0.0, %v5246
    %v5248 = vpop.f32.mrb[0].mxu0
    %v5249 = vadd.f32 0.0, %v5248
    %v5250 = vpop.f32.mrb[0].mxu0
    %v5251 = vadd.f32 0.0, %v5250
    %v5252 = vpop.f32.mrb[0].mxu0
    %v5253 = vadd.f32 0.0, %v5252
    %5254 = vdwg.mxu0
    %5255 = vmatprep.subr.bf16.mxu0 %v4829
    %5256 = vmatpush1.bf16.msra.mxu0 %v4828
    %5257 = vmatprep.subr.bf16.mxu0 %v4833
    %5258 = vmatpush1.bf16.msra.mxu0 %v4832
    %5259 = vmatprep.subr.bf16.mxu0 %v4837
    %5260 = vmatpush1.bf16.msra.mxu0 %v4836
    %5261 = vmatprep.subr.bf16.mxu0 %v4841
    %5262 = vmatpush1.bf16.msra.mxu0 %v4840
    %5263 = vmatprep.subr.bf16.mxu0 %v4845
    %5264 = vmatpush1.bf16.msra.mxu0 %v4844
    %5265 = vmatprep.subr.bf16.mxu0 %v4849
    %5266 = vmatpush1.bf16.msra.mxu0 %v4848
    %5267 = vmatprep.subr.bf16.mxu0 %v4853
    %5268 = vmatpush1.bf16.msra.mxu0 %v4852
    %5269 = vmatprep.subr.bf16.mxu0 %v4857
    %5270 = vmatpush1.bf16.msra.mxu0 %v4856
    %5271 = vmatprep.subr.bf16.mxu0 %v4861
    %5272 = vmatpush1.bf16.msra.mxu0 %v4860
    %5273 = vmatprep.subr.bf16.mxu0 %v4865
    %5274 = vmatpush1.bf16.msra.mxu0 %v4864
    %5275 = vmatprep.subr.bf16.mxu0 %v4869
    %5276 = vmatpush1.bf16.msra.mxu0 %v4868
    %5277 = vmatprep.subr.bf16.mxu0 %v4873
    %5278 = vmatpush1.bf16.msra.mxu0 %v4872
    %5279 = vmatprep.subr.bf16.mxu0 %v4877
    %5280 = vmatpush1.bf16.msra.mxu0 %v4876
    %5281 = vmatprep.subr.bf16.mxu0 %v4881
    %5282 = vmatpush1.bf16.msra.mxu0 %v4880
    %5283 = vmatprep.subr.bf16.mxu0 %v4885
    %5284 = vmatpush1.bf16.msra.mxu0 %v4884
    %5285 = vmatprep.subr.bf16.mxu0 %v4889
    %5286 = vmatpush1.bf16.msra.mxu0 %v4888
    %5287 = vmatprep.mubr.bf16.mxu0 %v3864
    %5288 = vmatmul.mubr.bf16.gmra.mrb[0].mxu0 %v3863
    %v5289 = vpop.f32.mrb[0].mxu0
    %v5290 = vadd.f32 %v5247, %v5289
    %v5291 = vpop.f32.mrb[0].mxu0
    %v5292 = vadd.f32 %v5249, %v5291
    %v5293 = vpop.f32.mrb[0].mxu0
    %v5294 = vadd.f32 %v5251, %v5293
    %v5295 = vpop.f32.mrb[0].mxu0
    %v5296 = vadd.f32 %v5253, %v5295
    %5297 = vdwg.mxu0
    %5298 = vmatprep.subr.bf16.mxu0 %v4893
    %5299 = vmatpush1.bf16.msra.mxu0 %v4892
    %5300 = vmatprep.subr.bf16.mxu0 %v4897
    %5301 = vmatpush1.bf16.msra.mxu0 %v4896
    %5302 = vmatprep.subr.bf16.mxu0 %v4901
    %5303 = vmatpush1.bf16.msra.mxu0 %v4900
    %5304 = vmatprep.subr.bf16.mxu0 %v4905
    %5305 = vmatpush1.bf16.msra.mxu0 %v4904
    %5306 = vmatprep.subr.bf16.mxu0 %v4909
    %5307 = vmatpush1.bf16.msra.mxu0 %v4908
    %5308 = vmatprep.subr.bf16.mxu0 %v4913
    %5309 = vmatpush1.bf16.msra.mxu0 %v4912
    %5310 = vmatprep.subr.bf16.mxu0 %v4917
    %5311 = vmatpush1.bf16.msra.mxu0 %v4916
    %5312 = vmatprep.subr.bf16.mxu0 %v4921
    %5313 = vmatpush1.bf16.msra.mxu0 %v4920
    %5314 = vmatprep.subr.bf16.mxu0 %v4925
    %5315 = vmatpush1.bf16.msra.mxu0 %v4924
    %5316 = vmatprep.subr.bf16.mxu0 %v4929
    %5317 = vmatpush1.bf16.msra.mxu0 %v4928
    %5318 = vmatprep.subr.bf16.mxu0 %v4933
    %5319 = vmatpush1.bf16.msra.mxu0 %v4932
    %5320 = vmatprep.subr.bf16.mxu0 %v4937
    %5321 = vmatpush1.bf16.msra.mxu0 %v4936
    %5322 = vmatprep.subr.bf16.mxu0 %v4941
    %5323 = vmatpush1.bf16.msra.mxu0 %v4940
    %5324 = vmatprep.subr.bf16.mxu0 %v4945
    %5325 = vmatpush1.bf16.msra.mxu0 %v4944
    %5326 = vmatprep.subr.bf16.mxu0 %v4949
    %5327 = vmatpush1.bf16.msra.mxu0 %v4948
    %5328 = vmatprep.subr.bf16.mxu0 %v4953
    %5329 = vmatpush1.bf16.msra.mxu0 %v4952
    %5330 = vmatprep.mubr.bf16.mxu0 %v3866
    %5331 = vmatmul.mubr.bf16.gmra.mrb[0].mxu0 %v3865
    %v5332 = vpop.f32.mrb[0].mxu0
    %v5333 = vadd.f32 %v5290, %v5332
    %v5334 = vpop.f32.mrb[0].mxu0
    %v5335 = vadd.f32 %v5292, %v5334
    %v5336 = vpop.f32.mrb[0].mxu0
    %v5337 = vadd.f32 %v5294, %v5336
    %v5338 = vpop.f32.mrb[0].mxu0
    %v5339 = vadd.f32 %v5296, %v5338
    %5340 = vdwg.mxu0
    %5341 = vmatprep.subr.bf16.mxu0 %v4957
    %5342 = vmatpush1.bf16.msra.mxu0 %v4956
    %5343 = vmatprep.subr.bf16.mxu0 %v4961
    %5344 = vmatpush1.bf16.msra.mxu0 %v4960
    %5345 = vmatprep.subr.bf16.mxu0 %v4965
    %5346 = vmatpush1.bf16.msra.mxu0 %v4964
    %5347 = vmatprep.subr.bf16.mxu0 %v4969
    %5348 = vmatpush1.bf16.msra.mxu0 %v4968
    %5349 = vmatprep.subr.bf16.mxu0 %v4973
    %5350 = vmatpush1.bf16.msra.mxu0 %v4972
    %5351 = vmatprep.subr.bf16.mxu0 %v4977
    %5352 = vmatpush1.bf16.msra.mxu0 %v4976
    %5353 = vmatprep.subr.bf16.mxu0 %v4981
    %5354 = vmatpush1.bf16.msra.mxu0 %v4980
    %5355 = vmatprep.subr.bf16.mxu0 %v4985
    %5356 = vmatpush1.bf16.msra.mxu0 %v4984
    %5357 = vmatprep.subr.bf16.mxu0 0
    %5358 = vmatpush1.bf16.msra.mxu0 0
    %5359 = vmatprep.subr.bf16.mxu0 0
    %5360 = vmatpush1.bf16.msra.mxu0 0
    %5361 = vmatprep.subr.bf16.mxu0 0
    %5362 = vmatpush1.bf16.msra.mxu0 0
    %5363 = vmatprep.subr.bf16.mxu0 0
    %5364 = vmatpush1.bf16.msra.mxu0 0
    %5365 = vmatprep.subr.bf16.mxu0 0
    %5366 = vmatpush1.bf16.msra.mxu0 0
    %5367 = vmatprep.subr.bf16.mxu0 0
    %5368 = vmatpush1.bf16.msra.mxu0 0
    %5369 = vmatprep.subr.bf16.mxu0 0
    %5370 = vmatpush1.bf16.msra.mxu0 0
    %5371 = vmatprep.subr.bf16.mxu0 0
    %5372 = vmatpush1.bf16.msra.mxu0 0
    %5373 = vmatprep.mubr.bf16.mxu0 0
    %5374 = vmatmul.mubr.bf16.gmra.mrb[0].mxu0 %v3867
    %v5375 = vpop.f32.mrb[0].mxu0
    %v5376 = vadd.f32 %v5333, %v5375
    %v5377 = vpop.f32.mrb[0].mxu0
    %v5378 = vadd.f32 %v5335, %v5377
    %v5379 = vpop.f32.mrb[0].mxu0
    %v5380 = vadd.f32 %v5337, %v5379
    %v5381 = vpop.f32.mrb[0].mxu0
    %v5382 = vadd.f32 %v5339, %v5381
    %5383 = vdwg.mxu0
    %5384 = vmatprep.subr.bf16.mxu0 %v4767
    %5385 = vmatpush1.bf16.msra.mxu0 %v4766
    %5386 = vmatprep.subr.bf16.mxu0 %v4771
    %5387 = vmatpush1.bf16.msra.mxu0 %v4770
    %5388 = vmatprep.subr.bf16.mxu0 %v4775
    %5389 = vmatpush1.bf16.msra.mxu0 %v4774
    %5390 = vmatprep.subr.bf16.mxu0 %v4779
    %5391 = vmatpush1.bf16.msra.mxu0 %v4778
    %5392 = vmatprep.subr.bf16.mxu0 %v4783
    %5393 = vmatpush1.bf16.msra.mxu0 %v4782
    %5394 = vmatprep.subr.bf16.mxu0 %v4787
    %5395 = vmatpush1.bf16.msra.mxu0 %v4786
    %5396 = vmatprep.subr.bf16.mxu0 %v4791
    %5397 = vmatpush1.bf16.msra.mxu0 %v4790
    %5398 = vmatprep.subr.bf16.mxu0 %v4795
    %5399 = vmatpush1.bf16.msra.mxu0 %v4794
    %5400 = vmatprep.subr.bf16.mxu0 %v4799
    %5401 = vmatpush1.bf16.msra.mxu0 %v4798
    %5402 = vmatprep.subr.bf16.mxu0 %v4803
    %5403 = vmatpush1.bf16.msra.mxu0 %v4802
    %5404 = vmatprep.subr.bf16.mxu0 %v4807
    %5405 = vmatpush1.bf16.msra.mxu0 %v4806
    %5406 = vmatprep.subr.bf16.mxu0 %v4811
    %5407 = vmatpush1.bf16.msra.mxu0 %v4810
    %5408 = vmatprep.subr.bf16.mxu0 %v4815
    %5409 = vmatpush1.bf16.msra.mxu0 %v4814
    %5410 = vmatprep.subr.bf16.mxu0 %v4819
    %5411 = vmatpush1.bf16.msra.mxu0 %v4818
    %5412 = vmatprep.subr.bf16.mxu0 %v4823
    %5413 = vmatpush1.bf16.msra.mxu0 %v4822
    %5414 = vmatprep.subr.bf16.mxu0 %v4827
    %5415 = vmatpush1.bf16.msra.mxu0 %v4826
    %5416 = vmatprep.mubr.bf16.mxu0 %v3862
    %5417 = vmatmul.mubr.bf16.gmra.mrb[0].mxu0 %v3861
    %v5418 = vpop.f32.mrb[0].mxu0
    %v5419 = vadd.f32 0.0, %v5418
    %v5420 = vpop.f32.mrb[0].mxu0
    %v5421 = vadd.f32 0.0, %v5420
    %v5422 = vpop.f32.mrb[0].mxu0
    %v5423 = vadd.f32 0.0, %v5422
    %v5424 = vpop.f32.mrb[0].mxu0
    %v5425 = vadd.f32 0.0, %v5424
    %5426 = vdwg.mxu0
    %5427 = vmatprep.subr.bf16.mxu0 %v4831
    %5428 = vmatpush1.bf16.msra.mxu0 %v4830
    %5429 = vmatprep.subr.bf16.mxu0 %v4835
    %5430 = vmatpush1.bf16.msra.mxu0 %v4834
    %5431 = vmatprep.subr.bf16.mxu0 %v4839
    %5432 = vmatpush1.bf16.msra.mxu0 %v4838
    %5433 = vmatprep.subr.bf16.mxu0 %v4843
    %5434 = vmatpush1.bf16.msra.mxu0 %v4842
    %5435 = vmatprep.subr.bf16.mxu0 %v4847
    %5436 = vmatpush1.bf16.msra.mxu0 %v4846
    %5437 = vmatprep.subr.bf16.mxu0 %v4851
    %5438 = vmatpush1.bf16.msra.mxu0 %v4850
    %5439 = vmatprep.subr.bf16.mxu0 %v4855
    %5440 = vmatpush1.bf16.msra.mxu0 %v4854
    %5441 = vmatprep.subr.bf16.mxu0 %v4859
    %5442 = vmatpush1.bf16.msra.mxu0 %v4858
    %5443 = vmatprep.subr.bf16.mxu0 %v4863
    %5444 = vmatpush1.bf16.msra.mxu0 %v4862
    %5445 = vmatprep.subr.bf16.mxu0 %v4867
    %5446 = vmatpush1.bf16.msra.mxu0 %v4866
    %5447 = vmatprep.subr.bf16.mxu0 %v4871
    %5448 = vmatpush1.bf16.msra.mxu0 %v4870
    %5449 = vmatprep.subr.bf16.mxu0 %v4875
    %5450 = vmatpush1.bf16.msra.mxu0 %v4874
    %5451 = vmatprep.subr.bf16.mxu0 %v4879
    %5452 = vmatpush1.bf16.msra.mxu0 %v4878
    %5453 = vmatprep.subr.bf16.mxu0 %v4883
    %5454 = vmatpush1.bf16.msra.mxu0 %v4882
    %5455 = vmatprep.subr.bf16.mxu0 %v4887
    %5456 = vmatpush1.bf16.msra.mxu0 %v4886
    %5457 = vmatprep.subr.bf16.mxu0 %v4891
    %5458 = vmatpush1.bf16.msra.mxu0 %v4890
    %5459 = vmatprep.mubr.bf16.mxu0 %v3864
    %5460 = vmatmul.mubr.bf16.gmra.mrb[0].mxu0 %v3863
    %v5461 = vpop.f32.mrb[0].mxu0
    %v5462 = vadd.f32 %v5419, %v5461
    %v5463 = vpop.f32.mrb[0].mxu0
    %v5464 = vadd.f32 %v5421, %v5463
    %v5465 = vpop.f32.mrb[0].mxu0
    %v5466 = vadd.f32 %v5423, %v5465
    %v5467 = vpop.f32.mrb[0].mxu0
    %v5468 = vadd.f32 %v5425, %v5467
    %5469 = vdwg.mxu0
    %5470 = vmatprep.subr.bf16.mxu0 %v4895
    %5471 = vmatpush1.bf16.msra.mxu0 %v4894
    %5472 = vmatprep.subr.bf16.mxu0 %v4899
    %5473 = vmatpush1.bf16.msra.mxu0 %v4898
    %5474 = vmatprep.subr.bf16.mxu0 %v4903
    %5475 = vmatpush1.bf16.msra.mxu0 %v4902
    %5476 = vmatprep.subr.bf16.mxu0 %v4907
    %5477 = vmatpush1.bf16.msra.mxu0 %v4906
    %5478 = vmatprep.subr.bf16.mxu0 %v4911
    %5479 = vmatpush1.bf16.msra.mxu0 %v4910
    %5480 = vmatprep.subr.bf16.mxu0 %v4915
    %5481 = vmatpush1.bf16.msra.mxu0 %v4914
    %5482 = vmatprep.subr.bf16.mxu0 %v4919
    %5483 = vmatpush1.bf16.msra.mxu0 %v4918
    %5484 = vmatprep.subr.bf16.mxu0 %v4923
    %5485 = vmatpush1.bf16.msra.mxu0 %v4922
    %5486 = vmatprep.subr.bf16.mxu0 %v4927
    %5487 = vmatpush1.bf16.msra.mxu0 %v4926
    %5488 = vmatprep.subr.bf16.mxu0 %v4931
    %5489 = vmatpush1.bf16.msra.mxu0 %v4930
    %5490 = vmatprep.subr.bf16.mxu0 %v4935
    %5491 = vmatpush1.bf16.msra.mxu0 %v4934
    %5492 = vmatprep.subr.bf16.mxu0 %v4939
    %5493 = vmatpush1.bf16.msra.mxu0 %v4938
    %5494 = vmatprep.subr.bf16.mxu0 %v4943
    %5495 = vmatpush1.bf16.msra.mxu0 %v4942
    %5496 = vmatprep.subr.bf16.mxu0 %v4947
    %5497 = vmatpush1.bf16.msra.mxu0 %v4946
    %5498 = vmatprep.subr.bf16.mxu0 %v4951
    %5499 = vmatpush1.bf16.msra.mxu0 %v4950
    %5500 = vmatprep.subr.bf16.mxu0 %v4955
    %5501 = vmatpush1.bf16.msra.mxu0 %v4954
    %5502 = vmatprep.mubr.bf16.mxu0 %v3866
    %5503 = vmatmul.mubr.bf16.gmra.mrb[0].mxu0 %v3865
    %v5504 = vpop.f32.mrb[0].mxu0
    %v5505 = vadd.f32 %v5462, %v5504
    %v5506 = vpop.f32.mrb[0].mxu0
    %v5507 = vadd.f32 %v5464, %v5506
    %v5508 = vpop.f32.mrb[0].mxu0
    %v5509 = vadd.f32 %v5466, %v5508
    %v5510 = vpop.f32.mrb[0].mxu0
    %v5511 = vadd.f32 %v5468, %v5510
    %5512 = vdwg.mxu0
    %5513 = vmatprep.subr.bf16.mxu0 %v4959
    %5514 = vmatpush1.bf16.msra.mxu0 %v4958
    %5515 = vmatprep.subr.bf16.mxu0 %v4963
    %5516 = vmatpush1.bf16.msra.mxu0 %v4962
    %5517 = vmatprep.subr.bf16.mxu0 %v4967
    %5518 = vmatpush1.bf16.msra.mxu0 %v4966
    %5519 = vmatprep.subr.bf16.mxu0 %v4971
    %5520 = vmatpush1.bf16.msra.mxu0 %v4970
    %5521 = vmatprep.subr.bf16.mxu0 %v4975
    %5522 = vmatpush1.bf16.msra.mxu0 %v4974
    %5523 = vmatprep.subr.bf16.mxu0 %v4979
    %5524 = vmatpush1.bf16.msra.mxu0 %v4978
    %5525 = vmatprep.subr.bf16.mxu0 %v4983
    %5526 = vmatpush1.bf16.msra.mxu0 %v4982
    %5527 = vmatprep.subr.bf16.mxu0 %v4987
    %5528 = vmatpush1.bf16.msra.mxu0 %v4986
    %5529 = vmatprep.subr.bf16.mxu0 0
    %5530 = vmatpush1.bf16.msra.mxu0 0
    %5531 = vmatprep.subr.bf16.mxu0 0
    %5532 = vmatpush1.bf16.msra.mxu0 0
    %5533 = vmatprep.subr.bf16.mxu0 0
    %5534 = vmatpush1.bf16.msra.mxu0 0
    %5535 = vmatprep.subr.bf16.mxu0 0
    %5536 = vmatpush1.bf16.msra.mxu0 0
    %5537 = vmatprep.subr.bf16.mxu0 0
    %5538 = vmatpush1.bf16.msra.mxu0 0
    %5539 = vmatprep.subr.bf16.mxu0 0
    %5540 = vmatpush1.bf16.msra.mxu0 0
    %5541 = vmatprep.subr.bf16.mxu0 0
    %5542 = vmatpush1.bf16.msra.mxu0 0
    %5543 = vmatprep.subr.bf16.mxu0 0
    %5544 = vmatpush1.bf16.msra.mxu0 0
    %5545 = vmatprep.mubr.bf16.mxu0 0
    %5546 = vmatmul.mubr.bf16.gmra.mrb[0].mxu0 %v3867
    %v5547 = vpop.f32.mrb[0].mxu0
    %v5548 = vadd.f32 %v5505, %v5547
    %v5549 = vpop.f32.mrb[0].mxu0
    %v5550 = vadd.f32 %v5507, %v5549
    %v5551 = vpop.f32.mrb[0].mxu0
    %v5552 = vadd.f32 %v5509, %v5551
    %v5553 = vpop.f32.mrb[0].mxu0
    %v5554 = vadd.f32 %v5511, %v5553
    %5555 = vdwg.mxu0
    %v5556 = vadd.f32 %v5376, %v5378
    %v5557 = vadd.f32 %v5556, %v5548
    %v5558 = vadd.f32 %v5557, %v5550
    %5559 = vadd.xlane.f32.xlu0 %v5558
    %v5560 = vpop.xlane.xlu0 %5559
    %v5561 = vadd.f32 %v5380, %v5382
    %v5562 = vadd.f32 %v5561, %v5552
    %v5563 = vadd.f32 %v5562, %v5554
    %5564 = vadd.xlane.f32.xlu0 %v5563
    %v5565 = vpop.xlane.xlu0 %5564
    %v5566 = vmul.f32 %v5376, %v5376
    %v5567 = vmul.f32 %v5378, %v5378
    %v5568 = vmul.f32 %v5548, %v5548
    %v5569 = vmul.f32 %v5550, %v5550
    %v5570 = vmul.f32 %v5380, %v5380
    %v5571 = vmul.f32 %v5382, %v5382
    %v5572 = vmul.f32 %v5552, %v5552
    %v5573 = vmul.f32 %v5554, %v5554
    %v5574 = vadd.f32 %v5566, %v5567
    %v5575 = vadd.f32 %v5574, %v5568
    %v5576 = vadd.f32 %v5575, %v5569
    %5577 = vadd.xlane.f32.xlu0 %v5576
    %v5578 = vpop.xlane.xlu0 %5577
    %v5579 = vadd.f32 %v5570, %v5571
    %v5580 = vadd.f32 %v5579, %v5572
    %v5581 = vadd.f32 %v5580, %v5573
    %5582 = vadd.xlane.f32.xlu0 %v5581
    %v5583 = vpop.xlane.xlu0 %5582
    %v5584 = vmul.f32 %v5560, 0.001953125
    %v5585 = vmul.f32 %v5565, 0.001953125
    %v5586 = vmul.f32 %v5578, 0.001953125
    %v5587 = vmul.f32 %v5583, 0.001953125
    %v5588 = vmul.f32 %v5584, %v5584
    %v5589 = vmul.f32 %v5585, %v5585
    %v5590 = vsub.f32 %v5586, %v5588
    %v5591 = vsub.f32 %v5587, %v5589
    %v5592 = vld [vmem:[#allocation9] sm:$0xf]
    %v5593 = vadd.f32 %v5590, 1e-05
    %v5594 = vadd.f32 %v5591, 1e-05
    %v5595 = vrsqrt.pop %v5593
    %v5596 = vrsqrt.pop %v5594
    %v5598 = vlaneseq
    %v5599 = vshrl.u32 %v5598, 7
    %v5600 = vsub.s32 0, %v5599
    %v5601 = vrot.slane %v5592, %v5600
    %v5602 = vlaneseq
    %v5603 = vshrl.u32 %v5602, 7
    %v5604 = vsub.s32 1, %v5603
    %v5605 = vrot.slane %v5592, %v5604
    %v5606 = vlaneseq
    %v5607 = vshrl.u32 %v5606, 7
    %v5608 = vsub.s32 2, %v5607
    %v5609 = vrot.slane %v5592, %v5608
    %v5610 = vlaneseq
    %v5611 = vshrl.u32 %v5610, 7
    %v5612 = vsub.s32 3, %v5611
    %v5613 = vrot.slane %v5592, %v5612
    %v5618 = vmul.f32 %v5601, %v5595
    %v5619 = vmul.f32 %v5605, %v5595
    %v5620 = vmul.f32 %v5609, %v5595
    %v5621 = vmul.f32 %v5613, %v5595
    %v5622 = vmul.f32 %v5601, %v5596
    %v5623 = vmul.f32 %v5605, %v5596
    %v5624 = vmul.f32 %v5609, %v5596
    %v5625 = vmul.f32 %v5613, %v5596
    %v5626 = vld [vmem:[#allocation10] sm:$0xf]
    %v5627 = vmul.f32 %v5584, %v5618
    %v5628 = vmul.f32 %v5584, %v5619
    %v5629 = vmul.f32 %v5584, %v5620
    %v5630 = vmul.f32 %v5584, %v5621
    %v5631 = vmul.f32 %v5585, %v5622
    %v5632 = vmul.f32 %v5585, %v5623
    %v5633 = vmul.f32 %v5585, %v5624
    %v5634 = vmul.f32 %v5585, %v5625
    %v5636 = vlaneseq
    %v5637 = vshrl.u32 %v5636, 7
    %v5638 = vsub.s32 0, %v5637
    %v5639 = vrot.slane %v5626, %v5638
    %v5640 = vlaneseq
    %v5641 = vshrl.u32 %v5640, 7
    %v5642 = vsub.s32 1, %v5641
    %v5643 = vrot.slane %v5626, %v5642
    %v5644 = vlaneseq
    %v5645 = vshrl.u32 %v5644, 7
    %v5646 = vsub.s32 2, %v5645
    %v5647 = vrot.slane %v5626, %v5646
    %v5648 = vlaneseq
    %v5649 = vshrl.u32 %v5648, 7
    %v5650 = vsub.s32 3, %v5649
    %v5651 = vrot.slane %v5626, %v5650
    %v5656 = vsub.f32 %v5639, %v5627
    %v5657 = vsub.f32 %v5643, %v5628
    %v5658 = vsub.f32 %v5647, %v5629
    %v5659 = vsub.f32 %v5651, %v5630
    %v5660 = vsub.f32 %v5639, %v5631
    %v5661 = vsub.f32 %v5643, %v5632
    %v5662 = vsub.f32 %v5647, %v5633
    %v5663 = vsub.f32 %v5651, %v5634
    %v5664 = vmul.f32 %v5376, %v5618
    %v5665 = vmul.f32 %v5378, %v5619
    %v5666 = vmul.f32 %v5548, %v5620
    %v5667 = vmul.f32 %v5550, %v5621
    %v5668 = vmul.f32 %v5380, %v5622
    %v5669 = vmul.f32 %v5382, %v5623
    %v5670 = vmul.f32 %v5552, %v5624
    %v5671 = vmul.f32 %v5554, %v5625
    %v5672 = vadd.f32 %v5664, %v5656
    %v5673 = vadd.f32 %v5665, %v5657
    %v5674 = vadd.f32 %v5666, %v5658
    %v5675 = vadd.f32 %v5667, %v5659
    %v5676 = vadd.f32 %v5668, %v5660
    %v5677 = vadd.f32 %v5669, %v5661
    %v5678 = vadd.f32 %v5670, %v5662
    %v5679 = vadd.f32 %v5671, %v5663
    %v5680 = vmax.f32 %v5672, 0.0
    %v5681 = vmax.f32 %v5673, 0.0
    %v5682 = vmax.f32 %v5674, 0.0
    %v5683 = vmax.f32 %v5675, 0.0
    %v5684 = vmax.f32 %v5676, 0.0
    %v5685 = vmax.f32 %v5677, 0.0
    %v5686 = vmax.f32 %v5678, 0.0
    %v5687 = vmax.f32 %v5679, 0.0
    %5688 = vst [vmem:[%s7] sm:$0xff] %v5680
    %5689 = vst [vmem:[%s7 + $0x8] sm:$0xff] %v5681
    %5690 = vst [vmem:[%s7 + $0x10] sm:$0xff] %v5682
    %5691 = vst [vmem:[%s7 + $0x18] sm:$0xff] %v5683
    %5692 = vst [vmem:[%s7 + $0x20] sm:$0xff] %v5684
    %5693 = vst [vmem:[%s7 + $0x28] sm:$0xff] %v5685
    %5694 = vst [vmem:[%s7 + $0x30] sm:$0xff] %v5686
    %5695 = vst [vmem:[%s7 + $0x38] sm:$0xff] %v5687
    // Predicated region
    $region54: #{posemb_lw_forward.1} parent=1 // pred_check
      _
    $region55: #{posemb_lw_forward.1} parent=1 // pred_check_branch
      %5697 = sbr.rel (0) target = $region57
    $region56: #{posemb_lw_forward.1} parent=1 // pred_region
      _
    $region57: #{posemb_lw_forward.1} parent=1 // pred_fallthru
      _
    // Predicated region
    $region58: #{posemb_lw_forward.1} parent=1 // pred_check
      _
    $region59: #{posemb_lw_forward.1} parent=1 // pred_check_branch
      %5699 = sbr.rel (0) target = $region61
    $region60: #{posemb_lw_forward.1} parent=1 // pred_region
      _
    $region61: #{posemb_lw_forward.1} parent=1 // pred_fallthru
      _
    %5700 = vsyncpa [#allocation3], 1
    %5701 = vsyncpa [#allocation5], 1
    %5702 = vsyncpa [#allocation8], 1
    %5703 = vsyncpa [#allocation11], 1

</llo_original>
